<compile_context>
chip_gen: v6e
topology: v6e:2x2x1
jax: 0.10.0
libtpu: 0.0.40
codegen_flags: <defaults>
</compile_context>

<pallas_src>
import jax
import jax.numpy as jnp
from jax import lax
from jax.experimental import pallas as pl
from jax.experimental.pallas import tpu as pltpu

_NEG_BIG = -1e30  # bias for padded vocab columns (exp() -> 0, lse unaffected)


# --------------------------------------------------------------------------
# Fused kernel: per (row_tile) x (vocab tiles) -> log-softmax output
# Grid = (row_tiles [parallel], vocab_tiles [arbitrary])
# Output block (row_tile, V_pad) is resident across the vocab axis.
# --------------------------------------------------------------------------
def _fused_logsoftmax_kernel(emb_ref, demo_ref, w_enc_ref, b_enc_ref,
                             w_dec_ref, b_dec_ref,
                             out_ref,
                             comb_ref, m_ref, l_ref):
    v = pl.program_id(1)
    n_v = pl.num_programs(1)

    # Encoder stand-in + demographic add: computed once per row tile (v == 0)
    # and kept resident in VMEM scratch across the whole vocab axis.
    @pl.when(v == 0)
    def _():
        hidden = jnp.tanh(
            jnp.dot(emb_ref[...], w_enc_ref[...],
                    preferred_element_type=jnp.float32)
            + b_enc_ref[...])                                   # (row_tile, H) f32
        comb_ref[...] = (hidden + demo_ref[...].astype(jnp.float32)
                         ).astype(comb_ref.dtype)
        m_ref[...] = jnp.full(m_ref.shape, -jnp.inf, m_ref.dtype)
        l_ref[...] = jnp.zeros(l_ref.shape, l_ref.dtype)

    # Decoder tile: (row_tile, H) @ (H, v_tile) on the MXU, f32 accumulation.
    logits = (jnp.dot(comb_ref[...], w_dec_ref[...],
                      preferred_element_type=jnp.float32)
              + b_dec_ref[...])                                 # (row_tile, v_tile)

    # Write the unnormalized tile into the vocab-resident output block at a
    # 128-aligned dynamic column offset (no second pass / intermediate array).
    v_tile = logits.shape[-1]
    col = pl.multiple_of(v * v_tile, v_tile)
    out_ref[:, pl.ds(col, v_tile)] = logits

    # Online log-sum-exp across vocab tiles (running max + running sum-exp).
    m_prev = m_ref[...]
    l_prev = l_ref[...]
    m_new = jnp.maximum(m_prev, jnp.max(logits, axis=-1, keepdims=True))
    l_new = (l_prev * jnp.exp(m_prev - m_new)
             + jnp.sum(jnp.exp(logits - m_new), axis=-1, keepdims=True))
    m_ref[...] = m_new
    l_ref[...] = l_new

    # Last vocab tile: finalize lse and normalize the resident block in place.
    @pl.when(v == n_v - 1)
    def _():
        lse = m_new + jnp.log(l_new)                            # (row_tile, 1)
        out_ref[...] = out_ref[...] - lse


def demographic_bert_forward(input_ids, demographics, params, *,
                             row_tile=256, v_tile=512,
                             vmem_limit_bytes=48 * 1024 * 1024):
    tok_emb = params["tok_emb"]                       # (V, H) bf16
    w_enc, b_enc = params["w_enc"], params["b_enc"]   # (H, H) bf16, (1, H) f32
    w_d, b_d = params["w_d"], params["b_d"]           # (D, H) f32,  (1, H) f32
    w_dec, b_dec = params["w_dec"], params["b_dec"]   # (H, V) bf16, (1, V) f32

    B, S = input_ids.shape
    H = tok_emb.shape[1]
    V = w_dec.shape[1]
    assert v_tile % 128 == 0 and row_tile % 8 == 0

    # ---- plain-JAX glue ---------------------------------------------------
    # The token-embedding gather (data-dependent) and the tiny K=demo_dim
    # demographic linear stay in the wrapper: a K=8 contraction is a
    # degenerate MXU pass and would only add extra DMA streams to the kernel.
    emb = tok_emb[input_ids].reshape(B * S, H)                    # (B*S, H) bf16
    demo = (demographics @ w_d + b_d).astype(jnp.bfloat16)        # (B, H)   bf16
    demo_rows = jnp.repeat(demo, S, axis=0)                       # (B*S, H) bf16

    rows = B * S
    n_r = pl.cdiv(rows, row_tile)
    rows_p = n_r * row_tile
    if rows_p != rows:
        emb = jnp.pad(emb, ((0, rows_p - rows), (0, 0)))
        demo_rows = jnp.pad(demo_rows, ((0, rows_p - rows), (0, 0)))

    # Pad vocab to a v_tile multiple; padded columns get a huge negative bias
    # so exp() of them is exactly 0 and the lse / log-softmax are unaffected.
    n_v = pl.cdiv(V, v_tile)
    v_pad = n_v * v_tile
    if v_pad != V:
        w_dec = jnp.pad(w_dec, ((0, 0), (0, v_pad - V)))
        b_dec = jnp.pad(b_dec, ((0, 0), (0, v_pad - V)),
                        constant_values=_NEG_BIG)

    cparams = pltpu.CompilerParams(
        dimension_semantics=("parallel", "arbitrary"),
        vmem_limit_bytes=vmem_limit_bytes)

    out = pl.pallas_call(
        _fused_logsoftmax_kernel,
        out_shape=jax.ShapeDtypeStruct((rows_p, v_pad), jnp.float32),
        grid_spec=pltpu.PrefetchScalarGridSpec(
            num_scalar_prefetch=0,
            grid=(n_r, n_v),
            in_specs=[
                pl.BlockSpec((row_tile, H), lambda r, v: (r, 0)),   # emb rows
                pl.BlockSpec((row_tile, H), lambda r, v: (r, 0)),   # demo rows
                pl.BlockSpec((H, H), lambda r, v: (0, 0)),          # w_enc
                pl.BlockSpec((1, H), lambda r, v: (0, 0)),          # b_enc
                pl.BlockSpec((H, v_tile), lambda r, v: (0, v)),     # w_dec tile
                pl.BlockSpec((1, v_tile), lambda r, v: (0, v)),     # b_dec tile
            ],
            # Resident across the vocab axis -> single HBM writeback per row
            # tile, normalized in place on the last vocab step.
            out_specs=pl.BlockSpec((row_tile, v_pad), lambda r, v: (r, 0)),
            scratch_shapes=[
                pltpu.VMEM((row_tile, H), jnp.bfloat16),   # combined activations
                pltpu.VMEM((row_tile, 1), jnp.float32),    # running max
                pltpu.VMEM((row_tile, 1), jnp.float32),    # running sum-exp
            ]),
        compiler_params=cparams,
    )(emb, demo_rows, w_enc, b_enc, w_dec, b_dec)

    return out[:rows, :V].reshape(B, S, V)


# --------------------------------------------------------------------------
# Pure-JAX reference (mirrors the kernel's dtype strategy)
# --------------------------------------------------------------------------
def _reference_forward(input_ids, demographics, params):
    f32 = jnp.float32
    hi = lax.Precision.HIGHEST
    emb = params["tok_emb"][input_ids].astype(f32)
    hidden = jnp.tanh(
        jnp.einsum("bsh,hk->bsk", emb, params["w_enc"].astype(f32), precision=hi)
        + params["b_enc"])
    demo = (demographics @ params["w_d"] + params["b_d"]
            ).astype(jnp.bfloat16).astype(f32)          # kernel streams demo in bf16
    combined = hidden + demo[:, None, :]
    # kernel stores combined activations in bf16 before the decoder matmul
    combined = combined.astype(jnp.bfloat16).astype(f32)
    logits = (jnp.einsum("bsh,hv->bsv", combined,
                         params["w_dec"].astype(f32), precision=hi)
              + params["b_dec"])
    return jax.nn.log_softmax(logits, axis=-1)


def _init_params(key, vocab, hidden, demo_dim):
    ks = jax.random.split(key, 7)
    s = 0.02
    bf16 = jnp.bfloat16
    return {
        "tok_emb": (s * jax.random.normal(ks[0], (vocab, hidden), jnp.float32)).astype(bf16),
        "w_enc":   (s * jax.random.normal(ks[1], (hidden, hidden), jnp.float32)).astype(bf16),
        "b_enc":   s * jax.random.normal(ks[2], (1, hidden), jnp.float32),
        "w_d":     s * jax.random.normal(ks[3], (demo_dim, hidden), jnp.float32),
        "b_d":     s * jax.random.normal(ks[4], (1, hidden), jnp.float32),
        "w_dec":   (s * jax.random.normal(ks[5], (hidden, vocab), jnp.float32)).astype(bf16),
        "b_dec":   s * jax.random.normal(ks[6], (1, vocab), jnp.float32),
    }


if __name__ == "__main__":
    # Small shapes consistent with the module (hidden scaled down from 768,
    # vocab scaled down from 30522).  V=1000 deliberately NOT a multiple of
    # v_tile to exercise the vocab-padding path; rows = B*S = 512 gives two
    # 256-row tiles, vocab pads to 1024 = two 512-wide tiles.
    B, S, H, V, D = 2, 256, 256, 1000, 8

    key = jax.random.PRNGKey(0)
    k_ids, k_demo, k_params = jax.random.split(key, 3)

    input_ids = jax.random.randint(k_ids, (B, S), 0, V, dtype=jnp.int32)
    demographics = jax.random.normal(k_demo, (B, D), jnp.float32)
    params = _init_params(k_params, V, H, D)

    out = demographic_bert_forward(input_ids, demographics, params,
                                   row_tile=256, v_tile=512)
    out = jax.block_until_ready(out)

    ref = _reference_forward(input_ids, demographics, params)
    assert out.shape == (B, S, V)
    max_err = float(jnp.max(jnp.abs(out - ref)))
    assert jnp.allclose(out, ref, atol=2e-3, rtol=2e-3), max_err

    print("KERNEL_OK")
</pallas_src>

<mosaic_0001>
module attributes {stable_mosaic.version = 11 : i64} {
  func.func @_fused_logsoftmax_kernel(%arg0: i32, %arg1: i32, %arg2: memref<256x256xbf16, #tpu.memory_space<vmem>>, %arg3: memref<256x256xbf16, #tpu.memory_space<vmem>>, %arg4: memref<256x256xbf16, #tpu.memory_space<vmem>>, %arg5: memref<1x256xf32, #tpu.memory_space<vmem>>, %arg6: memref<256x512xbf16, #tpu.memory_space<vmem>>, %arg7: memref<1x512xf32, #tpu.memory_space<vmem>>, %arg8: memref<256x1024xf32, #tpu.memory_space<vmem>>, %arg9: memref<256x256xbf16, #tpu.memory_space<vmem>>, %arg10: memref<256x1xf32, #tpu.memory_space<vmem>>, %arg11: memref<256x1xf32, #tpu.memory_space<vmem>>) attributes {dimension_semantics = [#tpu.dimension_semantics<parallel>, #tpu.dimension_semantics<arbitrary>], iteration_bounds = array<i64: 2, 2>, scalar_prefetch = 0 : i64, scratch_operands = 3 : i64, tpu.core_type = #tpu.core_type<tc>, window_params = [{transform_indices = @transform_0, window_bounds = array<i64: 256, 256>}, {transform_indices = @transform_1, window_bounds = array<i64: 256, 256>}, {pipeline_mode = #tpu.pipeline_mode<synchronous>, transform_indices = @transform_2, window_bounds = array<i64: 256, 256>}, {pipeline_mode = #tpu.pipeline_mode<synchronous>, transform_indices = @transform_3, window_bounds = array<i64: 1, 256>}, {transform_indices = @transform_4, window_bounds = array<i64: 256, 512>}, {transform_indices = @transform_5, window_bounds = array<i64: 1, 512>}, {transform_indices = @transform_6, window_bounds = array<i64: 256, 1024>}]} {
    %c0_i32 = arith.constant 0 : i32
    %0 = arith.cmpi eq, %arg1, %c0_i32 : i32
    %1 = arith.extui %0 : i1 to i32
    %c0_i32_0 = arith.constant 0 : i32
    %2 = arith.cmpi ne, %1, %c0_i32_0 : i32
    scf.if %2 {
      %c0_18 = arith.constant 0 : index
      %c0_19 = arith.constant 0 : index
      %32 = vector.load %arg2[%c0_18, %c0_19] : memref<256x256xbf16, #tpu.memory_space<vmem>>, vector<256x256xbf16>
      %c0_20 = arith.constant 0 : index
      %c0_21 = arith.constant 0 : index
      %33 = vector.load %arg4[%c0_20, %c0_21] : memref<256x256xbf16, #tpu.memory_space<vmem>>, vector<256x256xbf16>
      %cst_22 = arith.constant dense<0.000000e+00> : vector<256x256xf32>
      %34 = tpu.matmul %32, %33, %cst_22 {dimension_numbers = #tpu.dot_dimension_numbers<[1], [0], [0], [1], [0, 0, 1, 1], [], []>} : vector<256x256xbf16>, vector<256x256xbf16>, vector<256x256xf32> -> vector<256x256xf32>
      %c0_23 = arith.constant 0 : index
      %c0_24 = arith.constant 0 : index
      %35 = vector.load %arg5[%c0_23, %c0_24] : memref<1x256xf32, #tpu.memory_space<vmem>>, vector<1x256xf32>
      %36 = vector.broadcast %35 : vector<1x256xf32> to vector<256x256xf32>
      %37 = arith.addf %34, %36 : vector<256x256xf32>
      %38 = math.tanh %37 : vector<256x256xf32>
      %c0_25 = arith.constant 0 : index
      %c0_26 = arith.constant 0 : index
      %39 = vector.load %arg3[%c0_25, %c0_26] : memref<256x256xbf16, #tpu.memory_space<vmem>>, vector<256x256xbf16>
      %40 = arith.extf %39 : vector<256x256xbf16> to vector<256x256xf32>
      %41 = arith.addf %38, %40 : vector<256x256xf32>
      %42 = arith.truncf %41 : vector<256x256xf32> to vector<256x256xbf16>
      %c0_27 = arith.constant 0 : index
      %c0_28 = arith.constant 0 : index
      %43 = vector.load %arg9[%c0_27, %c0_28] : memref<256x256xbf16, #tpu.memory_space<vmem>>, vector<256x256xbf16>
      tpu.vector_store %arg9[%c0_27, %c0_28], %42 {strides = array<i32>} : memref<256x256xbf16, #tpu.memory_space<vmem>>, vector<256x256xbf16>,
      %cst_29 = arith.constant 0xFF800000 : f32
      %44 = vector.broadcast %cst_29 : f32 to vector<256x1xf32>
      %c0_30 = arith.constant 0 : index
      %c0_31 = arith.constant 0 : index
      %45 = vector.load %arg10[%c0_30, %c0_31] : memref<256x1xf32, #tpu.memory_space<vmem>>, vector<256x1xf32>
      tpu.vector_store %arg10[%c0_30, %c0_31], %44 {strides = array<i32>} : memref<256x1xf32, #tpu.memory_space<vmem>>, vector<256x1xf32>,
      %cst_32 = arith.constant 0.000000e+00 : f32
      %46 = vector.broadcast %cst_32 : f32 to vector<256x1xf32>
      %c0_33 = arith.constant 0 : index
      %c0_34 = arith.constant 0 : index
      %47 = vector.load %arg11[%c0_33, %c0_34] : memref<256x1xf32, #tpu.memory_space<vmem>>, vector<256x1xf32>
      tpu.vector_store %arg11[%c0_33, %c0_34], %46 {strides = array<i32>} : memref<256x1xf32, #tpu.memory_space<vmem>>, vector<256x1xf32>,
    } else {
    }
    %c0 = arith.constant 0 : index
    %c0_1 = arith.constant 0 : index
    %3 = vector.load %arg9[%c0, %c0_1] : memref<256x256xbf16, #tpu.memory_space<vmem>>, vector<256x256xbf16>
    %c0_2 = arith.constant 0 : index
    %c0_3 = arith.constant 0 : index
    %4 = vector.load %arg6[%c0_2, %c0_3] : memref<256x512xbf16, #tpu.memory_space<vmem>>, vector<256x512xbf16>
    %cst = arith.constant dense<0.000000e+00> : vector<256x512xf32>
    %5 = tpu.matmul %3, %4, %cst {dimension_numbers = #tpu.dot_dimension_numbers<[1], [0], [0], [1], [0, 0, 1, 1], [], []>} : vector<256x256xbf16>, vector<256x512xbf16>, vector<256x512xf32> -> vector<256x512xf32>
    %c0_4 = arith.constant 0 : index
    %c0_5 = arith.constant 0 : index
    %6 = vector.load %arg7[%c0_4, %c0_5] : memref<1x512xf32, #tpu.memory_space<vmem>>, vector<1x512xf32>
    %7 = vector.broadcast %6 : vector<1x512xf32> to vector<256x512xf32>
    %8 = arith.addf %5, %7 : vector<256x512xf32>
    %c512_i32 = arith.constant 512 : i32
    %9 = arith.muli %arg1, %c512_i32 : i32
    %10 = tpu.assume_multiple %9, 512 : i32
    %c0_6 = arith.constant 0 : index
    %11 = arith.index_cast %10 : i32 to index
    %12 = vector.load %arg8[%c0_6, %11] : memref<256x1024xf32, #tpu.memory_space<vmem>>, vector<256x512xf32>
    tpu.vector_store %arg8[%c0_6, %11], %8 {strides = array<i32>} : memref<256x1024xf32, #tpu.memory_space<vmem>>, vector<256x512xf32>,
    %c0_7 = arith.constant 0 : index
    %c0_8 = arith.constant 0 : index
    %13 = vector.load %arg10[%c0_7, %c0_8] : memref<256x1xf32, #tpu.memory_space<vmem>>, vector<256x1xf32>
    %c0_9 = arith.constant 0 : index
    %c0_10 = arith.constant 0 : index
    %14 = vector.load %arg11[%c0_9, %c0_10] : memref<256x1xf32, #tpu.memory_space<vmem>>, vector<256x1xf32>
    %cst_11 = arith.constant dense<0xFF800000> : vector<256xf32>
    %15 = vector.multi_reduction <maximumf>, %8, %cst_11 [1] : vector<256x512xf32> to vector<256xf32>
    %16 = vector.shape_cast %15 : vector<256xf32> to vector<256x1xf32>
    %17 = arith.maximumf %13, %16 : vector<256x1xf32>
    %18 = arith.subf %13, %17 : vector<256x1xf32>
    %19 = math.exp %18 : vector<256x1xf32>
    %20 = arith.mulf %14, %19 : vector<256x1xf32>
    %21 = vector.broadcast %17 : vector<256x1xf32> to vector<256x512xf32>
    %22 = arith.subf %8, %21 : vector<256x512xf32>
    %23 = math.exp %22 : vector<256x512xf32>
    %cst_12 = arith.constant dense<0.000000e+00> : vector<256xf32>
    %24 = vector.multi_reduction <add>, %23, %cst_12 [1] : vector<256x512xf32> to vector<256xf32>
    %25 = vector.shape_cast %24 : vector<256xf32> to vector<256x1xf32>
    %26 = arith.addf %20, %25 : vector<256x1xf32>
    %c0_13 = arith.constant 0 : index
    %c0_14 = arith.constant 0 : index
    %27 = vector.load %arg10[%c0_13, %c0_14] : memref<256x1xf32, #tpu.memory_space<vmem>>, vector<256x1xf32>
    tpu.vector_store %arg10[%c0_13, %c0_14], %17 {strides = array<i32>} : memref<256x1xf32, #tpu.memory_space<vmem>>, vector<256x1xf32>,
    %c0_15 = arith.constant 0 : index
    %c0_16 = arith.constant 0 : index
    %28 = vector.load %arg11[%c0_15, %c0_16] : memref<256x1xf32, #tpu.memory_space<vmem>>, vector<256x1xf32>
    tpu.vector_store %arg11[%c0_15, %c0_16], %26 {strides = array<i32>} : memref<256x1xf32, #tpu.memory_space<vmem>>, vector<256x1xf32>,
    %c1_i32 = arith.constant 1 : i32
    %29 = arith.cmpi eq, %arg1, %c1_i32 : i32
    %30 = arith.extui %29 : i1 to i32
    %c0_i32_17 = arith.constant 0 : i32
    %31 = arith.cmpi ne, %30, %c0_i32_17 : i32
    scf.if %31 {
      %32 = math.log %26 : vector<256x1xf32>
      %33 = arith.addf %17, %32 : vector<256x1xf32>
      %c0_18 = arith.constant 0 : index
      %c0_19 = arith.constant 0 : index
      %34 = vector.load %arg8[%c0_18, %c0_19] : memref<256x1024xf32, #tpu.memory_space<vmem>>, vector<256x1024xf32>
      %35 = vector.broadcast %33 : vector<256x1xf32> to vector<256x1024xf32>
      %36 = arith.subf %34, %35 : vector<256x1024xf32>
      %c0_20 = arith.constant 0 : index
      %c0_21 = arith.constant 0 : index
      %37 = vector.load %arg8[%c0_20, %c0_21] : memref<256x1024xf32, #tpu.memory_space<vmem>>, vector<256x1024xf32>
      tpu.vector_store %arg8[%c0_20, %c0_21], %36 {strides = array<i32>} : memref<256x1024xf32, #tpu.memory_space<vmem>>, vector<256x1024xf32>,
    } else {
    }
    return
  }
  func.func @transform_0(%arg0: i32, %arg1: i32) -> (i32, i32) {
    %c0_i32 = arith.constant 0 : i32
    %c0_i32_0 = arith.constant 0 : i32
    return %arg0, %c0_i32 : i32, i32
  }
  func.func @transform_1(%arg0: i32, %arg1: i32) -> (i32, i32) {
    %c0_i32 = arith.constant 0 : i32
    %c0_i32_0 = arith.constant 0 : i32
    return %arg0, %c0_i32 : i32, i32
  }
  func.func @transform_2(%arg0: i32, %arg1: i32) -> (i32, i32) {
    %c0_i32 = arith.constant 0 : i32
    %c0_i32_0 = arith.constant 0 : i32
    %c0_i32_1 = arith.constant 0 : i32
    return %c0_i32, %c0_i32_0 : i32, i32
  }
  func.func @transform_3(%arg0: i32, %arg1: i32) -> (i32, i32) {
    %c0_i32 = arith.constant 0 : i32
    %c0_i32_0 = arith.constant 0 : i32
    %c0_i32_1 = arith.constant 0 : i32
    return %c0_i32, %c0_i32_0 : i32, i32
  }
  func.func @transform_4(%arg0: i32, %arg1: i32) -> (i32, i32) {
    %c0_i32 = arith.constant 0 : i32
    %c0_i32_0 = arith.constant 0 : i32
    return %c0_i32, %arg1 : i32, i32
  }
  func.func @transform_5(%arg0: i32, %arg1: i32) -> (i32, i32) {
    %c0_i32 = arith.constant 0 : i32
    %c0_i32_0 = arith.constant 0 : i32
    return %c0_i32, %arg1 : i32, i32
  }
  func.func @transform_6(%arg0: i32, %arg1: i32) -> (i32, i32) {
    %c0_i32 = arith.constant 0 : i32
    %c0_i32_0 = arith.constant 0 : i32
    return %arg0, %c0_i32 : i32, i32
  }
}

</mosaic_0001>

<llo_original>
// kernel: tpu_custom_call.1
$region0: #{tpu_custom_call.1}
  #allocation0 [shape = 'u32[]', space=smem, size = 0x4, offset = 0x4, fixed_abs, tag = 'smem constant byte address 0x4 - core index']
  #allocation1 [shape = 'u32[144,128]{1,0:T(1,128)}', space=vmem, size = 0x12000, scoped, tag = 'internal scratch']
  #allocation2 [shape = 'bf16[256,256]{1,0:T(8,128)(2,1)}', space=vmem, size = 0x20000, scoped, tag = 'scratch operand']
  #allocation3 [shape = 'f32[256,1]{1,0:T(8,128)}', space=vmem, size = 0x20000, scoped, tag = 'scratch operand']
  #allocation4 [shape = 'f32[256,1]{1,0:T(8,128)}', space=vmem, size = 0x20000, scoped, tag = 'scratch operand']
  %s0 = inlined_call_operand.hbm [shape: bf16[512,256], index: 0, kind: input, shape index: {}]
  %s1 = inlined_call_operand.hbm [shape: bf16[512,256], index: 1, kind: input, shape index: {}]
  %s2 = inlined_call_operand.hbm [shape: bf16[256,256], index: 2, kind: input, shape index: {}]
  %s3 = inlined_call_operand.hbm [shape: f32[1,256], index: 3, kind: input, shape index: {}]
  %s4 = inlined_call_operand.hbm [shape: bf16[256,1024], index: 4, kind: input, shape index: {}]
  %s5 = inlined_call_operand.hbm [shape: f32[1,1024], index: 5, kind: input, shape index: {}]
  %s6 = inlined_call_operand.hbm [shape: f32[512,1024], index: 6, kind: output, shape index: {}]
  %s7 = sld [smem:[#allocation0]]
  $region89: #{tpu_custom_call.1} parent=0
    _
  %s9 = ssub.s32 1, %s7
  %s10 = scalar_select 0, %s9, %s7
  $region1: #{tpu_custom_call.1} parent=0
    #allocation5 [shape = 'u8[262144]{0}', space=vmem, size = 0x40000, scoped, tag = 'input window, operand 0']
    #allocation6 [shape = 's32[2]{0}', space=sflag, size = 0x8, scoped, tag = 'scoped memory for tpu_custom_call.1']
    #allocation7 [shape = 's32[2]{0}', space=sflag, size = 0x8, scoped, tag = 'scoped memory for tpu_custom_call.1']
    #allocation8 [shape = 'u8[262144]{0}', space=vmem, size = 0x40000, scoped, tag = 'input window, operand 1']
    #allocation9 [shape = 's32[2]{0}', space=sflag, size = 0x8, scoped, tag = 'scoped memory for tpu_custom_call.1']
    #allocation10 [shape = 'u8[131072]{0}', space=vmem, size = 0x20000, scoped, tag = 'input window, operand 2, single buffered']
    #allocation11 [shape = 'u8[1024]{0}', space=vmem, size = 0x400, scoped, tag = 'input window, operand 3, single buffered']
    #allocation12 [shape = 's32[1]{0}', space=sflag, size = 0x4, scoped, tag = 'scoped memory for tpu_custom_call.1']
    #allocation13 [shape = 'u8[524288]{0}', space=vmem, size = 0x80000, scoped, tag = 'input window, operand 4']
    #allocation14 [shape = 'u8[4096]{0}', space=vmem, size = 0x1000, scoped, tag = 'input window, operand 5']
    #allocation15 [shape = 'u8[2097152]{0}', space=vmem, size = 0x200000, scoped, tag = 'output window, operand 0']
    %11 = vsyncpa [#allocation6], 0
    %s12 = scalar_lea.sflag [#allocation6], 1
    %13 = vsyncpa %s12, 0
    %14 = vsyncpa [#allocation9], 0
    %s15 = scalar_lea.sflag [#allocation9], 1
    %16 = vsyncpa %s15, 0
    %17 = vsyncpa [#allocation12], 0
    %18 = vsyncpa [#allocation7], 0
    %s19 = scalar_lea.sflag [#allocation7], 1
    %20 = vsyncpa %s19, 0
    loop: start=0, step=1, limit=6
    $region2: #{tpu_custom_call.1} parent=1 // loop_pre_header
      _
    $region3: #{tpu_custom_call.1} parent=1 // loop_header
      %s22 = sphi 0, %s26
      %p23 = scmp.ge.s32.totalorder %s22, 6
      %s29 = sphi 0, %s41
      %s30 = sphi 0, %s37
      %s31 = sphi 0, %s29
      %s32 = sphi 0, %s30
      %s33 = sphi 0, %s31
      %s34 = sphi 0, %s32
      %s44 = sphi 0, %s46
      %s47 = sphi 0, %s44
      %s48 = sphi 0, %s47
      %s64 = sphi 0, %s48
      %s70 = sphi 0, %s72
      %s73 = sphi 0, %s70
      %s74 = sphi 0, %s73
      %s90 = sphi 0, %s74
      %s94 = sphi 0, %s94
      %s96 = sphi 0, %s94
      %s97 = sphi 0, %s96
      %s111 = sphi 0, %s97
      %s115 = sphi 0, %s115
      %s117 = sphi 0, %s115
      %s118 = sphi 0, %s117
      %s132 = sphi 0, %s118
      %s138 = sphi 0, %s140
      %s141 = sphi 0, %s138
      %s142 = sphi 0, %s141
      %s158 = sphi 0, %s142
      %s164 = sphi 0, %s166
      %s167 = sphi 0, %s164
      %s168 = sphi 0, %s167
      %s184 = sphi 0, %s168
      %s190 = sphi 0, %s192
      %s193 = sphi 0, %s190
      %s194 = sphi 0, %s193
      %s210 = sphi 0, %s194
    $region4: #{tpu_custom_call.1} parent=1 // loop_header_branch
      %25 = sbr.rel (%p23) target = $region8
    $region5: #{tpu_custom_call.1} parent=1 // loop_body
      %s27 = ssub.s32 %s22, 1
      %s28 = ssub.s32 %s22, 2
      %s35 = sadd.s32 1, %s30
      %p36 = scmp.ge.s32.totalorder %s35, 2
      %s37 = scalar_select %p36, 0, %s35
      %s38 = sadd.s32 1, %s29
      %s39 = scalar_select %p36, %s38, %s29
      %p40 = scmp.ge.s32.totalorder %s39, 2
      %s41 = scalar_select %p40, 0, %s39
      %s42 = ssub.s32 %s29, %s41
      %p43 = scmp.eq.s32.totalorder %s42, 0
      %s45 = sadd.s32 %s44, 1
      %s46 = scalar_select %p43, %s44, %s45
      %p49 = pneg %p43
      %p50 = scmp.eq.s32.totalorder %s22, 3
      %p51 = por %p49, %p50
      %p52 = scmp.ne.s32.totalorder %s44, %s47
      %p53 = scmp.eq.s32.totalorder %s22, 0
      %p54 = por %p52, %p53
      %p55 = scmp.ne.s32.totalorder %s44, %s47
      %p56 = scmp.eq.s32.totalorder %s27, 3
      %p57 = por %p55, %p56
      %p58 = scmp.ne.s32.totalorder %s47, %s48
      %p59 = scmp.eq.s32.totalorder %s27, 0
      %p60 = por %p58, %p59
      %p61 = scmp.ne.s32.totalorder %s47, %s48
      %p62 = scmp.eq.s32.totalorder %s28, 3
      %p63 = por %p61, %p62
      %p65 = scmp.ne.s32.totalorder %s48, %s64
      %p66 = scmp.eq.s32.totalorder %s28, 0
      %p67 = por %p65, %p66
      %s68 = ssub.s32 %s29, %s41
      %p69 = scmp.eq.s32.totalorder %s68, 0
      %s71 = sadd.s32 %s70, 1
      %s72 = scalar_select %p69, %s70, %s71
      %p75 = pneg %p69
      %p76 = scmp.eq.s32.totalorder %s22, 3
      %p77 = por %p75, %p76
      %p78 = scmp.ne.s32.totalorder %s70, %s73
      %p79 = scmp.eq.s32.totalorder %s22, 0
      %p80 = por %p78, %p79
      %p81 = scmp.ne.s32.totalorder %s70, %s73
      %p82 = scmp.eq.s32.totalorder %s27, 3
      %p83 = por %p81, %p82
      %p84 = scmp.ne.s32.totalorder %s73, %s74
      %p85 = scmp.eq.s32.totalorder %s27, 0
      %p86 = por %p84, %p85
      %p87 = scmp.ne.s32.totalorder %s73, %s74
      %p88 = scmp.eq.s32.totalorder %s28, 3
      %p89 = por %p87, %p88
      %p91 = scmp.ne.s32.totalorder %s74, %s90
      %p92 = scmp.eq.s32.totalorder %s28, 0
      %p93 = por %p91, %p92
      %s95 = sadd.s32 %s94, 1
      %p98 = scmp.eq.s32.totalorder %s22, 3
      %p99 = scmp.ne.s32.totalorder %s94, %s96
      %p100 = scmp.eq.s32.totalorder %s22, 0
      %p101 = por %p99, %p100
      %p102 = scmp.ne.s32.totalorder %s94, %s96
      %p103 = scmp.eq.s32.totalorder %s27, 3
      %p104 = por %p102, %p103
      %p105 = scmp.ne.s32.totalorder %s96, %s97
      %p106 = scmp.eq.s32.totalorder %s27, 0
      %p107 = por %p105, %p106
      %p108 = scmp.ne.s32.totalorder %s96, %s97
      %p109 = scmp.eq.s32.totalorder %s28, 3
      %p110 = por %p108, %p109
      %p112 = scmp.ne.s32.totalorder %s97, %s111
      %p113 = scmp.eq.s32.totalorder %s28, 0
      %p114 = por %p112, %p113
      %s116 = sadd.s32 %s115, 1
      %p119 = scmp.eq.s32.totalorder %s22, 3
      %p120 = scmp.ne.s32.totalorder %s115, %s117
      %p121 = scmp.eq.s32.totalorder %s22, 0
      %p122 = por %p120, %p121
      %p123 = scmp.ne.s32.totalorder %s115, %s117
      %p124 = scmp.eq.s32.totalorder %s27, 3
      %p125 = por %p123, %p124
      %p126 = scmp.ne.s32.totalorder %s117, %s118
      %p127 = scmp.eq.s32.totalorder %s27, 0
      %p128 = por %p126, %p127
      %p129 = scmp.ne.s32.totalorder %s117, %s118
      %p130 = scmp.eq.s32.totalorder %s28, 3
      %p131 = por %p129, %p130
      %p133 = scmp.ne.s32.totalorder %s118, %s132
      %p134 = scmp.eq.s32.totalorder %s28, 0
      %p135 = por %p133, %p134
      %s136 = ssub.s32 %s30, %s37
      %p137 = scmp.eq.s32.totalorder %s136, 0
      %s139 = sadd.s32 %s138, 1
      %s140 = scalar_select %p137, %s138, %s139
      %p143 = pneg %p137
      %p144 = scmp.eq.s32.totalorder %s22, 3
      %p145 = por %p143, %p144
      %p146 = scmp.ne.s32.totalorder %s138, %s141
      %p147 = scmp.eq.s32.totalorder %s22, 0
      %p148 = por %p146, %p147
      %p149 = scmp.ne.s32.totalorder %s138, %s141
      %p150 = scmp.eq.s32.totalorder %s27, 3
      %p151 = por %p149, %p150
      %p152 = scmp.ne.s32.totalorder %s141, %s142
      %p153 = scmp.eq.s32.totalorder %s27, 0
      %p154 = por %p152, %p153
      %p155 = scmp.ne.s32.totalorder %s141, %s142
      %p156 = scmp.eq.s32.totalorder %s28, 3
      %p157 = por %p155, %p156
      %p159 = scmp.ne.s32.totalorder %s142, %s158
      %p160 = scmp.eq.s32.totalorder %s28, 0
      %p161 = por %p159, %p160
      %s162 = ssub.s32 %s30, %s37
      %p163 = scmp.eq.s32.totalorder %s162, 0
      %s165 = sadd.s32 %s164, 1
      %s166 = scalar_select %p163, %s164, %s165
      %p169 = pneg %p163
      %p170 = scmp.eq.s32.totalorder %s22, 3
      %p171 = por %p169, %p170
      %p172 = scmp.ne.s32.totalorder %s164, %s167
      %p173 = scmp.eq.s32.totalorder %s22, 0
      %p174 = por %p172, %p173
      %p175 = scmp.ne.s32.totalorder %s164, %s167
      %p176 = scmp.eq.s32.totalorder %s27, 3
      %p177 = por %p175, %p176
      %p178 = scmp.ne.s32.totalorder %s167, %s168
      %p179 = scmp.eq.s32.totalorder %s27, 0
      %p180 = por %p178, %p179
      %p181 = scmp.ne.s32.totalorder %s167, %s168
      %p182 = scmp.eq.s32.totalorder %s28, 3
      %p183 = por %p181, %p182
      %p185 = scmp.ne.s32.totalorder %s168, %s184
      %p186 = scmp.eq.s32.totalorder %s28, 0
      %p187 = por %p185, %p186
      %s188 = ssub.s32 %s29, %s41
      %p189 = scmp.eq.s32.totalorder %s188, 0
      %s191 = sadd.s32 %s190, 1
      %s192 = scalar_select %p189, %s190, %s191
      %p195 = pneg %p189
      %p196 = scmp.eq.s32.totalorder %s22, 3
      %p197 = por %p195, %p196
      %p198 = scmp.ne.s32.totalorder %s190, %s193
      %p199 = scmp.eq.s32.totalorder %s22, 0
      %p200 = por %p198, %p199
      %p201 = scmp.ne.s32.totalorder %s190, %s193
      %p202 = scmp.eq.s32.totalorder %s27, 3
      %p203 = por %p201, %p202
      %p204 = scmp.ne.s32.totalorder %s193, %s194
      %p205 = scmp.eq.s32.totalorder %s27, 0
      %p206 = por %p204, %p205
      %p207 = scmp.ne.s32.totalorder %s193, %s194
      %p208 = scmp.eq.s32.totalorder %s28, 3
      %p209 = por %p207, %p208
      %p211 = scmp.ne.s32.totalorder %s194, %s210
      %p212 = scmp.eq.s32.totalorder %s28, 0
      %p213 = por %p211, %p212
      %p214 = scmp.le.s32.totalorder 1, %s22
      %p215 = scmp.lt.s32.totalorder %s22, 5
      %p216 = pnand %p214, %p215
      %p217 = pneg %p216
      // Predicated region
      $region9: #{tpu_custom_call.1} parent=5 // pred_check
        _
      $region10: #{tpu_custom_call.1} parent=5 // pred_check_branch
        %219 = sbr.rel (%p216) target = $region12
      $region11: #{tpu_custom_call.1} parent=5 // pred_region
        %s220 = ssub.s32 %s22, 1
        // Predicated region
        $region13: #{tpu_custom_call.1} parent=11 // pred_check
          %p221 = pneg %p107
        $region14: #{tpu_custom_call.1} parent=11 // pred_check_branch
          %223 = sbr.rel (%p221) target = $region16
        $region15: #{tpu_custom_call.1} parent=11 // pred_region
          %s225 = ssub.s32 4096, 4096
          %226 = vsyncadd [#allocation9], %s225
          %s227 = sshll.u32 [#allocation10], 4
          %s228 = int_to_ptr.vmem [resolvable:$true] %s227
          %233 = dma.hbm_to_vmem [thread:$0]  %s2, 4096, %s228, [#allocation9], 128, 128, 8
        $region16: #{tpu_custom_call.1} parent=11 // pred_fallthru
          _
        // Predicated region
        $region17: #{tpu_custom_call.1} parent=11 // pred_check
          %p234 = pneg %p128
        $region18: #{tpu_custom_call.1} parent=11 // pred_check_branch
          %236 = sbr.rel (%p234) target = $region20
        $region19: #{tpu_custom_call.1} parent=11 // pred_region
          %s238 = ssub.s32 32, 32
          %239 = vsyncadd [#allocation12], %s238
          %s241 = sshll.u32 [#allocation11], 4
          %s242 = int_to_ptr.vmem [resolvable:$true] %s241
          %244 = dma.hbm_to_vmem [thread:$0]  %s3, 32, %s242, [#allocation12]
        $region20: #{tpu_custom_call.1} parent=11 // pred_fallthru
          _
      $region12: #{tpu_custom_call.1} parent=5 // pred_fallthru
        _
      %p245 = scmp.lt.s32.totalorder %s22, 4
      // Predicated region
      $region21: #{tpu_custom_call.1} parent=5 // pred_check
        %p246 = pneg %p245
      $region22: #{tpu_custom_call.1} parent=5 // pred_check_branch
        %248 = sbr.rel (%p246) target = $region24
      $region23: #{tpu_custom_call.1} parent=5 // pred_region
        // Predicated region
        $region25: #{tpu_custom_call.1} parent=23 // pred_check
          %p249 = pneg %p54
        $region26: #{tpu_custom_call.1} parent=23 // pred_check_branch
          %251 = sbr.rel (%p249) target = $region28
        $region27: #{tpu_custom_call.1} parent=23 // pred_region
          %s252 = sand.u32 %s22, 1
          %s253 = scalar_lea.sflag [#allocation6], %s252
          %s254 = sand.u32 %s44, 1
          %s255 = smul.addr %s254, 256
          %s256 = scalar_lea.vmem [#allocation5], %s255
          %s257 = smul.u32 32, %s29
          %s259 = ssub.s32 4096, 4096
          %260 = vsyncadd %s253, %s259
          %s261 = smul.addr %s257, 2
          %s262 = smul.addr %s261, 64
          %s263 = scalar_lea.hbm %s0, %s262
          %s264 = sshll.u32 %s256, 4
          %s265 = int_to_ptr.vmem [resolvable:$true] %s264
          %270 = dma.hbm_to_vmem [thread:$0]  %s263, 4096, %s265, %s253, 128, 128, 8
        $region28: #{tpu_custom_call.1} parent=23 // pred_fallthru
          _
        // Predicated region
        $region29: #{tpu_custom_call.1} parent=23 // pred_check
          %p271 = pneg %p80
        $region30: #{tpu_custom_call.1} parent=23 // pred_check_branch
          %273 = sbr.rel (%p271) target = $region32
        $region31: #{tpu_custom_call.1} parent=23 // pred_region
          %s274 = sand.u32 %s22, 1
          %s275 = scalar_lea.sflag [#allocation9], %s274
          %s276 = sand.u32 %s70, 1
          %s277 = smul.addr %s276, 256
          %s278 = scalar_lea.vmem [#allocation8], %s277
          %s279 = smul.u32 32, %s29
          %s281 = ssub.s32 4096, 4096
          %282 = vsyncadd %s275, %s281
          %s283 = smul.addr %s279, 2
          %s284 = smul.addr %s283, 64
          %s285 = scalar_lea.hbm %s1, %s284
          %s286 = sshll.u32 %s278, 4
          %s287 = int_to_ptr.vmem [resolvable:$true] %s286
          %292 = dma.hbm_to_vmem [thread:$0]  %s285, 4096, %s287, %s275, 128, 128, 8
        $region32: #{tpu_custom_call.1} parent=23 // pred_fallthru
          _
        // Predicated region
        $region33: #{tpu_custom_call.1} parent=23 // pred_check
          %p293 = pneg %p148
        $region34: #{tpu_custom_call.1} parent=23 // pred_check_branch
          %295 = sbr.rel (%p293) target = $region36
        $region35: #{tpu_custom_call.1} parent=23 // pred_region
          %s296 = sand.u32 %s22, 1
          %s297 = scalar_lea.sflag [#allocation6], %s296
          %s298 = sand.u32 %s138, 1
          %s299 = smul.addr %s298, 512
          %s300 = scalar_lea.vmem [#allocation13], %s299
          %s301 = smul.u32 4, %s30
          %s303 = ssub.s32 8192, 8192
          %304 = vsyncadd %s297, %s303
          %s305 = smul.addr %s301, 64
          %s306 = scalar_lea.hbm %s4, %s305
          %s307 = sshll.u32 %s300, 4
          %s308 = int_to_ptr.vmem [resolvable:$true] %s307
          %313 = dma.hbm_to_vmem [thread:$0]  %s306, 8192, %s308, %s297, 512, 256, 16
        $region36: #{tpu_custom_call.1} parent=23 // pred_fallthru
          _
        // Predicated region
        $region37: #{tpu_custom_call.1} parent=23 // pred_check
          %p314 = pneg %p174
        $region38: #{tpu_custom_call.1} parent=23 // pred_check_branch
          %316 = sbr.rel (%p314) target = $region40
        $region39: #{tpu_custom_call.1} parent=23 // pred_region
          %s317 = sand.u32 %s22, 1
          %s318 = scalar_lea.sflag [#allocation9], %s317
          %s319 = sand.u32 %s164, 1
          %s320 = smul.addr %s319, 4
          %s321 = scalar_lea.vmem [#allocation14], %s320
          %s322 = smul.u32 4, %s30
          %s324 = ssub.s32 64, 64
          %325 = vsyncadd %s318, %s324
          %s326 = smul.addr %s322, 16
          %s327 = scalar_lea.hbm %s5, %s326
          %s329 = sshll.u32 %s321, 4
          %s330 = int_to_ptr.vmem [resolvable:$true] %s329
          %332 = dma.hbm_to_vmem [thread:$0]  %s327, 64, %s330, %s318
        $region40: #{tpu_custom_call.1} parent=23 // pred_fallthru
          _
      $region24: #{tpu_custom_call.1} parent=5 // pred_fallthru
        _
      %p333 = scmp.le.s32.totalorder 1, %s22
      %p334 = scmp.lt.s32.totalorder %s22, 5
      %p335 = pnand %p333, %p334
      %p336 = pneg %p335
      // Predicated region
      $region41: #{tpu_custom_call.1} parent=5 // pred_check
        _
      $region42: #{tpu_custom_call.1} parent=5 // pred_check_branch
        %338 = sbr.rel (%p335) target = $region44
      $region43: #{tpu_custom_call.1} parent=5 // pred_region
        %s339 = ssub.s32 %s22, 1
        %s340 = sand.u32 %s27, 1
        %s341 = scalar_lea.sflag [#allocation6], %s340
        %s342 = sand.u32 %s47, 1
        %s343 = smul.addr %s342, 256
        %s344 = scalar_lea.vmem [#allocation5], %s343
        // Predicated region
        $region45: #{tpu_custom_call.1} parent=43 // pred_check
          %p345 = pneg %p60
        $region46: #{tpu_custom_call.1} parent=43 // pred_check_branch
          %347 = sbr.rel (%p345) target = $region48
        $region47: #{tpu_custom_call.1} parent=43 // pred_region
          %348 = dma.done %s341, 4096
        $region48: #{tpu_custom_call.1} parent=43 // pred_fallthru
          _
        %s349 = sand.u32 %s27, 1
        %s350 = scalar_lea.sflag [#allocation9], %s349
        %s351 = sand.u32 %s73, 1
        %s352 = smul.addr %s351, 256
        %s353 = scalar_lea.vmem [#allocation8], %s352
        // Predicated region
        $region49: #{tpu_custom_call.1} parent=43 // pred_check
          %p354 = pneg %p86
        $region50: #{tpu_custom_call.1} parent=43 // pred_check_branch
          %356 = sbr.rel (%p354) target = $region52
        $region51: #{tpu_custom_call.1} parent=43 // pred_region
          %357 = dma.done %s350, 4096
        $region52: #{tpu_custom_call.1} parent=43 // pred_fallthru
          _
        // Predicated region
        $region53: #{tpu_custom_call.1} parent=43 // pred_check
          %p358 = pneg %p107
        $region54: #{tpu_custom_call.1} parent=43 // pred_check_branch
          %360 = sbr.rel (%p358) target = $region56
        $region55: #{tpu_custom_call.1} parent=43 // pred_region
          %361 = dma.done [#allocation9], 4096
        $region56: #{tpu_custom_call.1} parent=43 // pred_fallthru
          _
        // Predicated region
        $region57: #{tpu_custom_call.1} parent=43 // pred_check
          %p362 = pneg %p128
        $region58: #{tpu_custom_call.1} parent=43 // pred_check_branch
          %364 = sbr.rel (%p362) target = $region60
        $region59: #{tpu_custom_call.1} parent=43 // pred_region
          %365 = dma.done [#allocation12], 32
        $region60: #{tpu_custom_call.1} parent=43 // pred_fallthru
          _
        %s366 = sand.u32 %s27, 1
        %s367 = scalar_lea.sflag [#allocation6], %s366
        %s368 = sand.u32 %s141, 1
        %s369 = smul.addr %s368, 512
        %s370 = scalar_lea.vmem [#allocation13], %s369
        // Predicated region
        $region61: #{tpu_custom_call.1} parent=43 // pred_check
          %p371 = pneg %p154
        $region62: #{tpu_custom_call.1} parent=43 // pred_check_branch
          %373 = sbr.rel (%p371) target = $region64
        $region63: #{tpu_custom_call.1} parent=43 // pred_region
          %374 = dma.done %s367, 8192
        $region64: #{tpu_custom_call.1} parent=43 // pred_fallthru
          _
        %s375 = sand.u32 %s27, 1
        %s376 = scalar_lea.sflag [#allocation9], %s375
        %s377 = sand.u32 %s167, 1
        %s378 = smul.addr %s377, 4
        %s379 = scalar_lea.vmem [#allocation14], %s378
        // Predicated region
        $region65: #{tpu_custom_call.1} parent=43 // pred_check
          %p380 = pneg %p180
        $region66: #{tpu_custom_call.1} parent=43 // pred_check_branch
          %382 = sbr.rel (%p380) target = $region68
        $region67: #{tpu_custom_call.1} parent=43 // pred_region
          %383 = dma.done %s376, 64
        $region68: #{tpu_custom_call.1} parent=43 // pred_fallthru
          _
        %s384 = sand.u32 %s27, 1
        %s385 = scalar_lea.sflag [#allocation6], %s384
        %s386 = sand.u32 %s47, 1
        %s387 = smul.addr %s386, 256
        %s388 = scalar_lea.vmem [#allocation5], %s387
        %p389 = pneg %p60
        %p390 = pneg %p57
        %s391 = sand.u32 %s27, 1
        %s392 = scalar_lea.sflag [#allocation9], %s391
        %s393 = sand.u32 %s73, 1
        %s394 = smul.addr %s393, 256
        %s395 = scalar_lea.vmem [#allocation8], %s394
        %p396 = pneg %p86
        %p397 = pneg %p83
        %p398 = pneg %p107
        %p399 = pneg %p104
        %p400 = pneg %p128
        %p401 = pneg %p125
        %s402 = sand.u32 %s27, 1
        %s403 = scalar_lea.sflag [#allocation6], %s402
        %s404 = sand.u32 %s141, 1
        %s405 = smul.addr %s404, 512
        %s406 = scalar_lea.vmem [#allocation13], %s405
        %p407 = pneg %p154
        %p408 = pneg %p151
        %s409 = sand.u32 %s27, 1
        %s410 = scalar_lea.sflag [#allocation9], %s409
        %s411 = sand.u32 %s167, 1
        %s412 = smul.addr %s411, 4
        %s413 = scalar_lea.vmem [#allocation14], %s412
        %p414 = pneg %p180
        %p415 = pneg %p177
        %p416 = pneg %p206
        %p417 = pneg %p203
        %s418 = sand.u32 %s193, 1
        %s419 = scalar_lea.sflag [#allocation7], %s418
        %s420 = sand.u32 %s193, 1
        %s421 = smul.addr %s420, 2048
        %s422 = scalar_lea.vmem [#allocation15], %s421
        %s423 = smul.u32 32, %s31
        %s424 = smul.u32 32, %s31
        %s425 = smul.u32 4, %s32
        %s426 = smul.u32 4, %s32
        %s427 = smul.u32 32, %s31
        %p428 = scmp.eq.s32.totalorder %s32, 0
        // Predicated region
        $region69: #{tpu_custom_call.1} parent=43 // pred_check
          %p429 = pneg %p428
        $region70: #{tpu_custom_call.1} parent=43 // pred_check_branch
          %431 = sbr.rel (%p429) target = $region72
        $region71: #{tpu_custom_call.1} parent=43 // pred_region
          %v432 = vld [vmem:[%s344] sm:$0xff]
          %v433 = vld [vmem:[%s344 + $0x8] sm:$0xff]
          %v434 = vld [vmem:[%s344 + $0x10] sm:$0xff]
          %v435 = vld [vmem:[%s344 + $0x18] sm:$0xff]
          %v436 = vld [vmem:[%s344 + $0x20] sm:$0xff]
          %v437 = vld [vmem:[%s344 + $0x28] sm:$0xff]
          %v438 = vld [vmem:[%s344 + $0x30] sm:$0xff]
          %v439 = vld [vmem:[%s344 + $0x38] sm:$0xff]
          %v440 = vld [vmem:[%s344 + $0x40] sm:$0xff]
          %v441 = vld [vmem:[%s344 + $0x48] sm:$0xff]
          %v442 = vld [vmem:[%s344 + $0x50] sm:$0xff]
          %v443 = vld [vmem:[%s344 + $0x58] sm:$0xff]
          %v444 = vld [vmem:[%s344 + $0x60] sm:$0xff]
          %v445 = vld [vmem:[%s344 + $0x68] sm:$0xff]
          %v446 = vld [vmem:[%s344 + $0x70] sm:$0xff]
          %v447 = vld [vmem:[%s344 + $0x78] sm:$0xff]
          %v448 = vld [vmem:[%s344 + $0x80] sm:$0xff]
          %v449 = vld [vmem:[%s344 + $0x88] sm:$0xff]
          %v450 = vld [vmem:[%s344 + $0x90] sm:$0xff]
          %v451 = vld [vmem:[%s344 + $0x98] sm:$0xff]
          %v452 = vld [vmem:[%s344 + $0xa0] sm:$0xff]
          %v453 = vld [vmem:[%s344 + $0xa8] sm:$0xff]
          %v454 = vld [vmem:[%s344 + $0xb0] sm:$0xff]
          %v455 = vld [vmem:[%s344 + $0xb8] sm:$0xff]
          %v456 = vld [vmem:[%s344 + $0xc0] sm:$0xff]
          %v457 = vld [vmem:[%s344 + $0xc8] sm:$0xff]
          %v458 = vld [vmem:[%s344 + $0xd0] sm:$0xff]
          %v459 = vld [vmem:[%s344 + $0xd8] sm:$0xff]
          %v460 = vld [vmem:[%s344 + $0xe0] sm:$0xff]
          %v461 = vld [vmem:[%s344 + $0xe8] sm:$0xff]
          %v462 = vld [vmem:[%s344 + $0xf0] sm:$0xff]
          %v463 = vld [vmem:[%s344 + $0xf8] sm:$0xff]
          %v464 = vld [vmem:[#allocation10] sm:$0xff]
          %v465 = vld [vmem:[#allocation10 + $0x8] sm:$0xff]
          %v466 = vld [vmem:[#allocation10 + $0x10] sm:$0xff]
          %v467 = vld [vmem:[#allocation10 + $0x18] sm:$0xff]
          %v468 = vld [vmem:[#allocation10 + $0x20] sm:$0xff]
          %v469 = vld [vmem:[#allocation10 + $0x28] sm:$0xff]
          %v470 = vld [vmem:[#allocation10 + $0x30] sm:$0xff]
          %v471 = vld [vmem:[#allocation10 + $0x38] sm:$0xff]
          %v472 = vld [vmem:[#allocation10 + $0x40] sm:$0xff]
          %v473 = vld [vmem:[#allocation10 + $0x48] sm:$0xff]
          %v474 = vld [vmem:[#allocation10 + $0x50] sm:$0xff]
          %v475 = vld [vmem:[#allocation10 + $0x58] sm:$0xff]
          %v476 = vld [vmem:[#allocation10 + $0x60] sm:$0xff]
          %v477 = vld [vmem:[#allocation10 + $0x68] sm:$0xff]
          %v478 = vld [vmem:[#allocation10 + $0x70] sm:$0xff]
          %v479 = vld [vmem:[#allocation10 + $0x78] sm:$0xff]
          %v480 = vld [vmem:[#allocation10 + $0x80] sm:$0xff]
          %v481 = vld [vmem:[#allocation10 + $0x88] sm:$0xff]
          %v482 = vld [vmem:[#allocation10 + $0x90] sm:$0xff]
          %v483 = vld [vmem:[#allocation10 + $0x98] sm:$0xff]
          %v484 = vld [vmem:[#allocation10 + $0xa0] sm:$0xff]
          %v485 = vld [vmem:[#allocation10 + $0xa8] sm:$0xff]
          %v486 = vld [vmem:[#allocation10 + $0xb0] sm:$0xff]
          %v487 = vld [vmem:[#allocation10 + $0xb8] sm:$0xff]
          %v488 = vld [vmem:[#allocation10 + $0xc0] sm:$0xff]
          %v489 = vld [vmem:[#allocation10 + $0xc8] sm:$0xff]
          %v490 = vld [vmem:[#allocation10 + $0xd0] sm:$0xff]
          %v491 = vld [vmem:[#allocation10 + $0xd8] sm:$0xff]
          %v492 = vld [vmem:[#allocation10 + $0xe0] sm:$0xff]
          %v493 = vld [vmem:[#allocation10 + $0xe8] sm:$0xff]
          %v494 = vld [vmem:[#allocation10 + $0xf0] sm:$0xff]
          %v495 = vld [vmem:[#allocation10 + $0xf8] sm:$0xff]
          %v496 = vld [vmem:[#allocation11] sm:$0x3]
          %v498 = vlaneseq
          %v499 = vshrl.u32 %v498, 7
          %v500 = vsub.s32 0, %v499
          %v501 = vrot.slane %v496, %v500
          %v502 = vlaneseq
          %v503 = vshrl.u32 %v502, 7
          %v504 = vsub.s32 1, %v503
          %v505 = vrot.slane %v496, %v504
          %v540 = vunpack.c.l.b16 %v432
          %v541 = vunpack.c.h.b16 %v432
          %v542 = vunpack.c.l.b16 %v433
          %v543 = vunpack.c.h.b16 %v433
          %v544 = vunpack.c.l.b16 %v434
          %v545 = vunpack.c.h.b16 %v434
          %v546 = vunpack.c.l.b16 %v435
          %v547 = vunpack.c.h.b16 %v435
          %v548 = vunpack.c.l.b16 %v436
          %v549 = vunpack.c.h.b16 %v436
          %v550 = vunpack.c.l.b16 %v437
          %v551 = vunpack.c.h.b16 %v437
          %v552 = vunpack.c.l.b16 %v438
          %v553 = vunpack.c.h.b16 %v438
          %v554 = vunpack.c.l.b16 %v439
          %v555 = vunpack.c.h.b16 %v439
          %v556 = vunpack.c.l.b16 %v440
          %v557 = vunpack.c.h.b16 %v440
          %v558 = vunpack.c.l.b16 %v441
          %v559 = vunpack.c.h.b16 %v441
          %v560 = vunpack.c.l.b16 %v442
          %v561 = vunpack.c.h.b16 %v442
          %v562 = vunpack.c.l.b16 %v443
          %v563 = vunpack.c.h.b16 %v443
          %v564 = vunpack.c.l.b16 %v444
          %v565 = vunpack.c.h.b16 %v444
          %v566 = vunpack.c.l.b16 %v445
          %v567 = vunpack.c.h.b16 %v445
          %v568 = vunpack.c.l.b16 %v446
          %v569 = vunpack.c.h.b16 %v446
          %v570 = vunpack.c.l.b16 %v447
          %v571 = vunpack.c.h.b16 %v447
          %v572 = vunpack.c.l.b16 %v448
          %v573 = vunpack.c.h.b16 %v448
          %v574 = vunpack.c.l.b16 %v449
          %v575 = vunpack.c.h.b16 %v449
          %v576 = vunpack.c.l.b16 %v450
          %v577 = vunpack.c.h.b16 %v450
          %v578 = vunpack.c.l.b16 %v451
          %v579 = vunpack.c.h.b16 %v451
          %v580 = vunpack.c.l.b16 %v452
          %v581 = vunpack.c.h.b16 %v452
          %v582 = vunpack.c.l.b16 %v453
          %v583 = vunpack.c.h.b16 %v453
          %v584 = vunpack.c.l.b16 %v454
          %v585 = vunpack.c.h.b16 %v454
          %v586 = vunpack.c.l.b16 %v455
          %v587 = vunpack.c.h.b16 %v455
          %v588 = vunpack.c.l.b16 %v456
          %v589 = vunpack.c.h.b16 %v456
          %v590 = vunpack.c.l.b16 %v457
          %v591 = vunpack.c.h.b16 %v457
          %v592 = vunpack.c.l.b16 %v458
          %v593 = vunpack.c.h.b16 %v458
          %v594 = vunpack.c.l.b16 %v459
          %v595 = vunpack.c.h.b16 %v459
          %v596 = vunpack.c.l.b16 %v460
          %v597 = vunpack.c.h.b16 %v460
          %v598 = vunpack.c.l.b16 %v461
          %v599 = vunpack.c.h.b16 %v461
          %v600 = vunpack.c.l.b16 %v462
          %v601 = vunpack.c.h.b16 %v462
          %v602 = vunpack.c.l.b16 %v463
          %v603 = vunpack.c.h.b16 %v463
          %v604 = vpack.c.b16 %v542, %v540
          %v605 = vpack.c.b16 %v543, %v541
          %v606 = vpack.c.b16 %v546, %v544
          %v607 = vpack.c.b16 %v547, %v545
          %v608 = vpack.c.b16 %v550, %v548
          %v609 = vpack.c.b16 %v551, %v549
          %v610 = vpack.c.b16 %v554, %v552
          %v611 = vpack.c.b16 %v555, %v553
          %v612 = vpack.c.b16 %v558, %v556
          %v613 = vpack.c.b16 %v559, %v557
          %v614 = vpack.c.b16 %v562, %v560
          %v615 = vpack.c.b16 %v563, %v561
          %v616 = vpack.c.b16 %v566, %v564
          %v617 = vpack.c.b16 %v567, %v565
          %v618 = vpack.c.b16 %v570, %v568
          %v619 = vpack.c.b16 %v571, %v569
          %v620 = vpack.c.b16 %v574, %v572
          %v621 = vpack.c.b16 %v575, %v573
          %v622 = vpack.c.b16 %v578, %v576
          %v623 = vpack.c.b16 %v579, %v577
          %v624 = vpack.c.b16 %v582, %v580
          %v625 = vpack.c.b16 %v583, %v581
          %v626 = vpack.c.b16 %v586, %v584
          %v627 = vpack.c.b16 %v587, %v585
          %v628 = vpack.c.b16 %v590, %v588
          %v629 = vpack.c.b16 %v591, %v589
          %v630 = vpack.c.b16 %v594, %v592
          %v631 = vpack.c.b16 %v595, %v593
          %v632 = vpack.c.b16 %v598, %v596
          %v633 = vpack.c.b16 %v599, %v597
          %v634 = vpack.c.b16 %v602, %v600
          %v635 = vpack.c.b16 %v603, %v601
          %v700 = vunpack.c.l.b16 %v464
          %v701 = vunpack.c.h.b16 %v464
          %v702 = vunpack.c.l.b16 %v465
          %v703 = vunpack.c.h.b16 %v465
          %v704 = vunpack.c.l.b16 %v466
          %v705 = vunpack.c.h.b16 %v466
          %v706 = vunpack.c.l.b16 %v467
          %v707 = vunpack.c.h.b16 %v467
          %v708 = vunpack.c.l.b16 %v468
          %v709 = vunpack.c.h.b16 %v468
          %v710 = vunpack.c.l.b16 %v469
          %v711 = vunpack.c.h.b16 %v469
          %v712 = vunpack.c.l.b16 %v470
          %v713 = vunpack.c.h.b16 %v470
          %v714 = vunpack.c.l.b16 %v471
          %v715 = vunpack.c.h.b16 %v471
          %v716 = vunpack.c.l.b16 %v472
          %v717 = vunpack.c.h.b16 %v472
          %v718 = vunpack.c.l.b16 %v473
          %v719 = vunpack.c.h.b16 %v473
          %v720 = vunpack.c.l.b16 %v474
          %v721 = vunpack.c.h.b16 %v474
          %v722 = vunpack.c.l.b16 %v475
          %v723 = vunpack.c.h.b16 %v475
          %v724 = vunpack.c.l.b16 %v476
          %v725 = vunpack.c.h.b16 %v476
          %v726 = vunpack.c.l.b16 %v477
          %v727 = vunpack.c.h.b16 %v477
          %v728 = vunpack.c.l.b16 %v478
          %v729 = vunpack.c.h.b16 %v478
          %v730 = vunpack.c.l.b16 %v479
          %v731 = vunpack.c.h.b16 %v479
          %v732 = vunpack.c.l.b16 %v480
          %v733 = vunpack.c.h.b16 %v480
          %v734 = vunpack.c.l.b16 %v481
          %v735 = vunpack.c.h.b16 %v481
          %v736 = vunpack.c.l.b16 %v482
          %v737 = vunpack.c.h.b16 %v482
          %v738 = vunpack.c.l.b16 %v483
          %v739 = vunpack.c.h.b16 %v483
          %v740 = vunpack.c.l.b16 %v484
          %v741 = vunpack.c.h.b16 %v484
          %v742 = vunpack.c.l.b16 %v485
          %v743 = vunpack.c.h.b16 %v485
          %v744 = vunpack.c.l.b16 %v486
          %v745 = vunpack.c.h.b16 %v486
          %v746 = vunpack.c.l.b16 %v487
          %v747 = vunpack.c.h.b16 %v487
          %v748 = vunpack.c.l.b16 %v488
          %v749 = vunpack.c.h.b16 %v488
          %v750 = vunpack.c.l.b16 %v489
          %v751 = vunpack.c.h.b16 %v489
          %v752 = vunpack.c.l.b16 %v490
          %v753 = vunpack.c.h.b16 %v490
          %v754 = vunpack.c.l.b16 %v491
          %v755 = vunpack.c.h.b16 %v491
          %v756 = vunpack.c.l.b16 %v492
          %v757 = vunpack.c.h.b16 %v492
          %v758 = vunpack.c.l.b16 %v493
          %v759 = vunpack.c.h.b16 %v493
          %v760 = vunpack.c.l.b16 %v494
          %v761 = vunpack.c.h.b16 %v494
          %v762 = vunpack.c.l.b16 %v495
          %v763 = vunpack.c.h.b16 %v495
          %v764 = vpack.c.b16 %v702, %v700
          %v765 = vpack.c.b16 %v703, %v701
          %v766 = vpack.c.b16 %v706, %v704
          %v767 = vpack.c.b16 %v707, %v705
          %v768 = vpack.c.b16 %v710, %v708
          %v769 = vpack.c.b16 %v711, %v709
          %v770 = vpack.c.b16 %v714, %v712
          %v771 = vpack.c.b16 %v715, %v713
          %v772 = vpack.c.b16 %v718, %v716
          %v773 = vpack.c.b16 %v719, %v717
          %v774 = vpack.c.b16 %v722, %v720
          %v775 = vpack.c.b16 %v723, %v721
          %v776 = vpack.c.b16 %v726, %v724
          %v777 = vpack.c.b16 %v727, %v725
          %v778 = vpack.c.b16 %v730, %v728
          %v779 = vpack.c.b16 %v731, %v729
          %v780 = vpack.c.b16 %v734, %v732
          %v781 = vpack.c.b16 %v735, %v733
          %v782 = vpack.c.b16 %v738, %v736
          %v783 = vpack.c.b16 %v739, %v737
          %v784 = vpack.c.b16 %v742, %v740
          %v785 = vpack.c.b16 %v743, %v741
          %v786 = vpack.c.b16 %v746, %v744
          %v787 = vpack.c.b16 %v747, %v745
          %v788 = vpack.c.b16 %v750, %v748
          %v789 = vpack.c.b16 %v751, %v749
          %v790 = vpack.c.b16 %v754, %v752
          %v791 = vpack.c.b16 %v755, %v753
          %v792 = vpack.c.b16 %v758, %v756
          %v793 = vpack.c.b16 %v759, %v757
          %v794 = vpack.c.b16 %v762, %v760
          %v795 = vpack.c.b16 %v763, %v761
          %828 = vmatprep.subr.bf16.mxu0 %v779
          %829 = vmatpush1.bf16.msra.mxu0 %v778
          %830 = vmatprep.subr.bf16.mxu0 %v777
          %831 = vmatpush1.bf16.msra.mxu0 %v776
          %832 = vmatprep.subr.bf16.mxu0 %v775
          %833 = vmatpush1.bf16.msra.mxu0 %v774
          %834 = vmatprep.subr.bf16.mxu0 %v773
          %835 = vmatpush1.bf16.msra.mxu0 %v772
          %836 = vmatprep.subr.bf16.mxu0 %v771
          %837 = vmatpush1.bf16.msra.mxu0 %v770
          %838 = vmatprep.subr.bf16.mxu0 %v769
          %839 = vmatpush1.bf16.msra.mxu0 %v768
          %840 = vmatprep.subr.bf16.mxu0 %v767
          %841 = vmatpush1.bf16.msra.mxu0 %v766
          %842 = vmatprep.subr.bf16.mxu0 %v765
          %843 = vmatpush1.bf16.msra.mxu0 %v764
          %844 = vmatprep.subr.bf16.mxu0 %v795
          %845 = vmatpush2.bf16.msra.mxu0 %v794
          %846 = vmatprep.subr.bf16.mxu0 %v793
          %847 = vmatpush2.bf16.msra.mxu0 %v792
          %848 = vmatprep.subr.bf16.mxu0 %v791
          %849 = vmatpush2.bf16.msra.mxu0 %v790
          %850 = vmatprep.subr.bf16.mxu0 %v789
          %851 = vmatpush2.bf16.msra.mxu0 %v788
          %852 = vmatprep.subr.bf16.mxu0 %v787
          %853 = vmatpush2.bf16.msra.mxu0 %v786
          %854 = vmatprep.subr.bf16.mxu0 %v785
          %855 = vmatpush2.bf16.msra.mxu0 %v784
          %856 = vmatprep.subr.bf16.mxu0 %v783
          %857 = vmatpush2.bf16.msra.mxu0 %v782
          %858 = vmatprep.subr.bf16.mxu0 %v781
          %859 = vmatpush2.bf16.msra.mxu0 %v780
          %860 = vmatprep.mubr.bf16.mxu0 %v605
          %861 = vmatmul.mubr.bf16.gmra.mxu0 %v604
          %v862 = vpop.f32.mrf.mxu0
          %v863 = vadd.f32 %v501, %v862
          %v864 = vpop.f32.mrf.mxu0
          %v865 = vadd.f32 %v505, %v864
          %v866 = vpop.f32.mrf.mxu0
          %v867 = vadd.f32 %v501, %v866
          %v868 = vpop.f32.mrf.mxu0
          %v869 = vadd.f32 %v505, %v868
          %870 = vmatprep.mubr.bf16.mxu0 %v607
          %871 = vmatmul.mubr.bf16.gmra.mxu0 %v606
          %v872 = vpop.f32.mrf.mxu0
          %v873 = vadd.f32 %v501, %v872
          %v874 = vpop.f32.mrf.mxu0
          %v875 = vadd.f32 %v505, %v874
          %v876 = vpop.f32.mrf.mxu0
          %v877 = vadd.f32 %v501, %v876
          %v878 = vpop.f32.mrf.mxu0
          %v879 = vadd.f32 %v505, %v878
          %880 = vmatprep.mubr.bf16.mxu0 %v609
          %881 = vmatmul.mubr.bf16.gmra.mxu0 %v608
          %v882 = vpop.f32.mrf.mxu0
          %v883 = vadd.f32 %v501, %v882
          %v884 = vpop.f32.mrf.mxu0
          %v885 = vadd.f32 %v505, %v884
          %v886 = vpop.f32.mrf.mxu0
          %v887 = vadd.f32 %v501, %v886
          %v888 = vpop.f32.mrf.mxu0
          %v889 = vadd.f32 %v505, %v888
          %890 = vmatprep.mubr.bf16.mxu0 %v611
          %891 = vmatmul.mubr.bf16.gmra.mxu0 %v610
          %v892 = vpop.f32.mrf.mxu0
          %v893 = vadd.f32 %v501, %v892
          %v894 = vpop.f32.mrf.mxu0
          %v895 = vadd.f32 %v505, %v894
          %v896 = vpop.f32.mrf.mxu0
          %v897 = vadd.f32 %v501, %v896
          %v898 = vpop.f32.mrf.mxu0
          %v899 = vadd.f32 %v505, %v898
          %900 = vmatprep.mubr.bf16.mxu0 %v613
          %901 = vmatmul.mubr.bf16.gmra.mxu0 %v612
          %v902 = vpop.f32.mrf.mxu0
          %v903 = vadd.f32 %v501, %v902
          %v904 = vpop.f32.mrf.mxu0
          %v905 = vadd.f32 %v505, %v904
          %v906 = vpop.f32.mrf.mxu0
          %v907 = vadd.f32 %v501, %v906
          %v908 = vpop.f32.mrf.mxu0
          %v909 = vadd.f32 %v505, %v908
          %910 = vmatprep.mubr.bf16.mxu0 %v615
          %911 = vmatmul.mubr.bf16.gmra.mxu0 %v614
          %v912 = vpop.f32.mrf.mxu0
          %v913 = vadd.f32 %v501, %v912
          %v914 = vpop.f32.mrf.mxu0
          %v915 = vadd.f32 %v505, %v914
          %v916 = vpop.f32.mrf.mxu0
          %v917 = vadd.f32 %v501, %v916
          %v918 = vpop.f32.mrf.mxu0
          %v919 = vadd.f32 %v505, %v918
          %920 = vmatprep.mubr.bf16.mxu0 %v617
          %921 = vmatmul.mubr.bf16.gmra.mxu0 %v616
          %v922 = vpop.f32.mrf.mxu0
          %v923 = vadd.f32 %v501, %v922
          %v924 = vpop.f32.mrf.mxu0
          %v925 = vadd.f32 %v505, %v924
          %v926 = vpop.f32.mrf.mxu0
          %v927 = vadd.f32 %v501, %v926
          %v928 = vpop.f32.mrf.mxu0
          %v929 = vadd.f32 %v505, %v928
          %930 = vmatprep.mubr.bf16.mxu0 %v619
          %931 = vmatmul.mubr.bf16.gmra.mxu0 %v618
          %v932 = vpop.f32.mrf.mxu0
          %v933 = vadd.f32 %v501, %v932
          %v934 = vpop.f32.mrf.mxu0
          %v935 = vadd.f32 %v505, %v934
          %v936 = vpop.f32.mrf.mxu0
          %v937 = vadd.f32 %v501, %v936
          %v938 = vpop.f32.mrf.mxu0
          %v939 = vadd.f32 %v505, %v938
          %940 = vmatprep.mubr.bf16.mxu0 %v621
          %941 = vmatmul.mubr.bf16.gmra.mxu0 %v620
          %v942 = vpop.f32.mrf.mxu0
          %v943 = vadd.f32 %v501, %v942
          %v944 = vpop.f32.mrf.mxu0
          %v945 = vadd.f32 %v505, %v944
          %v946 = vpop.f32.mrf.mxu0
          %v947 = vadd.f32 %v501, %v946
          %v948 = vpop.f32.mrf.mxu0
          %v949 = vadd.f32 %v505, %v948
          %950 = vmatprep.mubr.bf16.mxu0 %v623
          %951 = vmatmul.mubr.bf16.gmra.mxu0 %v622
          %v952 = vpop.f32.mrf.mxu0
          %v953 = vadd.f32 %v501, %v952
          %v954 = vpop.f32.mrf.mxu0
          %v955 = vadd.f32 %v505, %v954
          %v956 = vpop.f32.mrf.mxu0
          %v957 = vadd.f32 %v501, %v956
          %v958 = vpop.f32.mrf.mxu0
          %v959 = vadd.f32 %v505, %v958
          %960 = vmatprep.mubr.bf16.mxu0 %v625
          %961 = vmatmul.mubr.bf16.gmra.mxu0 %v624
          %v962 = vpop.f32.mrf.mxu0
          %v963 = vadd.f32 %v501, %v962
          %v964 = vpop.f32.mrf.mxu0
          %v965 = vadd.f32 %v505, %v964
          %v966 = vpop.f32.mrf.mxu0
          %v967 = vadd.f32 %v501, %v966
          %v968 = vpop.f32.mrf.mxu0
          %v969 = vadd.f32 %v505, %v968
          %970 = vmatprep.mubr.bf16.mxu0 %v627
          %971 = vmatmul.mubr.bf16.gmra.mxu0 %v626
          %v972 = vpop.f32.mrf.mxu0
          %v973 = vadd.f32 %v501, %v972
          %v974 = vpop.f32.mrf.mxu0
          %v975 = vadd.f32 %v505, %v974
          %v976 = vpop.f32.mrf.mxu0
          %v977 = vadd.f32 %v501, %v976
          %v978 = vpop.f32.mrf.mxu0
          %v979 = vadd.f32 %v505, %v978
          %980 = vmatprep.mubr.bf16.mxu0 %v629
          %981 = vmatmul.mubr.bf16.gmra.mxu0 %v628
          %v982 = vpop.f32.mrf.mxu0
          %v983 = vadd.f32 %v501, %v982
          %v984 = vpop.f32.mrf.mxu0
          %v985 = vadd.f32 %v505, %v984
          %v986 = vpop.f32.mrf.mxu0
          %v987 = vadd.f32 %v501, %v986
          %v988 = vpop.f32.mrf.mxu0
          %v989 = vadd.f32 %v505, %v988
          %990 = vmatprep.mubr.bf16.mxu0 %v631
          %991 = vmatmul.mubr.bf16.gmra.mxu0 %v630
          %v992 = vpop.f32.mrf.mxu0
          %v993 = vadd.f32 %v501, %v992
          %v994 = vpop.f32.mrf.mxu0
          %v995 = vadd.f32 %v505, %v994
          %v996 = vpop.f32.mrf.mxu0
          %v997 = vadd.f32 %v501, %v996
          %v998 = vpop.f32.mrf.mxu0
          %v999 = vadd.f32 %v505, %v998
          %1000 = vmatprep.mubr.bf16.mxu0 %v633
          %1001 = vmatmul.mubr.bf16.gmra.mxu0 %v632
          %v1002 = vpop.f32.mrf.mxu0
          %v1003 = vadd.f32 %v501, %v1002
          %v1004 = vpop.f32.mrf.mxu0
          %v1005 = vadd.f32 %v505, %v1004
          %v1006 = vpop.f32.mrf.mxu0
          %v1007 = vadd.f32 %v501, %v1006
          %v1008 = vpop.f32.mrf.mxu0
          %v1009 = vadd.f32 %v505, %v1008
          %1010 = vmatprep.mubr.bf16.mxu0 %v635
          %1011 = vmatmul.mubr.bf16.gmra.mxu0 %v634
          %v1012 = vpop.f32.mrf.mxu0
          %v1013 = vadd.f32 %v501, %v1012
          %v1014 = vpop.f32.mrf.mxu0
          %v1015 = vadd.f32 %v505, %v1014
          %v1016 = vpop.f32.mrf.mxu0
          %v1017 = vadd.f32 %v501, %v1016
          %v1018 = vpop.f32.mrf.mxu0
          %v1019 = vadd.f32 %v505, %v1018
          %1020 = vdwg.mxu0
          %v1021 = vtanh.pop %v863
          %v1022 = vtanh.pop %v865
          %v1023 = vtanh.pop %v867
          %v1024 = vtanh.pop %v869
          %v1025 = vtanh.pop %v873
          %v1026 = vtanh.pop %v875
          %v1027 = vtanh.pop %v877
          %v1028 = vtanh.pop %v879
          %v1029 = vtanh.pop %v883
          %v1030 = vtanh.pop %v885
          %v1031 = vtanh.pop %v887
          %v1032 = vtanh.pop %v889
          %v1033 = vtanh.pop %v893
          %v1034 = vtanh.pop %v895
          %v1035 = vtanh.pop %v897
          %v1036 = vtanh.pop %v899
          %v1037 = vtanh.pop %v903
          %v1038 = vtanh.pop %v905
          %v1039 = vtanh.pop %v907
          %v1040 = vtanh.pop %v909
          %v1041 = vtanh.pop %v913
          %v1042 = vtanh.pop %v915
          %v1043 = vtanh.pop %v917
          %v1044 = vtanh.pop %v919
          %v1045 = vtanh.pop %v923
          %v1046 = vtanh.pop %v925
          %v1047 = vtanh.pop %v927
          %v1048 = vtanh.pop %v929
          %v1049 = vtanh.pop %v933
          %v1050 = vtanh.pop %v935
          %v1051 = vtanh.pop %v937
          %v1052 = vtanh.pop %v939
          %v1053 = vtanh.pop %v943
          %v1054 = vtanh.pop %v945
          %v1055 = vtanh.pop %v947
          %v1056 = vtanh.pop %v949
          %v1057 = vtanh.pop %v953
          %v1058 = vtanh.pop %v955
          %v1059 = vtanh.pop %v957
          %v1060 = vtanh.pop %v959
          %v1061 = vtanh.pop %v963
          %v1062 = vtanh.pop %v965
          %v1063 = vtanh.pop %v967
          %v1064 = vtanh.pop %v969
          %v1065 = vtanh.pop %v973
          %v1066 = vtanh.pop %v975
          %v1067 = vtanh.pop %v977
          %v1068 = vtanh.pop %v979
          %v1069 = vtanh.pop %v983
          %v1070 = vtanh.pop %v985
          %v1071 = vtanh.pop %v987
          %v1072 = vtanh.pop %v989
          %v1073 = vtanh.pop %v993
          %v1074 = vtanh.pop %v995
          %v1075 = vtanh.pop %v997
          %v1076 = vtanh.pop %v999
          %v1077 = vtanh.pop %v1003
          %v1078 = vtanh.pop %v1005
          %v1079 = vtanh.pop %v1007
          %v1080 = vtanh.pop %v1009
          %v1081 = vtanh.pop %v1013
          %v1082 = vtanh.pop %v1015
          %v1083 = vtanh.pop %v1017
          %v1084 = vtanh.pop %v1019
          %v1085 = vld [vmem:[%s353] sm:$0xff]
          %v1086 = vld [vmem:[%s353 + $0x8] sm:$0xff]
          %v1087 = vld [vmem:[%s353 + $0x10] sm:$0xff]
          %v1088 = vld [vmem:[%s353 + $0x18] sm:$0xff]
          %v1089 = vld [vmem:[%s353 + $0x20] sm:$0xff]
          %v1090 = vld [vmem:[%s353 + $0x28] sm:$0xff]
          %v1091 = vld [vmem:[%s353 + $0x30] sm:$0xff]
          %v1092 = vld [vmem:[%s353 + $0x38] sm:$0xff]
          %v1093 = vld [vmem:[%s353 + $0x40] sm:$0xff]
          %v1094 = vld [vmem:[%s353 + $0x48] sm:$0xff]
          %v1095 = vld [vmem:[%s353 + $0x50] sm:$0xff]
          %v1096 = vld [vmem:[%s353 + $0x58] sm:$0xff]
          %v1097 = vld [vmem:[%s353 + $0x60] sm:$0xff]
          %v1098 = vld [vmem:[%s353 + $0x68] sm:$0xff]
          %v1099 = vld [vmem:[%s353 + $0x70] sm:$0xff]
          %v1100 = vld [vmem:[%s353 + $0x78] sm:$0xff]
          %v1101 = vld [vmem:[%s353 + $0x80] sm:$0xff]
          %v1102 = vld [vmem:[%s353 + $0x88] sm:$0xff]
          %v1103 = vld [vmem:[%s353 + $0x90] sm:$0xff]
          %v1104 = vld [vmem:[%s353 + $0x98] sm:$0xff]
          %v1105 = vld [vmem:[%s353 + $0xa0] sm:$0xff]
          %v1106 = vld [vmem:[%s353 + $0xa8] sm:$0xff]
          %v1107 = vld [vmem:[%s353 + $0xb0] sm:$0xff]
          %v1108 = vld [vmem:[%s353 + $0xb8] sm:$0xff]
          %v1109 = vld [vmem:[%s353 + $0xc0] sm:$0xff]
          %v1110 = vld [vmem:[%s353 + $0xc8] sm:$0xff]
          %v1111 = vld [vmem:[%s353 + $0xd0] sm:$0xff]
          %v1112 = vld [vmem:[%s353 + $0xd8] sm:$0xff]
          %v1113 = vld [vmem:[%s353 + $0xe0] sm:$0xff]
          %v1114 = vld [vmem:[%s353 + $0xe8] sm:$0xff]
          %v1115 = vld [vmem:[%s353 + $0xf0] sm:$0xff]
          %v1116 = vld [vmem:[%s353 + $0xf8] sm:$0xff]
          %v1117 = vunpack.c.l.bf16 %v1085
          %v1118 = vunpack.c.h.bf16 %v1085
          %v1119 = vunpack.c.l.bf16 %v1086
          %v1120 = vunpack.c.h.bf16 %v1086
          %v1121 = vunpack.c.l.bf16 %v1087
          %v1122 = vunpack.c.h.bf16 %v1087
          %v1123 = vunpack.c.l.bf16 %v1088
          %v1124 = vunpack.c.h.bf16 %v1088
          %v1125 = vunpack.c.l.bf16 %v1089
          %v1126 = vunpack.c.h.bf16 %v1089
          %v1127 = vunpack.c.l.bf16 %v1090
          %v1128 = vunpack.c.h.bf16 %v1090
          %v1129 = vunpack.c.l.bf16 %v1091
          %v1130 = vunpack.c.h.bf16 %v1091
          %v1131 = vunpack.c.l.bf16 %v1092
          %v1132 = vunpack.c.h.bf16 %v1092
          %v1133 = vunpack.c.l.bf16 %v1093
          %v1134 = vunpack.c.h.bf16 %v1093
          %v1135 = vunpack.c.l.bf16 %v1094
          %v1136 = vunpack.c.h.bf16 %v1094
          %v1137 = vunpack.c.l.bf16 %v1095
          %v1138 = vunpack.c.h.bf16 %v1095
          %v1139 = vunpack.c.l.bf16 %v1096
          %v1140 = vunpack.c.h.bf16 %v1096
          %v1141 = vunpack.c.l.bf16 %v1097
          %v1142 = vunpack.c.h.bf16 %v1097
          %v1143 = vunpack.c.l.bf16 %v1098
          %v1144 = vunpack.c.h.bf16 %v1098
          %v1145 = vunpack.c.l.bf16 %v1099
          %v1146 = vunpack.c.h.bf16 %v1099
          %v1147 = vunpack.c.l.bf16 %v1100
          %v1148 = vunpack.c.h.bf16 %v1100
          %v1149 = vunpack.c.l.bf16 %v1101
          %v1150 = vunpack.c.h.bf16 %v1101
          %v1151 = vunpack.c.l.bf16 %v1102
          %v1152 = vunpack.c.h.bf16 %v1102
          %v1153 = vunpack.c.l.bf16 %v1103
          %v1154 = vunpack.c.h.bf16 %v1103
          %v1155 = vunpack.c.l.bf16 %v1104
          %v1156 = vunpack.c.h.bf16 %v1104
          %v1157 = vunpack.c.l.bf16 %v1105
          %v1158 = vunpack.c.h.bf16 %v1105
          %v1159 = vunpack.c.l.bf16 %v1106
          %v1160 = vunpack.c.h.bf16 %v1106
          %v1161 = vunpack.c.l.bf16 %v1107
          %v1162 = vunpack.c.h.bf16 %v1107
          %v1163 = vunpack.c.l.bf16 %v1108
          %v1164 = vunpack.c.h.bf16 %v1108
          %v1165 = vunpack.c.l.bf16 %v1109
          %v1166 = vunpack.c.h.bf16 %v1109
          %v1167 = vunpack.c.l.bf16 %v1110
          %v1168 = vunpack.c.h.bf16 %v1110
          %v1169 = vunpack.c.l.bf16 %v1111
          %v1170 = vunpack.c.h.bf16 %v1111
          %v1171 = vunpack.c.l.bf16 %v1112
          %v1172 = vunpack.c.h.bf16 %v1112
          %v1173 = vunpack.c.l.bf16 %v1113
          %v1174 = vunpack.c.h.bf16 %v1113
          %v1175 = vunpack.c.l.bf16 %v1114
          %v1176 = vunpack.c.h.bf16 %v1114
          %v1177 = vunpack.c.l.bf16 %v1115
          %v1178 = vunpack.c.h.bf16 %v1115
          %v1179 = vunpack.c.l.bf16 %v1116
          %v1180 = vunpack.c.h.bf16 %v1116
          %v1181 = vadd.f32 %v1021, %v1117
          %v1182 = vadd.f32 %v1022, %v1118
          %v1183 = vadd.f32 %v1023, %v1119
          %v1184 = vadd.f32 %v1024, %v1120
          %v1185 = vadd.f32 %v1025, %v1121
          %v1186 = vadd.f32 %v1026, %v1122
          %v1187 = vadd.f32 %v1027, %v1123
          %v1188 = vadd.f32 %v1028, %v1124
          %v1189 = vadd.f32 %v1029, %v1125
          %v1190 = vadd.f32 %v1030, %v1126
          %v1191 = vadd.f32 %v1031, %v1127
          %v1192 = vadd.f32 %v1032, %v1128
          %v1193 = vadd.f32 %v1033, %v1129
          %v1194 = vadd.f32 %v1034, %v1130
          %v1195 = vadd.f32 %v1035, %v1131
          %v1196 = vadd.f32 %v1036, %v1132
          %v1197 = vadd.f32 %v1037, %v1133
          %v1198 = vadd.f32 %v1038, %v1134
          %v1199 = vadd.f32 %v1039, %v1135
          %v1200 = vadd.f32 %v1040, %v1136
          %v1201 = vadd.f32 %v1041, %v1137
          %v1202 = vadd.f32 %v1042, %v1138
          %v1203 = vadd.f32 %v1043, %v1139
          %v1204 = vadd.f32 %v1044, %v1140
          %v1205 = vadd.f32 %v1045, %v1141
          %v1206 = vadd.f32 %v1046, %v1142
          %v1207 = vadd.f32 %v1047, %v1143
          %v1208 = vadd.f32 %v1048, %v1144
          %v1209 = vadd.f32 %v1049, %v1145
          %v1210 = vadd.f32 %v1050, %v1146
          %v1211 = vadd.f32 %v1051, %v1147
          %v1212 = vadd.f32 %v1052, %v1148
          %v1213 = vadd.f32 %v1053, %v1149
          %v1214 = vadd.f32 %v1054, %v1150
          %v1215 = vadd.f32 %v1055, %v1151
          %v1216 = vadd.f32 %v1056, %v1152
          %v1217 = vadd.f32 %v1057, %v1153
          %v1218 = vadd.f32 %v1058, %v1154
          %v1219 = vadd.f32 %v1059, %v1155
          %v1220 = vadd.f32 %v1060, %v1156
          %v1221 = vadd.f32 %v1061, %v1157
          %v1222 = vadd.f32 %v1062, %v1158
          %v1223 = vadd.f32 %v1063, %v1159
          %v1224 = vadd.f32 %v1064, %v1160
          %v1225 = vadd.f32 %v1065, %v1161
          %v1226 = vadd.f32 %v1066, %v1162
          %v1227 = vadd.f32 %v1067, %v1163
          %v1228 = vadd.f32 %v1068, %v1164
          %v1229 = vadd.f32 %v1069, %v1165
          %v1230 = vadd.f32 %v1070, %v1166
          %v1231 = vadd.f32 %v1071, %v1167
          %v1232 = vadd.f32 %v1072, %v1168
          %v1233 = vadd.f32 %v1073, %v1169
          %v1234 = vadd.f32 %v1074, %v1170
          %v1235 = vadd.f32 %v1075, %v1171
          %v1236 = vadd.f32 %v1076, %v1172
          %v1237 = vadd.f32 %v1077, %v1173
          %v1238 = vadd.f32 %v1078, %v1174
          %v1239 = vadd.f32 %v1079, %v1175
          %v1240 = vadd.f32 %v1080, %v1176
          %v1241 = vadd.f32 %v1081, %v1177
          %v1242 = vadd.f32 %v1082, %v1178
          %v1243 = vadd.f32 %v1083, %v1179
          %v1244 = vadd.f32 %v1084, %v1180
          %v1245 = vpack.c.bf16 %v1183, %v1181
          %v1246 = vpack.c.bf16 %v1184, %v1182
          %v1247 = vpack.c.bf16 %v1187, %v1185
          %v1248 = vpack.c.bf16 %v1188, %v1186
          %v1249 = vpack.c.bf16 %v1191, %v1189
          %v1250 = vpack.c.bf16 %v1192, %v1190
          %v1251 = vpack.c.bf16 %v1195, %v1193
          %v1252 = vpack.c.bf16 %v1196, %v1194
          %v1253 = vpack.c.bf16 %v1199, %v1197
          %v1254 = vpack.c.bf16 %v1200, %v1198
          %v1255 = vpack.c.bf16 %v1203, %v1201
          %v1256 = vpack.c.bf16 %v1204, %v1202
          %v1257 = vpack.c.bf16 %v1207, %v1205
          %v1258 = vpack.c.bf16 %v1208, %v1206
          %v1259 = vpack.c.bf16 %v1211, %v1209
          %v1260 = vpack.c.bf16 %v1212, %v1210
          %v1261 = vpack.c.bf16 %v1215, %v1213
          %v1262 = vpack.c.bf16 %v1216, %v1214
          %v1263 = vpack.c.bf16 %v1219, %v1217
          %v1264 = vpack.c.bf16 %v1220, %v1218
          %v1265 = vpack.c.bf16 %v1223, %v1221
          %v1266 = vpack.c.bf16 %v1224, %v1222
          %v1267 = vpack.c.bf16 %v1227, %v1225
          %v1268 = vpack.c.bf16 %v1228, %v1226
          %v1269 = vpack.c.bf16 %v1231, %v1229
          %v1270 = vpack.c.bf16 %v1232, %v1230
          %v1271 = vpack.c.bf16 %v1235, %v1233
          %v1272 = vpack.c.bf16 %v1236, %v1234
          %v1273 = vpack.c.bf16 %v1239, %v1237
          %v1274 = vpack.c.bf16 %v1240, %v1238
          %v1275 = vpack.c.bf16 %v1243, %v1241
          %v1276 = vpack.c.bf16 %v1244, %v1242
          %v1309 = vunpack.c.l.b16 %v1245
          %v1310 = vunpack.c.l.b16 %v1246
          %v1311 = vunpack.c.h.b16 %v1245
          %v1312 = vunpack.c.h.b16 %v1246
          %v1313 = vunpack.c.l.b16 %v1247
          %v1314 = vunpack.c.l.b16 %v1248
          %v1315 = vunpack.c.h.b16 %v1247
          %v1316 = vunpack.c.h.b16 %v1248
          %v1317 = vunpack.c.l.b16 %v1249
          %v1318 = vunpack.c.l.b16 %v1250
          %v1319 = vunpack.c.h.b16 %v1249
          %v1320 = vunpack.c.h.b16 %v1250
          %v1321 = vunpack.c.l.b16 %v1251
          %v1322 = vunpack.c.l.b16 %v1252
          %v1323 = vunpack.c.h.b16 %v1251
          %v1324 = vunpack.c.h.b16 %v1252
          %v1325 = vunpack.c.l.b16 %v1253
          %v1326 = vunpack.c.l.b16 %v1254
          %v1327 = vunpack.c.h.b16 %v1253
          %v1328 = vunpack.c.h.b16 %v1254
          %v1329 = vunpack.c.l.b16 %v1255
          %v1330 = vunpack.c.l.b16 %v1256
          %v1331 = vunpack.c.h.b16 %v1255
          %v1332 = vunpack.c.h.b16 %v1256
          %v1333 = vunpack.c.l.b16 %v1257
          %v1334 = vunpack.c.l.b16 %v1258
          %v1335 = vunpack.c.h.b16 %v1257
          %v1336 = vunpack.c.h.b16 %v1258
          %v1337 = vunpack.c.l.b16 %v1259
          %v1338 = vunpack.c.l.b16 %v1260
          %v1339 = vunpack.c.h.b16 %v1259
          %v1340 = vunpack.c.h.b16 %v1260
          %v1341 = vunpack.c.l.b16 %v1261
          %v1342 = vunpack.c.l.b16 %v1262
          %v1343 = vunpack.c.h.b16 %v1261
          %v1344 = vunpack.c.h.b16 %v1262
          %v1345 = vunpack.c.l.b16 %v1263
          %v1346 = vunpack.c.l.b16 %v1264
          %v1347 = vunpack.c.h.b16 %v1263
          %v1348 = vunpack.c.h.b16 %v1264
          %v1349 = vunpack.c.l.b16 %v1265
          %v1350 = vunpack.c.l.b16 %v1266
          %v1351 = vunpack.c.h.b16 %v1265
          %v1352 = vunpack.c.h.b16 %v1266
          %v1353 = vunpack.c.l.b16 %v1267
          %v1354 = vunpack.c.l.b16 %v1268
          %v1355 = vunpack.c.h.b16 %v1267
          %v1356 = vunpack.c.h.b16 %v1268
          %v1357 = vunpack.c.l.b16 %v1269
          %v1358 = vunpack.c.l.b16 %v1270
          %v1359 = vunpack.c.h.b16 %v1269
          %v1360 = vunpack.c.h.b16 %v1270
          %v1361 = vunpack.c.l.b16 %v1271
          %v1362 = vunpack.c.l.b16 %v1272
          %v1363 = vunpack.c.h.b16 %v1271
          %v1364 = vunpack.c.h.b16 %v1272
          %v1365 = vunpack.c.l.b16 %v1273
          %v1366 = vunpack.c.l.b16 %v1274
          %v1367 = vunpack.c.h.b16 %v1273
          %v1368 = vunpack.c.h.b16 %v1274
          %v1369 = vunpack.c.l.b16 %v1275
          %v1370 = vunpack.c.l.b16 %v1276
          %v1371 = vunpack.c.h.b16 %v1275
          %v1372 = vunpack.c.h.b16 %v1276
          %v1373 = vpack.c.b16 %v1310, %v1309
          %v1374 = vpack.c.b16 %v1312, %v1311
          %v1375 = vpack.c.b16 %v1314, %v1313
          %v1376 = vpack.c.b16 %v1316, %v1315
          %v1377 = vpack.c.b16 %v1318, %v1317
          %v1378 = vpack.c.b16 %v1320, %v1319
          %v1379 = vpack.c.b16 %v1322, %v1321
          %v1380 = vpack.c.b16 %v1324, %v1323
          %v1381 = vpack.c.b16 %v1326, %v1325
          %v1382 = vpack.c.b16 %v1328, %v1327
          %v1383 = vpack.c.b16 %v1330, %v1329
          %v1384 = vpack.c.b16 %v1332, %v1331
          %v1385 = vpack.c.b16 %v1334, %v1333
          %v1386 = vpack.c.b16 %v1336, %v1335
          %v1387 = vpack.c.b16 %v1338, %v1337
          %v1388 = vpack.c.b16 %v1340, %v1339
          %v1389 = vpack.c.b16 %v1342, %v1341
          %v1390 = vpack.c.b16 %v1344, %v1343
          %v1391 = vpack.c.b16 %v1346, %v1345
          %v1392 = vpack.c.b16 %v1348, %v1347
          %v1393 = vpack.c.b16 %v1350, %v1349
          %v1394 = vpack.c.b16 %v1352, %v1351
          %v1395 = vpack.c.b16 %v1354, %v1353
          %v1396 = vpack.c.b16 %v1356, %v1355
          %v1397 = vpack.c.b16 %v1358, %v1357
          %v1398 = vpack.c.b16 %v1360, %v1359
          %v1399 = vpack.c.b16 %v1362, %v1361
          %v1400 = vpack.c.b16 %v1364, %v1363
          %v1401 = vpack.c.b16 %v1366, %v1365
          %v1402 = vpack.c.b16 %v1368, %v1367
          %v1403 = vpack.c.b16 %v1370, %v1369
          %v1404 = vpack.c.b16 %v1372, %v1371
          %1437 = vst [vmem:[#allocation2] sm:$0xff] %v1373
          %1438 = vst [vmem:[#allocation2 + $0x8] sm:$0xff] %v1374
          %1439 = vst [vmem:[#allocation2 + $0x10] sm:$0xff] %v1375
          %1440 = vst [vmem:[#allocation2 + $0x18] sm:$0xff] %v1376
          %1441 = vst [vmem:[#allocation2 + $0x20] sm:$0xff] %v1377
          %1442 = vst [vmem:[#allocation2 + $0x28] sm:$0xff] %v1378
          %1443 = vst [vmem:[#allocation2 + $0x30] sm:$0xff] %v1379
          %1444 = vst [vmem:[#allocation2 + $0x38] sm:$0xff] %v1380
          %1445 = vst [vmem:[#allocation2 + $0x40] sm:$0xff] %v1381
          %1446 = vst [vmem:[#allocation2 + $0x48] sm:$0xff] %v1382
          %1447 = vst [vmem:[#allocation2 + $0x50] sm:$0xff] %v1383
          %1448 = vst [vmem:[#allocation2 + $0x58] sm:$0xff] %v1384
          %1449 = vst [vmem:[#allocation2 + $0x60] sm:$0xff] %v1385
          %1450 = vst [vmem:[#allocation2 + $0x68] sm:$0xff] %v1386
          %1451 = vst [vmem:[#allocation2 + $0x70] sm:$0xff] %v1387
          %1452 = vst [vmem:[#allocation2 + $0x78] sm:$0xff] %v1388
          %1453 = vst [vmem:[#allocation2 + $0x80] sm:$0xff] %v1389
          %1454 = vst [vmem:[#allocation2 + $0x88] sm:$0xff] %v1390
          %1455 = vst [vmem:[#allocation2 + $0x90] sm:$0xff] %v1391
          %1456 = vst [vmem:[#allocation2 + $0x98] sm:$0xff] %v1392
          %1457 = vst [vmem:[#allocation2 + $0xa0] sm:$0xff] %v1393
          %1458 = vst [vmem:[#allocation2 + $0xa8] sm:$0xff] %v1394
          %1459 = vst [vmem:[#allocation2 + $0xb0] sm:$0xff] %v1395
          %1460 = vst [vmem:[#allocation2 + $0xb8] sm:$0xff] %v1396
          %1461 = vst [vmem:[#allocation2 + $0xc0] sm:$0xff] %v1397
          %1462 = vst [vmem:[#allocation2 + $0xc8] sm:$0xff] %v1398
          %1463 = vst [vmem:[#allocation2 + $0xd0] sm:$0xff] %v1399
          %1464 = vst [vmem:[#allocation2 + $0xd8] sm:$0xff] %v1400
          %1465 = vst [vmem:[#allocation2 + $0xe0] sm:$0xff] %v1401
          %1466 = vst [vmem:[#allocation2 + $0xe8] sm:$0xff] %v1402
          %1467 = vst [vmem:[#allocation2 + $0xf0] sm:$0xff] %v1403
          %1468 = vst [vmem:[#allocation2 + $0xf8] sm:$0xff] %v1404
          %vm1469 = vcmask 7168
          %1470 = vst.msk [vmem:[#allocation3] sm:$0xff] %vm1469, -inf
          %1471 = vst.msk [vmem:[#allocation3 + $0x8] sm:$0xff] %vm1469, -inf
          %1472 = vst.msk [vmem:[#allocation3 + $0x10] sm:$0xff] %vm1469, -inf
          %1473 = vst.msk [vmem:[#allocation3 + $0x18] sm:$0xff] %vm1469, -inf
          %1474 = vst.msk [vmem:[#allocation3 + $0x20] sm:$0xff] %vm1469, -inf
          %1475 = vst.msk [vmem:[#allocation3 + $0x28] sm:$0xff] %vm1469, -inf
          %1476 = vst.msk [vmem:[#allocation3 + $0x30] sm:$0xff] %vm1469, -inf
          %1477 = vst.msk [vmem:[#allocation3 + $0x38] sm:$0xff] %vm1469, -inf
          %1478 = vst.msk [vmem:[#allocation3 + $0x40] sm:$0xff] %vm1469, -inf
          %1479 = vst.msk [vmem:[#allocation3 + $0x48] sm:$0xff] %vm1469, -inf
          %1480 = vst.msk [vmem:[#allocation3 + $0x50] sm:$0xff] %vm1469, -inf
          %1481 = vst.msk [vmem:[#allocation3 + $0x58] sm:$0xff] %vm1469, -inf
          %1482 = vst.msk [vmem:[#allocation3 + $0x60] sm:$0xff] %vm1469, -inf
          %1483 = vst.msk [vmem:[#allocation3 + $0x68] sm:$0xff] %vm1469, -inf
          %1484 = vst.msk [vmem:[#allocation3 + $0x70] sm:$0xff] %vm1469, -inf
          %1485 = vst.msk [vmem:[#allocation3 + $0x78] sm:$0xff] %vm1469, -inf
          %1486 = vst.msk [vmem:[#allocation3 + $0x80] sm:$0xff] %vm1469, -inf
          %1487 = vst.msk [vmem:[#allocation3 + $0x88] sm:$0xff] %vm1469, -inf
          %1488 = vst.msk [vmem:[#allocation3 + $0x90] sm:$0xff] %vm1469, -inf
          %1489 = vst.msk [vmem:[#allocation3 + $0x98] sm:$0xff] %vm1469, -inf
          %1490 = vst.msk [vmem:[#allocation3 + $0xa0] sm:$0xff] %vm1469, -inf
          %1491 = vst.msk [vmem:[#allocation3 + $0xa8] sm:$0xff] %vm1469, -inf
          %1492 = vst.msk [vmem:[#allocation3 + $0xb0] sm:$0xff] %vm1469, -inf
          %1493 = vst.msk [vmem:[#allocation3 + $0xb8] sm:$0xff] %vm1469, -inf
          %1494 = vst.msk [vmem:[#allocation3 + $0xc0] sm:$0xff] %vm1469, -inf
          %1495 = vst.msk [vmem:[#allocation3 + $0xc8] sm:$0xff] %vm1469, -inf
          %1496 = vst.msk [vmem:[#allocation3 + $0xd0] sm:$0xff] %vm1469, -inf
          %1497 = vst.msk [vmem:[#allocation3 + $0xd8] sm:$0xff] %vm1469, -inf
          %1498 = vst.msk [vmem:[#allocation3 + $0xe0] sm:$0xff] %vm1469, -inf
          %1499 = vst.msk [vmem:[#allocation3 + $0xe8] sm:$0xff] %vm1469, -inf
          %1500 = vst.msk [vmem:[#allocation3 + $0xf0] sm:$0xff] %vm1469, -inf
          %1501 = vst.msk [vmem:[#allocation3 + $0xf8] sm:$0xff] %vm1469, -inf
          %1502 = vst.msk [vmem:[#allocation4] sm:$0xff] %vm1469, 0.0
          %1503 = vst.msk [vmem:[#allocation4 + $0x8] sm:$0xff] %vm1469, 0.0
          %1504 = vst.msk [vmem:[#allocation4 + $0x10] sm:$0xff] %vm1469, 0.0
          %1505 = vst.msk [vmem:[#allocation4 + $0x18] sm:$0xff] %vm1469, 0.0
          %1506 = vst.msk [vmem:[#allocation4 + $0x20] sm:$0xff] %vm1469, 0.0
          %1507 = vst.msk [vmem:[#allocation4 + $0x28] sm:$0xff] %vm1469, 0.0
          %1508 = vst.msk [vmem:[#allocation4 + $0x30] sm:$0xff] %vm1469, 0.0
          %1509 = vst.msk [vmem:[#allocation4 + $0x38] sm:$0xff] %vm1469, 0.0
          %1510 = vst.msk [vmem:[#allocation4 + $0x40] sm:$0xff] %vm1469, 0.0
          %1511 = vst.msk [vmem:[#allocation4 + $0x48] sm:$0xff] %vm1469, 0.0
          %1512 = vst.msk [vmem:[#allocation4 + $0x50] sm:$0xff] %vm1469, 0.0
          %1513 = vst.msk [vmem:[#allocation4 + $0x58] sm:$0xff] %vm1469, 0.0
          %1514 = vst.msk [vmem:[#allocation4 + $0x60] sm:$0xff] %vm1469, 0.0
          %1515 = vst.msk [vmem:[#allocation4 + $0x68] sm:$0xff] %vm1469, 0.0
          %1516 = vst.msk [vmem:[#allocation4 + $0x70] sm:$0xff] %vm1469, 0.0
          %1517 = vst.msk [vmem:[#allocation4 + $0x78] sm:$0xff] %vm1469, 0.0
          %1518 = vst.msk [vmem:[#allocation4 + $0x80] sm:$0xff] %vm1469, 0.0
          %1519 = vst.msk [vmem:[#allocation4 + $0x88] sm:$0xff] %vm1469, 0.0
          %1520 = vst.msk [vmem:[#allocation4 + $0x90] sm:$0xff] %vm1469, 0.0
          %1521 = vst.msk [vmem:[#allocation4 + $0x98] sm:$0xff] %vm1469, 0.0
          %1522 = vst.msk [vmem:[#allocation4 + $0xa0] sm:$0xff] %vm1469, 0.0
          %1523 = vst.msk [vmem:[#allocation4 + $0xa8] sm:$0xff] %vm1469, 0.0
          %1524 = vst.msk [vmem:[#allocation4 + $0xb0] sm:$0xff] %vm1469, 0.0
          %1525 = vst.msk [vmem:[#allocation4 + $0xb8] sm:$0xff] %vm1469, 0.0
          %1526 = vst.msk [vmem:[#allocation4 + $0xc0] sm:$0xff] %vm1469, 0.0
          %1527 = vst.msk [vmem:[#allocation4 + $0xc8] sm:$0xff] %vm1469, 0.0
          %1528 = vst.msk [vmem:[#allocation4 + $0xd0] sm:$0xff] %vm1469, 0.0
          %1529 = vst.msk [vmem:[#allocation4 + $0xd8] sm:$0xff] %vm1469, 0.0
          %1530 = vst.msk [vmem:[#allocation4 + $0xe0] sm:$0xff] %vm1469, 0.0
          %1531 = vst.msk [vmem:[#allocation4 + $0xe8] sm:$0xff] %vm1469, 0.0
          %1532 = vst.msk [vmem:[#allocation4 + $0xf0] sm:$0xff] %vm1469, 0.0
          %1533 = vst.msk [vmem:[#allocation4 + $0xf8] sm:$0xff] %vm1469, 0.0
        $region72: #{tpu_custom_call.1} parent=43 // pred_fallthru
          _
        %v1534 = vld [vmem:[#allocation2] sm:$0xff]
        %v1535 = vld [vmem:[#allocation2 + $0x8] sm:$0xff]
        %v1536 = vld [vmem:[#allocation2 + $0x10] sm:$0xff]
        %v1537 = vld [vmem:[#allocation2 + $0x18] sm:$0xff]
        %v1538 = vld [vmem:[#allocation2 + $0x20] sm:$0xff]
        %v1539 = vld [vmem:[#allocation2 + $0x28] sm:$0xff]
        %v1540 = vld [vmem:[#allocation2 + $0x30] sm:$0xff]
        %v1541 = vld [vmem:[#allocation2 + $0x38] sm:$0xff]
        %v1542 = vld [vmem:[#allocation2 + $0x40] sm:$0xff]
        %v1543 = vld [vmem:[#allocation2 + $0x48] sm:$0xff]
        %v1544 = vld [vmem:[#allocation2 + $0x50] sm:$0xff]
        %v1545 = vld [vmem:[#allocation2 + $0x58] sm:$0xff]
        %v1546 = vld [vmem:[#allocation2 + $0x60] sm:$0xff]
        %v1547 = vld [vmem:[#allocation2 + $0x68] sm:$0xff]
        %v1548 = vld [vmem:[#allocation2 + $0x70] sm:$0xff]
        %v1549 = vld [vmem:[#allocation2 + $0x78] sm:$0xff]
        %v1550 = vld [vmem:[#allocation2 + $0x80] sm:$0xff]
        %v1551 = vld [vmem:[#allocation2 + $0x88] sm:$0xff]
        %v1552 = vld [vmem:[#allocation2 + $0x90] sm:$0xff]
        %v1553 = vld [vmem:[#allocation2 + $0x98] sm:$0xff]
        %v1554 = vld [vmem:[#allocation2 + $0xa0] sm:$0xff]
        %v1555 = vld [vmem:[#allocation2 + $0xa8] sm:$0xff]
        %v1556 = vld [vmem:[#allocation2 + $0xb0] sm:$0xff]
        %v1557 = vld [vmem:[#allocation2 + $0xb8] sm:$0xff]
        %v1558 = vld [vmem:[#allocation2 + $0xc0] sm:$0xff]
        %v1559 = vld [vmem:[#allocation2 + $0xc8] sm:$0xff]
        %v1560 = vld [vmem:[#allocation2 + $0xd0] sm:$0xff]
        %v1561 = vld [vmem:[#allocation2 + $0xd8] sm:$0xff]
        %v1562 = vld [vmem:[#allocation2 + $0xe0] sm:$0xff]
        %v1563 = vld [vmem:[#allocation2 + $0xe8] sm:$0xff]
        %v1564 = vld [vmem:[#allocation2 + $0xf0] sm:$0xff]
        %v1565 = vld [vmem:[#allocation2 + $0xf8] sm:$0xff]
        %v1566 = vld [vmem:[%s370] sm:$0xff]
        %v1567 = vld [vmem:[%s370 + $0x8] sm:$0xff]
        %v1568 = vld [vmem:[%s370 + $0x10] sm:$0xff]
        %v1569 = vld [vmem:[%s370 + $0x18] sm:$0xff]
        %v1570 = vld [vmem:[%s370 + $0x20] sm:$0xff]
        %v1571 = vld [vmem:[%s370 + $0x28] sm:$0xff]
        %v1572 = vld [vmem:[%s370 + $0x30] sm:$0xff]
        %v1573 = vld [vmem:[%s370 + $0x38] sm:$0xff]
        %v1574 = vld [vmem:[%s370 + $0x40] sm:$0xff]
        %v1575 = vld [vmem:[%s370 + $0x48] sm:$0xff]
        %v1576 = vld [vmem:[%s370 + $0x50] sm:$0xff]
        %v1577 = vld [vmem:[%s370 + $0x58] sm:$0xff]
        %v1578 = vld [vmem:[%s370 + $0x60] sm:$0xff]
        %v1579 = vld [vmem:[%s370 + $0x68] sm:$0xff]
        %v1580 = vld [vmem:[%s370 + $0x70] sm:$0xff]
        %v1581 = vld [vmem:[%s370 + $0x78] sm:$0xff]
        %v1582 = vld [vmem:[%s370 + $0x80] sm:$0xff]
        %v1583 = vld [vmem:[%s370 + $0x88] sm:$0xff]
        %v1584 = vld [vmem:[%s370 + $0x90] sm:$0xff]
        %v1585 = vld [vmem:[%s370 + $0x98] sm:$0xff]
        %v1586 = vld [vmem:[%s370 + $0xa0] sm:$0xff]
        %v1587 = vld [vmem:[%s370 + $0xa8] sm:$0xff]
        %v1588 = vld [vmem:[%s370 + $0xb0] sm:$0xff]
        %v1589 = vld [vmem:[%s370 + $0xb8] sm:$0xff]
        %v1590 = vld [vmem:[%s370 + $0xc0] sm:$0xff]
        %v1591 = vld [vmem:[%s370 + $0xc8] sm:$0xff]
        %v1592 = vld [vmem:[%s370 + $0xd0] sm:$0xff]
        %v1593 = vld [vmem:[%s370 + $0xd8] sm:$0xff]
        %v1594 = vld [vmem:[%s370 + $0xe0] sm:$0xff]
        %v1595 = vld [vmem:[%s370 + $0xe8] sm:$0xff]
        %v1596 = vld [vmem:[%s370 + $0xf0] sm:$0xff]
        %v1597 = vld [vmem:[%s370 + $0xf8] sm:$0xff]
        %v1598 = vld [vmem:[%s370 + $0x100] sm:$0xff]
        %v1599 = vld [vmem:[%s370 + $0x108] sm:$0xff]
        %v1600 = vld [vmem:[%s370 + $0x110] sm:$0xff]
        %v1601 = vld [vmem:[%s370 + $0x118] sm:$0xff]
        %v1602 = vld [vmem:[%s370 + $0x120] sm:$0xff]
        %v1603 = vld [vmem:[%s370 + $0x128] sm:$0xff]
        %v1604 = vld [vmem:[%s370 + $0x130] sm:$0xff]
        %v1605 = vld [vmem:[%s370 + $0x138] sm:$0xff]
        %v1606 = vld [vmem:[%s370 + $0x140] sm:$0xff]
        %v1607 = vld [vmem:[%s370 + $0x148] sm:$0xff]
        %v1608 = vld [vmem:[%s370 + $0x150] sm:$0xff]
        %v1609 = vld [vmem:[%s370 + $0x158] sm:$0xff]
        %v1610 = vld [vmem:[%s370 + $0x160] sm:$0xff]
        %v1611 = vld [vmem:[%s370 + $0x168] sm:$0xff]
        %v1612 = vld [vmem:[%s370 + $0x170] sm:$0xff]
        %v1613 = vld [vmem:[%s370 + $0x178] sm:$0xff]
        %v1614 = vld [vmem:[%s370 + $0x180] sm:$0xff]
        %v1615 = vld [vmem:[%s370 + $0x188] sm:$0xff]
        %v1616 = vld [vmem:[%s370 + $0x190] sm:$0xff]
        %v1617 = vld [vmem:[%s370 + $0x198] sm:$0xff]
        %v1618 = vld [vmem:[%s370 + $0x1a0] sm:$0xff]
        %v1619 = vld [vmem:[%s370 + $0x1a8] sm:$0xff]
        %v1620 = vld [vmem:[%s370 + $0x1b0] sm:$0xff]
        %v1621 = vld [vmem:[%s370 + $0x1b8] sm:$0xff]
        %v1622 = vld [vmem:[%s370 + $0x1c0] sm:$0xff]
        %v1623 = vld [vmem:[%s370 + $0x1c8] sm:$0xff]
        %v1624 = vld [vmem:[%s370 + $0x1d0] sm:$0xff]
        %v1625 = vld [vmem:[%s370 + $0x1d8] sm:$0xff]
        %v1626 = vld [vmem:[%s370 + $0x1e0] sm:$0xff]
        %v1627 = vld [vmem:[%s370 + $0x1e8] sm:$0xff]
        %v1628 = vld [vmem:[%s370 + $0x1f0] sm:$0xff]
        %v1629 = vld [vmem:[%s370 + $0x1f8] sm:$0xff]
        %v1630 = vld [vmem:[%s379] sm:$0xf]
        %v1632 = vlaneseq
        %v1633 = vshrl.u32 %v1632, 7
        %v1634 = vsub.s32 0, %v1633
        %v1635 = vrot.slane %v1630, %v1634
        %v1636 = vlaneseq
        %v1637 = vshrl.u32 %v1636, 7
        %v1638 = vsub.s32 1, %v1637
        %v1639 = vrot.slane %v1630, %v1638
        %v1640 = vlaneseq
        %v1641 = vshrl.u32 %v1640, 7
        %v1642 = vsub.s32 2, %v1641
        %v1643 = vrot.slane %v1630, %v1642
        %v1644 = vlaneseq
        %v1645 = vshrl.u32 %v1644, 7
        %v1646 = vsub.s32 3, %v1645
        %v1647 = vrot.slane %v1630, %v1646
        %v1684 = vunpack.c.l.b16 %v1534
        %v1685 = vunpack.c.h.b16 %v1534
        %v1686 = vunpack.c.l.b16 %v1535
        %v1687 = vunpack.c.h.b16 %v1535
        %v1688 = vunpack.c.l.b16 %v1536
        %v1689 = vunpack.c.h.b16 %v1536
        %v1690 = vunpack.c.l.b16 %v1537
        %v1691 = vunpack.c.h.b16 %v1537
        %v1692 = vunpack.c.l.b16 %v1538
        %v1693 = vunpack.c.h.b16 %v1538
        %v1694 = vunpack.c.l.b16 %v1539
        %v1695 = vunpack.c.h.b16 %v1539
        %v1696 = vunpack.c.l.b16 %v1540
        %v1697 = vunpack.c.h.b16 %v1540
        %v1698 = vunpack.c.l.b16 %v1541
        %v1699 = vunpack.c.h.b16 %v1541
        %v1700 = vunpack.c.l.b16 %v1542
        %v1701 = vunpack.c.h.b16 %v1542
        %v1702 = vunpack.c.l.b16 %v1543
        %v1703 = vunpack.c.h.b16 %v1543
        %v1704 = vunpack.c.l.b16 %v1544
        %v1705 = vunpack.c.h.b16 %v1544
        %v1706 = vunpack.c.l.b16 %v1545
        %v1707 = vunpack.c.h.b16 %v1545
        %v1708 = vunpack.c.l.b16 %v1546
        %v1709 = vunpack.c.h.b16 %v1546
        %v1710 = vunpack.c.l.b16 %v1547
        %v1711 = vunpack.c.h.b16 %v1547
        %v1712 = vunpack.c.l.b16 %v1548
        %v1713 = vunpack.c.h.b16 %v1548
        %v1714 = vunpack.c.l.b16 %v1549
        %v1715 = vunpack.c.h.b16 %v1549
        %v1716 = vunpack.c.l.b16 %v1550
        %v1717 = vunpack.c.h.b16 %v1550
        %v1718 = vunpack.c.l.b16 %v1551
        %v1719 = vunpack.c.h.b16 %v1551
        %v1720 = vunpack.c.l.b16 %v1552
        %v1721 = vunpack.c.h.b16 %v1552
        %v1722 = vunpack.c.l.b16 %v1553
        %v1723 = vunpack.c.h.b16 %v1553
        %v1724 = vunpack.c.l.b16 %v1554
        %v1725 = vunpack.c.h.b16 %v1554
        %v1726 = vunpack.c.l.b16 %v1555
        %v1727 = vunpack.c.h.b16 %v1555
        %v1728 = vunpack.c.l.b16 %v1556
        %v1729 = vunpack.c.h.b16 %v1556
        %v1730 = vunpack.c.l.b16 %v1557
        %v1731 = vunpack.c.h.b16 %v1557
        %v1732 = vunpack.c.l.b16 %v1558
        %v1733 = vunpack.c.h.b16 %v1558
        %v1734 = vunpack.c.l.b16 %v1559
        %v1735 = vunpack.c.h.b16 %v1559
        %v1736 = vunpack.c.l.b16 %v1560
        %v1737 = vunpack.c.h.b16 %v1560
        %v1738 = vunpack.c.l.b16 %v1561
        %v1739 = vunpack.c.h.b16 %v1561
        %v1740 = vunpack.c.l.b16 %v1562
        %v1741 = vunpack.c.h.b16 %v1562
        %v1742 = vunpack.c.l.b16 %v1563
        %v1743 = vunpack.c.h.b16 %v1563
        %v1744 = vunpack.c.l.b16 %v1564
        %v1745 = vunpack.c.h.b16 %v1564
        %v1746 = vunpack.c.l.b16 %v1565
        %v1747 = vunpack.c.h.b16 %v1565
        %v1748 = vpack.c.b16 %v1686, %v1684
        %v1749 = vpack.c.b16 %v1687, %v1685
        %v1750 = vpack.c.b16 %v1690, %v1688
        %v1751 = vpack.c.b16 %v1691, %v1689
        %v1752 = vpack.c.b16 %v1694, %v1692
        %v1753 = vpack.c.b16 %v1695, %v1693
        %v1754 = vpack.c.b16 %v1698, %v1696
        %v1755 = vpack.c.b16 %v1699, %v1697
        %v1756 = vpack.c.b16 %v1702, %v1700
        %v1757 = vpack.c.b16 %v1703, %v1701
        %v1758 = vpack.c.b16 %v1706, %v1704
        %v1759 = vpack.c.b16 %v1707, %v1705
        %v1760 = vpack.c.b16 %v1710, %v1708
        %v1761 = vpack.c.b16 %v1711, %v1709
        %v1762 = vpack.c.b16 %v1714, %v1712
        %v1763 = vpack.c.b16 %v1715, %v1713
        %v1764 = vpack.c.b16 %v1718, %v1716
        %v1765 = vpack.c.b16 %v1719, %v1717
        %v1766 = vpack.c.b16 %v1722, %v1720
        %v1767 = vpack.c.b16 %v1723, %v1721
        %v1768 = vpack.c.b16 %v1726, %v1724
        %v1769 = vpack.c.b16 %v1727, %v1725
        %v1770 = vpack.c.b16 %v1730, %v1728
        %v1771 = vpack.c.b16 %v1731, %v1729
        %v1772 = vpack.c.b16 %v1734, %v1732
        %v1773 = vpack.c.b16 %v1735, %v1733
        %v1774 = vpack.c.b16 %v1738, %v1736
        %v1775 = vpack.c.b16 %v1739, %v1737
        %v1776 = vpack.c.b16 %v1742, %v1740
        %v1777 = vpack.c.b16 %v1743, %v1741
        %v1778 = vpack.c.b16 %v1746, %v1744
        %v1779 = vpack.c.b16 %v1747, %v1745
        %v1876 = vunpack.c.l.b16 %v1566
        %v1877 = vunpack.c.h.b16 %v1566
        %v1878 = vunpack.c.l.b16 %v1567
        %v1879 = vunpack.c.h.b16 %v1567
        %v1880 = vunpack.c.l.b16 %v1568
        %v1881 = vunpack.c.h.b16 %v1568
        %v1882 = vunpack.c.l.b16 %v1569
        %v1883 = vunpack.c.h.b16 %v1569
        %v1884 = vunpack.c.l.b16 %v1570
        %v1885 = vunpack.c.h.b16 %v1570
        %v1886 = vunpack.c.l.b16 %v1571
        %v1887 = vunpack.c.h.b16 %v1571
        %v1888 = vunpack.c.l.b16 %v1572
        %v1889 = vunpack.c.h.b16 %v1572
        %v1890 = vunpack.c.l.b16 %v1573
        %v1891 = vunpack.c.h.b16 %v1573
        %v1892 = vunpack.c.l.b16 %v1574
        %v1893 = vunpack.c.h.b16 %v1574
        %v1894 = vunpack.c.l.b16 %v1575
        %v1895 = vunpack.c.h.b16 %v1575
        %v1896 = vunpack.c.l.b16 %v1576
        %v1897 = vunpack.c.h.b16 %v1576
        %v1898 = vunpack.c.l.b16 %v1577
        %v1899 = vunpack.c.h.b16 %v1577
        %v1900 = vunpack.c.l.b16 %v1578
        %v1901 = vunpack.c.h.b16 %v1578
        %v1902 = vunpack.c.l.b16 %v1579
        %v1903 = vunpack.c.h.b16 %v1579
        %v1904 = vunpack.c.l.b16 %v1580
        %v1905 = vunpack.c.h.b16 %v1580
        %v1906 = vunpack.c.l.b16 %v1581
        %v1907 = vunpack.c.h.b16 %v1581
        %v1908 = vunpack.c.l.b16 %v1582
        %v1909 = vunpack.c.h.b16 %v1582
        %v1910 = vunpack.c.l.b16 %v1583
        %v1911 = vunpack.c.h.b16 %v1583
        %v1912 = vunpack.c.l.b16 %v1584
        %v1913 = vunpack.c.h.b16 %v1584
        %v1914 = vunpack.c.l.b16 %v1585
        %v1915 = vunpack.c.h.b16 %v1585
        %v1916 = vunpack.c.l.b16 %v1586
        %v1917 = vunpack.c.h.b16 %v1586
        %v1918 = vunpack.c.l.b16 %v1587
        %v1919 = vunpack.c.h.b16 %v1587
        %v1920 = vunpack.c.l.b16 %v1588
        %v1921 = vunpack.c.h.b16 %v1588
        %v1922 = vunpack.c.l.b16 %v1589
        %v1923 = vunpack.c.h.b16 %v1589
        %v1924 = vunpack.c.l.b16 %v1590
        %v1925 = vunpack.c.h.b16 %v1590
        %v1926 = vunpack.c.l.b16 %v1591
        %v1927 = vunpack.c.h.b16 %v1591
        %v1928 = vunpack.c.l.b16 %v1592
        %v1929 = vunpack.c.h.b16 %v1592
        %v1930 = vunpack.c.l.b16 %v1593
        %v1931 = vunpack.c.h.b16 %v1593
        %v1932 = vunpack.c.l.b16 %v1594
        %v1933 = vunpack.c.h.b16 %v1594
        %v1934 = vunpack.c.l.b16 %v1595
        %v1935 = vunpack.c.h.b16 %v1595
        %v1936 = vunpack.c.l.b16 %v1596
        %v1937 = vunpack.c.h.b16 %v1596
        %v1938 = vunpack.c.l.b16 %v1597
        %v1939 = vunpack.c.h.b16 %v1597
        %v1940 = vunpack.c.l.b16 %v1598
        %v1941 = vunpack.c.h.b16 %v1598
        %v1942 = vunpack.c.l.b16 %v1599
        %v1943 = vunpack.c.h.b16 %v1599
        %v1944 = vunpack.c.l.b16 %v1600
        %v1945 = vunpack.c.h.b16 %v1600
        %v1946 = vunpack.c.l.b16 %v1601
        %v1947 = vunpack.c.h.b16 %v1601
        %v1948 = vunpack.c.l.b16 %v1602
        %v1949 = vunpack.c.h.b16 %v1602
        %v1950 = vunpack.c.l.b16 %v1603
        %v1951 = vunpack.c.h.b16 %v1603
        %v1952 = vunpack.c.l.b16 %v1604
        %v1953 = vunpack.c.h.b16 %v1604
        %v1954 = vunpack.c.l.b16 %v1605
        %v1955 = vunpack.c.h.b16 %v1605
        %v1956 = vunpack.c.l.b16 %v1606
        %v1957 = vunpack.c.h.b16 %v1606
        %v1958 = vunpack.c.l.b16 %v1607
        %v1959 = vunpack.c.h.b16 %v1607
        %v1960 = vunpack.c.l.b16 %v1608
        %v1961 = vunpack.c.h.b16 %v1608
        %v1962 = vunpack.c.l.b16 %v1609
        %v1963 = vunpack.c.h.b16 %v1609
        %v1964 = vunpack.c.l.b16 %v1610
        %v1965 = vunpack.c.h.b16 %v1610
        %v1966 = vunpack.c.l.b16 %v1611
        %v1967 = vunpack.c.h.b16 %v1611
        %v1968 = vunpack.c.l.b16 %v1612
        %v1969 = vunpack.c.h.b16 %v1612
        %v1970 = vunpack.c.l.b16 %v1613
        %v1971 = vunpack.c.h.b16 %v1613
        %v1972 = vunpack.c.l.b16 %v1614
        %v1973 = vunpack.c.h.b16 %v1614
        %v1974 = vunpack.c.l.b16 %v1615
        %v1975 = vunpack.c.h.b16 %v1615
        %v1976 = vunpack.c.l.b16 %v1616
        %v1977 = vunpack.c.h.b16 %v1616
        %v1978 = vunpack.c.l.b16 %v1617
        %v1979 = vunpack.c.h.b16 %v1617
        %v1980 = vunpack.c.l.b16 %v1618
        %v1981 = vunpack.c.h.b16 %v1618
        %v1982 = vunpack.c.l.b16 %v1619
        %v1983 = vunpack.c.h.b16 %v1619
        %v1984 = vunpack.c.l.b16 %v1620
        %v1985 = vunpack.c.h.b16 %v1620
        %v1986 = vunpack.c.l.b16 %v1621
        %v1987 = vunpack.c.h.b16 %v1621
        %v1988 = vunpack.c.l.b16 %v1622
        %v1989 = vunpack.c.h.b16 %v1622
        %v1990 = vunpack.c.l.b16 %v1623
        %v1991 = vunpack.c.h.b16 %v1623
        %v1992 = vunpack.c.l.b16 %v1624
        %v1993 = vunpack.c.h.b16 %v1624
        %v1994 = vunpack.c.l.b16 %v1625
        %v1995 = vunpack.c.h.b16 %v1625
        %v1996 = vunpack.c.l.b16 %v1626
        %v1997 = vunpack.c.h.b16 %v1626
        %v1998 = vunpack.c.l.b16 %v1627
        %v1999 = vunpack.c.h.b16 %v1627
        %v2000 = vunpack.c.l.b16 %v1628
        %v2001 = vunpack.c.h.b16 %v1628
        %v2002 = vunpack.c.l.b16 %v1629
        %v2003 = vunpack.c.h.b16 %v1629
        %v2004 = vpack.c.b16 %v1880, %v1876
        %v2005 = vpack.c.b16 %v1881, %v1877
        %v2006 = vpack.c.b16 %v1882, %v1878
        %v2007 = vpack.c.b16 %v1883, %v1879
        %v2008 = vpack.c.b16 %v1888, %v1884
        %v2009 = vpack.c.b16 %v1889, %v1885
        %v2010 = vpack.c.b16 %v1890, %v1886
        %v2011 = vpack.c.b16 %v1891, %v1887
        %v2012 = vpack.c.b16 %v1896, %v1892
        %v2013 = vpack.c.b16 %v1897, %v1893
        %v2014 = vpack.c.b16 %v1898, %v1894
        %v2015 = vpack.c.b16 %v1899, %v1895
        %v2016 = vpack.c.b16 %v1904, %v1900
        %v2017 = vpack.c.b16 %v1905, %v1901
        %v2018 = vpack.c.b16 %v1906, %v1902
        %v2019 = vpack.c.b16 %v1907, %v1903
        %v2020 = vpack.c.b16 %v1912, %v1908
        %v2021 = vpack.c.b16 %v1913, %v1909
        %v2022 = vpack.c.b16 %v1914, %v1910
        %v2023 = vpack.c.b16 %v1915, %v1911
        %v2024 = vpack.c.b16 %v1920, %v1916
        %v2025 = vpack.c.b16 %v1921, %v1917
        %v2026 = vpack.c.b16 %v1922, %v1918
        %v2027 = vpack.c.b16 %v1923, %v1919
        %v2028 = vpack.c.b16 %v1928, %v1924
        %v2029 = vpack.c.b16 %v1929, %v1925
        %v2030 = vpack.c.b16 %v1930, %v1926
        %v2031 = vpack.c.b16 %v1931, %v1927
        %v2032 = vpack.c.b16 %v1936, %v1932
        %v2033 = vpack.c.b16 %v1937, %v1933
        %v2034 = vpack.c.b16 %v1938, %v1934
        %v2035 = vpack.c.b16 %v1939, %v1935
        %v2036 = vpack.c.b16 %v1944, %v1940
        %v2037 = vpack.c.b16 %v1945, %v1941
        %v2038 = vpack.c.b16 %v1946, %v1942
        %v2039 = vpack.c.b16 %v1947, %v1943
        %v2040 = vpack.c.b16 %v1952, %v1948
        %v2041 = vpack.c.b16 %v1953, %v1949
        %v2042 = vpack.c.b16 %v1954, %v1950
        %v2043 = vpack.c.b16 %v1955, %v1951
        %v2044 = vpack.c.b16 %v1960, %v1956
        %v2045 = vpack.c.b16 %v1961, %v1957
        %v2046 = vpack.c.b16 %v1962, %v1958
        %v2047 = vpack.c.b16 %v1963, %v1959
        %v2048 = vpack.c.b16 %v1968, %v1964
        %v2049 = vpack.c.b16 %v1969, %v1965
        %v2050 = vpack.c.b16 %v1970, %v1966
        %v2051 = vpack.c.b16 %v1971, %v1967
        %v2052 = vpack.c.b16 %v1976, %v1972
        %v2053 = vpack.c.b16 %v1977, %v1973
        %v2054 = vpack.c.b16 %v1978, %v1974
        %v2055 = vpack.c.b16 %v1979, %v1975
        %v2056 = vpack.c.b16 %v1984, %v1980
        %v2057 = vpack.c.b16 %v1985, %v1981
        %v2058 = vpack.c.b16 %v1986, %v1982
        %v2059 = vpack.c.b16 %v1987, %v1983
        %v2060 = vpack.c.b16 %v1992, %v1988
        %v2061 = vpack.c.b16 %v1993, %v1989
        %v2062 = vpack.c.b16 %v1994, %v1990
        %v2063 = vpack.c.b16 %v1995, %v1991
        %v2064 = vpack.c.b16 %v2000, %v1996
        %v2065 = vpack.c.b16 %v2001, %v1997
        %v2066 = vpack.c.b16 %v2002, %v1998
        %v2067 = vpack.c.b16 %v2003, %v1999
        %2132 = vmatprep.subr.bf16.mxu0 %v2033
        %2133 = vmatpush1.bf16.msra.mxu0 %v2032
        %2134 = vmatprep.subr.bf16.mxu0 %v2029
        %2135 = vmatpush1.bf16.msra.mxu0 %v2028
        %2136 = vmatprep.subr.bf16.mxu0 %v2025
        %2137 = vmatpush1.bf16.msra.mxu0 %v2024
        %2138 = vmatprep.subr.bf16.mxu0 %v2021
        %2139 = vmatpush1.bf16.msra.mxu0 %v2020
        %2140 = vmatprep.subr.bf16.mxu0 %v2017
        %2141 = vmatpush1.bf16.msra.mxu0 %v2016
        %2142 = vmatprep.subr.bf16.mxu0 %v2013
        %2143 = vmatpush1.bf16.msra.mxu0 %v2012
        %2144 = vmatprep.subr.bf16.mxu0 %v2009
        %2145 = vmatpush1.bf16.msra.mxu0 %v2008
        %2146 = vmatprep.subr.bf16.mxu0 %v2005
        %2147 = vmatpush1.bf16.msra.mxu0 %v2004
        %2148 = vmatprep.subr.bf16.mxu0 %v2065
        %2149 = vmatpush2.bf16.msra.mxu0 %v2064
        %2150 = vmatprep.subr.bf16.mxu0 %v2061
        %2151 = vmatpush2.bf16.msra.mxu0 %v2060
        %2152 = vmatprep.subr.bf16.mxu0 %v2057
        %2153 = vmatpush2.bf16.msra.mxu0 %v2056
        %2154 = vmatprep.subr.bf16.mxu0 %v2053
        %2155 = vmatpush2.bf16.msra.mxu0 %v2052
        %2156 = vmatprep.subr.bf16.mxu0 %v2049
        %2157 = vmatpush2.bf16.msra.mxu0 %v2048
        %2158 = vmatprep.subr.bf16.mxu0 %v2045
        %2159 = vmatpush2.bf16.msra.mxu0 %v2044
        %2160 = vmatprep.subr.bf16.mxu0 %v2041
        %2161 = vmatpush2.bf16.msra.mxu0 %v2040
        %2162 = vmatprep.subr.bf16.mxu0 %v2037
        %2163 = vmatpush2.bf16.msra.mxu0 %v2036
        %2164 = vmatprep.mubr.bf16.mxu0 %v1749
        %2165 = vmatmul.mubr.bf16.gmra.mxu0 %v1748
        %v2166 = vpop.f32.mrf.mxu0
        %v2167 = vadd.f32 %v1635, %v2166
        %v2168 = vpop.f32.mrf.mxu0
        %v2169 = vadd.f32 %v1639, %v2168
        %v2170 = vpop.f32.mrf.mxu0
        %v2171 = vadd.f32 %v1635, %v2170
        %v2172 = vpop.f32.mrf.mxu0
        %v2173 = vadd.f32 %v1639, %v2172
        %2174 = vmatprep.mubr.bf16.mxu0 %v1751
        %2175 = vmatmul.mubr.bf16.gmra.mxu0 %v1750
        %v2176 = vpop.f32.mrf.mxu0
        %v2177 = vadd.f32 %v1635, %v2176
        %v2178 = vpop.f32.mrf.mxu0
        %v2179 = vadd.f32 %v1639, %v2178
        %v2180 = vpop.f32.mrf.mxu0
        %v2181 = vadd.f32 %v1635, %v2180
        %v2182 = vpop.f32.mrf.mxu0
        %v2183 = vadd.f32 %v1639, %v2182
        %2184 = vmatprep.mubr.bf16.mxu0 %v1753
        %2185 = vmatmul.mubr.bf16.gmra.mxu0 %v1752
        %v2186 = vpop.f32.mrf.mxu0
        %v2187 = vadd.f32 %v1635, %v2186
        %v2188 = vpop.f32.mrf.mxu0
        %v2189 = vadd.f32 %v1639, %v2188
        %v2190 = vpop.f32.mrf.mxu0
        %v2191 = vadd.f32 %v1635, %v2190
        %v2192 = vpop.f32.mrf.mxu0
        %v2193 = vadd.f32 %v1639, %v2192
        %2194 = vmatprep.mubr.bf16.mxu0 %v1755
        %2195 = vmatmul.mubr.bf16.gmra.mxu0 %v1754
        %v2196 = vpop.f32.mrf.mxu0
        %v2197 = vadd.f32 %v1635, %v2196
        %v2198 = vpop.f32.mrf.mxu0
        %v2199 = vadd.f32 %v1639, %v2198
        %v2200 = vpop.f32.mrf.mxu0
        %v2201 = vadd.f32 %v1635, %v2200
        %v2202 = vpop.f32.mrf.mxu0
        %v2203 = vadd.f32 %v1639, %v2202
        %2204 = vmatprep.mubr.bf16.mxu0 %v1757
        %2205 = vmatmul.mubr.bf16.gmra.mxu0 %v1756
        %v2206 = vpop.f32.mrf.mxu0
        %v2207 = vadd.f32 %v1635, %v2206
        %v2208 = vpop.f32.mrf.mxu0
        %v2209 = vadd.f32 %v1639, %v2208
        %v2210 = vpop.f32.mrf.mxu0
        %v2211 = vadd.f32 %v1635, %v2210
        %v2212 = vpop.f32.mrf.mxu0
        %v2213 = vadd.f32 %v1639, %v2212
        %2214 = vmatprep.mubr.bf16.mxu0 %v1759
        %2215 = vmatmul.mubr.bf16.gmra.mxu0 %v1758
        %v2216 = vpop.f32.mrf.mxu0
        %v2217 = vadd.f32 %v1635, %v2216
        %v2218 = vpop.f32.mrf.mxu0
        %v2219 = vadd.f32 %v1639, %v2218
        %v2220 = vpop.f32.mrf.mxu0
        %v2221 = vadd.f32 %v1635, %v2220
        %v2222 = vpop.f32.mrf.mxu0
        %v2223 = vadd.f32 %v1639, %v2222
        %2224 = vmatprep.mubr.bf16.mxu0 %v1761
        %2225 = vmatmul.mubr.bf16.gmra.mxu0 %v1760
        %v2226 = vpop.f32.mrf.mxu0
        %v2227 = vadd.f32 %v1635, %v2226
        %v2228 = vpop.f32.mrf.mxu0
        %v2229 = vadd.f32 %v1639, %v2228
        %v2230 = vpop.f32.mrf.mxu0
        %v2231 = vadd.f32 %v1635, %v2230
        %v2232 = vpop.f32.mrf.mxu0
        %v2233 = vadd.f32 %v1639, %v2232
        %2234 = vmatprep.mubr.bf16.mxu0 %v1763
        %2235 = vmatmul.mubr.bf16.gmra.mxu0 %v1762
        %v2236 = vpop.f32.mrf.mxu0
        %v2237 = vadd.f32 %v1635, %v2236
        %v2238 = vpop.f32.mrf.mxu0
        %v2239 = vadd.f32 %v1639, %v2238
        %v2240 = vpop.f32.mrf.mxu0
        %v2241 = vadd.f32 %v1635, %v2240
        %v2242 = vpop.f32.mrf.mxu0
        %v2243 = vadd.f32 %v1639, %v2242
        %2244 = vmatprep.mubr.bf16.mxu0 %v1765
        %2245 = vmatmul.mubr.bf16.gmra.mxu0 %v1764
        %v2246 = vpop.f32.mrf.mxu0
        %v2247 = vadd.f32 %v1635, %v2246
        %v2248 = vpop.f32.mrf.mxu0
        %v2249 = vadd.f32 %v1639, %v2248
        %v2250 = vpop.f32.mrf.mxu0
        %v2251 = vadd.f32 %v1635, %v2250
        %v2252 = vpop.f32.mrf.mxu0
        %v2253 = vadd.f32 %v1639, %v2252
        %2254 = vmatprep.mubr.bf16.mxu0 %v1767
        %2255 = vmatmul.mubr.bf16.gmra.mxu0 %v1766
        %v2256 = vpop.f32.mrf.mxu0
        %v2257 = vadd.f32 %v1635, %v2256
        %v2258 = vpop.f32.mrf.mxu0
        %v2259 = vadd.f32 %v1639, %v2258
        %v2260 = vpop.f32.mrf.mxu0
        %v2261 = vadd.f32 %v1635, %v2260
        %v2262 = vpop.f32.mrf.mxu0
        %v2263 = vadd.f32 %v1639, %v2262
        %2264 = vmatprep.mubr.bf16.mxu0 %v1769
        %2265 = vmatmul.mubr.bf16.gmra.mxu0 %v1768
        %v2266 = vpop.f32.mrf.mxu0
        %v2267 = vadd.f32 %v1635, %v2266
        %v2268 = vpop.f32.mrf.mxu0
        %v2269 = vadd.f32 %v1639, %v2268
        %v2270 = vpop.f32.mrf.mxu0
        %v2271 = vadd.f32 %v1635, %v2270
        %v2272 = vpop.f32.mrf.mxu0
        %v2273 = vadd.f32 %v1639, %v2272
        %2274 = vmatprep.mubr.bf16.mxu0 %v1771
        %2275 = vmatmul.mubr.bf16.gmra.mxu0 %v1770
        %v2276 = vpop.f32.mrf.mxu0
        %v2277 = vadd.f32 %v1635, %v2276
        %v2278 = vpop.f32.mrf.mxu0
        %v2279 = vadd.f32 %v1639, %v2278
        %v2280 = vpop.f32.mrf.mxu0
        %v2281 = vadd.f32 %v1635, %v2280
        %v2282 = vpop.f32.mrf.mxu0
        %v2283 = vadd.f32 %v1639, %v2282
        %2284 = vmatprep.mubr.bf16.mxu0 %v1773
        %2285 = vmatmul.mubr.bf16.gmra.mxu0 %v1772
        %v2286 = vpop.f32.mrf.mxu0
        %v2287 = vadd.f32 %v1635, %v2286
        %v2288 = vpop.f32.mrf.mxu0
        %v2289 = vadd.f32 %v1639, %v2288
        %v2290 = vpop.f32.mrf.mxu0
        %v2291 = vadd.f32 %v1635, %v2290
        %v2292 = vpop.f32.mrf.mxu0
        %v2293 = vadd.f32 %v1639, %v2292
        %2294 = vmatprep.mubr.bf16.mxu0 %v1775
        %2295 = vmatmul.mubr.bf16.gmra.mxu0 %v1774
        %v2296 = vpop.f32.mrf.mxu0
        %v2297 = vadd.f32 %v1635, %v2296
        %v2298 = vpop.f32.mrf.mxu0
        %v2299 = vadd.f32 %v1639, %v2298
        %v2300 = vpop.f32.mrf.mxu0
        %v2301 = vadd.f32 %v1635, %v2300
        %v2302 = vpop.f32.mrf.mxu0
        %v2303 = vadd.f32 %v1639, %v2302
        %2304 = vmatprep.mubr.bf16.mxu0 %v1777
        %2305 = vmatmul.mubr.bf16.gmra.mxu0 %v1776
        %v2306 = vpop.f32.mrf.mxu0
        %v2307 = vadd.f32 %v1635, %v2306
        %v2308 = vpop.f32.mrf.mxu0
        %v2309 = vadd.f32 %v1639, %v2308
        %v2310 = vpop.f32.mrf.mxu0
        %v2311 = vadd.f32 %v1635, %v2310
        %v2312 = vpop.f32.mrf.mxu0
        %v2313 = vadd.f32 %v1639, %v2312
        %2314 = vmatprep.mubr.bf16.mxu0 %v1779
        %2315 = vmatmul.mubr.bf16.gmra.mxu0 %v1778
        %v2316 = vpop.f32.mrf.mxu0
        %v2317 = vadd.f32 %v1635, %v2316
        %v2318 = vpop.f32.mrf.mxu0
        %v2319 = vadd.f32 %v1639, %v2318
        %v2320 = vpop.f32.mrf.mxu0
        %v2321 = vadd.f32 %v1635, %v2320
        %v2322 = vpop.f32.mrf.mxu0
        %v2323 = vadd.f32 %v1639, %v2322
        %2324 = vdwg.mxu0
        %2325 = vmatprep.subr.bf16.mxu0 %v2035
        %2326 = vmatpush1.bf16.msra.mxu0 %v2034
        %2327 = vmatprep.subr.bf16.mxu0 %v2031
        %2328 = vmatpush1.bf16.msra.mxu0 %v2030
        %2329 = vmatprep.subr.bf16.mxu0 %v2027
        %2330 = vmatpush1.bf16.msra.mxu0 %v2026
        %2331 = vmatprep.subr.bf16.mxu0 %v2023
        %2332 = vmatpush1.bf16.msra.mxu0 %v2022
        %2333 = vmatprep.subr.bf16.mxu0 %v2019
        %2334 = vmatpush1.bf16.msra.mxu0 %v2018
        %2335 = vmatprep.subr.bf16.mxu0 %v2015
        %2336 = vmatpush1.bf16.msra.mxu0 %v2014
        %2337 = vmatprep.subr.bf16.mxu0 %v2011
        %2338 = vmatpush1.bf16.msra.mxu0 %v2010
        %2339 = vmatprep.subr.bf16.mxu0 %v2007
        %2340 = vmatpush1.bf16.msra.mxu0 %v2006
        %2341 = vmatprep.subr.bf16.mxu0 %v2067
        %2342 = vmatpush2.bf16.msra.mxu0 %v2066
        %2343 = vmatprep.subr.bf16.mxu0 %v2063
        %2344 = vmatpush2.bf16.msra.mxu0 %v2062
        %2345 = vmatprep.subr.bf16.mxu0 %v2059
        %2346 = vmatpush2.bf16.msra.mxu0 %v2058
        %2347 = vmatprep.subr.bf16.mxu0 %v2055
        %2348 = vmatpush2.bf16.msra.mxu0 %v2054
        %2349 = vmatprep.subr.bf16.mxu0 %v2051
        %2350 = vmatpush2.bf16.msra.mxu0 %v2050
        %2351 = vmatprep.subr.bf16.mxu0 %v2047
        %2352 = vmatpush2.bf16.msra.mxu0 %v2046
        %2353 = vmatprep.subr.bf16.mxu0 %v2043
        %2354 = vmatpush2.bf16.msra.mxu0 %v2042
        %2355 = vmatprep.subr.bf16.mxu0 %v2039
        %2356 = vmatpush2.bf16.msra.mxu0 %v2038
        %2357 = vmatprep.mubr.bf16.mxu0 %v1749
        %2358 = vmatmul.mubr.bf16.gmra.mxu0 %v1748
        %v2359 = vpop.f32.mrf.mxu0
        %v2360 = vadd.f32 %v1643, %v2359
        %v2361 = vpop.f32.mrf.mxu0
        %v2362 = vadd.f32 %v1647, %v2361
        %v2363 = vpop.f32.mrf.mxu0
        %v2364 = vadd.f32 %v1643, %v2363
        %v2365 = vpop.f32.mrf.mxu0
        %v2366 = vadd.f32 %v1647, %v2365
        %2367 = vmatprep.mubr.bf16.mxu0 %v1751
        %2368 = vmatmul.mubr.bf16.gmra.mxu0 %v1750
        %v2369 = vpop.f32.mrf.mxu0
        %v2370 = vadd.f32 %v1643, %v2369
        %v2371 = vpop.f32.mrf.mxu0
        %v2372 = vadd.f32 %v1647, %v2371
        %v2373 = vpop.f32.mrf.mxu0
        %v2374 = vadd.f32 %v1643, %v2373
        %v2375 = vpop.f32.mrf.mxu0
        %v2376 = vadd.f32 %v1647, %v2375
        %2377 = vmatprep.mubr.bf16.mxu0 %v1753
        %2378 = vmatmul.mubr.bf16.gmra.mxu0 %v1752
        %v2379 = vpop.f32.mrf.mxu0
        %v2380 = vadd.f32 %v1643, %v2379
        %v2381 = vpop.f32.mrf.mxu0
        %v2382 = vadd.f32 %v1647, %v2381
        %v2383 = vpop.f32.mrf.mxu0
        %v2384 = vadd.f32 %v1643, %v2383
        %v2385 = vpop.f32.mrf.mxu0
        %v2386 = vadd.f32 %v1647, %v2385
        %2387 = vmatprep.mubr.bf16.mxu0 %v1755
        %2388 = vmatmul.mubr.bf16.gmra.mxu0 %v1754
        %v2389 = vpop.f32.mrf.mxu0
        %v2390 = vadd.f32 %v1643, %v2389
        %v2391 = vpop.f32.mrf.mxu0
        %v2392 = vadd.f32 %v1647, %v2391
        %v2393 = vpop.f32.mrf.mxu0
        %v2394 = vadd.f32 %v1643, %v2393
        %v2395 = vpop.f32.mrf.mxu0
        %v2396 = vadd.f32 %v1647, %v2395
        %2397 = vmatprep.mubr.bf16.mxu0 %v1757
        %2398 = vmatmul.mubr.bf16.gmra.mxu0 %v1756
        %v2399 = vpop.f32.mrf.mxu0
        %v2400 = vadd.f32 %v1643, %v2399
        %v2401 = vpop.f32.mrf.mxu0
        %v2402 = vadd.f32 %v1647, %v2401
        %v2403 = vpop.f32.mrf.mxu0
        %v2404 = vadd.f32 %v1643, %v2403
        %v2405 = vpop.f32.mrf.mxu0
        %v2406 = vadd.f32 %v1647, %v2405
        %2407 = vmatprep.mubr.bf16.mxu0 %v1759
        %2408 = vmatmul.mubr.bf16.gmra.mxu0 %v1758
        %v2409 = vpop.f32.mrf.mxu0
        %v2410 = vadd.f32 %v1643, %v2409
        %v2411 = vpop.f32.mrf.mxu0
        %v2412 = vadd.f32 %v1647, %v2411
        %v2413 = vpop.f32.mrf.mxu0
        %v2414 = vadd.f32 %v1643, %v2413
        %v2415 = vpop.f32.mrf.mxu0
        %v2416 = vadd.f32 %v1647, %v2415
        %2417 = vmatprep.mubr.bf16.mxu0 %v1761
        %2418 = vmatmul.mubr.bf16.gmra.mxu0 %v1760
        %v2419 = vpop.f32.mrf.mxu0
        %v2420 = vadd.f32 %v1643, %v2419
        %v2421 = vpop.f32.mrf.mxu0
        %v2422 = vadd.f32 %v1647, %v2421
        %v2423 = vpop.f32.mrf.mxu0
        %v2424 = vadd.f32 %v1643, %v2423
        %v2425 = vpop.f32.mrf.mxu0
        %v2426 = vadd.f32 %v1647, %v2425
        %2427 = vmatprep.mubr.bf16.mxu0 %v1763
        %2428 = vmatmul.mubr.bf16.gmra.mxu0 %v1762
        %v2429 = vpop.f32.mrf.mxu0
        %v2430 = vadd.f32 %v1643, %v2429
        %v2431 = vpop.f32.mrf.mxu0
        %v2432 = vadd.f32 %v1647, %v2431
        %v2433 = vpop.f32.mrf.mxu0
        %v2434 = vadd.f32 %v1643, %v2433
        %v2435 = vpop.f32.mrf.mxu0
        %v2436 = vadd.f32 %v1647, %v2435
        %2437 = vmatprep.mubr.bf16.mxu0 %v1765
        %2438 = vmatmul.mubr.bf16.gmra.mxu0 %v1764
        %v2439 = vpop.f32.mrf.mxu0
        %v2440 = vadd.f32 %v1643, %v2439
        %v2441 = vpop.f32.mrf.mxu0
        %v2442 = vadd.f32 %v1647, %v2441
        %v2443 = vpop.f32.mrf.mxu0
        %v2444 = vadd.f32 %v1643, %v2443
        %v2445 = vpop.f32.mrf.mxu0
        %v2446 = vadd.f32 %v1647, %v2445
        %2447 = vmatprep.mubr.bf16.mxu0 %v1767
        %2448 = vmatmul.mubr.bf16.gmra.mxu0 %v1766
        %v2449 = vpop.f32.mrf.mxu0
        %v2450 = vadd.f32 %v1643, %v2449
        %v2451 = vpop.f32.mrf.mxu0
        %v2452 = vadd.f32 %v1647, %v2451
        %v2453 = vpop.f32.mrf.mxu0
        %v2454 = vadd.f32 %v1643, %v2453
        %v2455 = vpop.f32.mrf.mxu0
        %v2456 = vadd.f32 %v1647, %v2455
        %2457 = vmatprep.mubr.bf16.mxu0 %v1769
        %2458 = vmatmul.mubr.bf16.gmra.mxu0 %v1768
        %v2459 = vpop.f32.mrf.mxu0
        %v2460 = vadd.f32 %v1643, %v2459
        %v2461 = vpop.f32.mrf.mxu0
        %v2462 = vadd.f32 %v1647, %v2461
        %v2463 = vpop.f32.mrf.mxu0
        %v2464 = vadd.f32 %v1643, %v2463
        %v2465 = vpop.f32.mrf.mxu0
        %v2466 = vadd.f32 %v1647, %v2465
        %2467 = vmatprep.mubr.bf16.mxu0 %v1771
        %2468 = vmatmul.mubr.bf16.gmra.mxu0 %v1770
        %v2469 = vpop.f32.mrf.mxu0
        %v2470 = vadd.f32 %v1643, %v2469
        %v2471 = vpop.f32.mrf.mxu0
        %v2472 = vadd.f32 %v1647, %v2471
        %v2473 = vpop.f32.mrf.mxu0
        %v2474 = vadd.f32 %v1643, %v2473
        %v2475 = vpop.f32.mrf.mxu0
        %v2476 = vadd.f32 %v1647, %v2475
        %2477 = vmatprep.mubr.bf16.mxu0 %v1773
        %2478 = vmatmul.mubr.bf16.gmra.mxu0 %v1772
        %v2479 = vpop.f32.mrf.mxu0
        %v2480 = vadd.f32 %v1643, %v2479
        %v2481 = vpop.f32.mrf.mxu0
        %v2482 = vadd.f32 %v1647, %v2481
        %v2483 = vpop.f32.mrf.mxu0
        %v2484 = vadd.f32 %v1643, %v2483
        %v2485 = vpop.f32.mrf.mxu0
        %v2486 = vadd.f32 %v1647, %v2485
        %2487 = vmatprep.mubr.bf16.mxu0 %v1775
        %2488 = vmatmul.mubr.bf16.gmra.mxu0 %v1774
        %v2489 = vpop.f32.mrf.mxu0
        %v2490 = vadd.f32 %v1643, %v2489
        %v2491 = vpop.f32.mrf.mxu0
        %v2492 = vadd.f32 %v1647, %v2491
        %v2493 = vpop.f32.mrf.mxu0
        %v2494 = vadd.f32 %v1643, %v2493
        %v2495 = vpop.f32.mrf.mxu0
        %v2496 = vadd.f32 %v1647, %v2495
        %2497 = vmatprep.mubr.bf16.mxu0 %v1777
        %2498 = vmatmul.mubr.bf16.gmra.mxu0 %v1776
        %v2499 = vpop.f32.mrf.mxu0
        %v2500 = vadd.f32 %v1643, %v2499
        %v2501 = vpop.f32.mrf.mxu0
        %v2502 = vadd.f32 %v1647, %v2501
        %v2503 = vpop.f32.mrf.mxu0
        %v2504 = vadd.f32 %v1643, %v2503
        %v2505 = vpop.f32.mrf.mxu0
        %v2506 = vadd.f32 %v1647, %v2505
        %2507 = vmatprep.mubr.bf16.mxu0 %v1779
        %2508 = vmatmul.mubr.bf16.gmra.mxu0 %v1778
        %v2509 = vpop.f32.mrf.mxu0
        %v2510 = vadd.f32 %v1643, %v2509
        %v2511 = vpop.f32.mrf.mxu0
        %v2512 = vadd.f32 %v1647, %v2511
        %v2513 = vpop.f32.mrf.mxu0
        %v2514 = vadd.f32 %v1643, %v2513
        %v2515 = vpop.f32.mrf.mxu0
        %v2516 = vadd.f32 %v1647, %v2515
        %2517 = vdwg.mxu0
        %s2518 = smul.u32 %s32, 512
        %s2519 = sshra.s32 %s2518, 7
        %s2520 = sand.u32 %s2518, 127
        %s2521 = smul.addr %s2519, 8
        %s2522 = scalar_lea.vmem %s422, %s2521 [#allocation15]
        %2523 = vst [vmem:[%s2522] sm:$0xff] %v2167
        %2524 = vst [vmem:[%s2522 + $0x8] sm:$0xff] %v2169
        %2525 = vst [vmem:[%s2522 + $0x10] sm:$0xff] %v2360
        %2526 = vst [vmem:[%s2522 + $0x18] sm:$0xff] %v2362
        %2527 = vst [vmem:[%s2522 + $0x40] sm:$0xff] %v2171
        %2528 = vst [vmem:[%s2522 + $0x48] sm:$0xff] %v2173
        %2529 = vst [vmem:[%s2522 + $0x50] sm:$0xff] %v2364
        %2530 = vst [vmem:[%s2522 + $0x58] sm:$0xff] %v2366
        %2531 = vst [vmem:[%s2522 + $0x80] sm:$0xff] %v2177
        %2532 = vst [vmem:[%s2522 + $0x88] sm:$0xff] %v2179
        %2533 = vst [vmem:[%s2522 + $0x90] sm:$0xff] %v2370
        %2534 = vst [vmem:[%s2522 + $0x98] sm:$0xff] %v2372
        %2535 = vst [vmem:[%s2522 + $0xc0] sm:$0xff] %v2181
        %2536 = vst [vmem:[%s2522 + $0xc8] sm:$0xff] %v2183
        %2537 = vst [vmem:[%s2522 + $0xd0] sm:$0xff] %v2374
        %2538 = vst [vmem:[%s2522 + $0xd8] sm:$0xff] %v2376
        %2539 = vst [vmem:[%s2522 + $0x100] sm:$0xff] %v2187
        %2540 = vst [vmem:[%s2522 + $0x108] sm:$0xff] %v2189
        %2541 = vst [vmem:[%s2522 + $0x110] sm:$0xff] %v2380
        %2542 = vst [vmem:[%s2522 + $0x118] sm:$0xff] %v2382
        %2543 = vst [vmem:[%s2522 + $0x140] sm:$0xff] %v2191
        %2544 = vst [vmem:[%s2522 + $0x148] sm:$0xff] %v2193
        %2545 = vst [vmem:[%s2522 + $0x150] sm:$0xff] %v2384
        %2546 = vst [vmem:[%s2522 + $0x158] sm:$0xff] %v2386
        %2547 = vst [vmem:[%s2522 + $0x180] sm:$0xff] %v2197
        %2548 = vst [vmem:[%s2522 + $0x188] sm:$0xff] %v2199
        %2549 = vst [vmem:[%s2522 + $0x190] sm:$0xff] %v2390
        %2550 = vst [vmem:[%s2522 + $0x198] sm:$0xff] %v2392
        %2551 = vst [vmem:[%s2522 + $0x1c0] sm:$0xff] %v2201
        %2552 = vst [vmem:[%s2522 + $0x1c8] sm:$0xff] %v2203
        %2553 = vst [vmem:[%s2522 + $0x1d0] sm:$0xff] %v2394
        %2554 = vst [vmem:[%s2522 + $0x1d8] sm:$0xff] %v2396
        %2555 = vst [vmem:[%s2522 + $0x200] sm:$0xff] %v2207
        %2556 = vst [vmem:[%s2522 + $0x208] sm:$0xff] %v2209
        %2557 = vst [vmem:[%s2522 + $0x210] sm:$0xff] %v2400
        %2558 = vst [vmem:[%s2522 + $0x218] sm:$0xff] %v2402
        %2559 = vst [vmem:[%s2522 + $0x240] sm:$0xff] %v2211
        %2560 = vst [vmem:[%s2522 + $0x248] sm:$0xff] %v2213
        %2561 = vst [vmem:[%s2522 + $0x250] sm:$0xff] %v2404
        %2562 = vst [vmem:[%s2522 + $0x258] sm:$0xff] %v2406
        %2563 = vst [vmem:[%s2522 + $0x280] sm:$0xff] %v2217
        %2564 = vst [vmem:[%s2522 + $0x288] sm:$0xff] %v2219
        %2565 = vst [vmem:[%s2522 + $0x290] sm:$0xff] %v2410
        %2566 = vst [vmem:[%s2522 + $0x298] sm:$0xff] %v2412
        %2567 = vst [vmem:[%s2522 + $0x2c0] sm:$0xff] %v2221
        %2568 = vst [vmem:[%s2522 + $0x2c8] sm:$0xff] %v2223
        %2569 = vst [vmem:[%s2522 + $0x2d0] sm:$0xff] %v2414
        %2570 = vst [vmem:[%s2522 + $0x2d8] sm:$0xff] %v2416
        %2571 = vst [vmem:[%s2522 + $0x300] sm:$0xff] %v2227
        %2572 = vst [vmem:[%s2522 + $0x308] sm:$0xff] %v2229
        %2573 = vst [vmem:[%s2522 + $0x310] sm:$0xff] %v2420
        %2574 = vst [vmem:[%s2522 + $0x318] sm:$0xff] %v2422
        %2575 = vst [vmem:[%s2522 + $0x340] sm:$0xff] %v2231
        %2576 = vst [vmem:[%s2522 + $0x348] sm:$0xff] %v2233
        %2577 = vst [vmem:[%s2522 + $0x350] sm:$0xff] %v2424
        %2578 = vst [vmem:[%s2522 + $0x358] sm:$0xff] %v2426
        %2579 = vst [vmem:[%s2522 + $0x380] sm:$0xff] %v2237
        %2580 = vst [vmem:[%s2522 + $0x388] sm:$0xff] %v2239
        %2581 = vst [vmem:[%s2522 + $0x390] sm:$0xff] %v2430
        %2582 = vst [vmem:[%s2522 + $0x398] sm:$0xff] %v2432
        %2583 = vst [vmem:[%s2522 + $0x3c0] sm:$0xff] %v2241
        %2584 = vst [vmem:[%s2522 + $0x3c8] sm:$0xff] %v2243
        %2585 = vst [vmem:[%s2522 + $0x3d0] sm:$0xff] %v2434
        %2586 = vst [vmem:[%s2522 + $0x3d8] sm:$0xff] %v2436
        %2587 = vst [vmem:[%s2522 + $0x400] sm:$0xff] %v2247
        %2588 = vst [vmem:[%s2522 + $0x408] sm:$0xff] %v2249
        %2589 = vst [vmem:[%s2522 + $0x410] sm:$0xff] %v2440
        %2590 = vst [vmem:[%s2522 + $0x418] sm:$0xff] %v2442
        %2591 = vst [vmem:[%s2522 + $0x440] sm:$0xff] %v2251
        %2592 = vst [vmem:[%s2522 + $0x448] sm:$0xff] %v2253
        %2593 = vst [vmem:[%s2522 + $0x450] sm:$0xff] %v2444
        %2594 = vst [vmem:[%s2522 + $0x458] sm:$0xff] %v2446
        %2595 = vst [vmem:[%s2522 + $0x480] sm:$0xff] %v2257
        %2596 = vst [vmem:[%s2522 + $0x488] sm:$0xff] %v2259
        %2597 = vst [vmem:[%s2522 + $0x490] sm:$0xff] %v2450
        %2598 = vst [vmem:[%s2522 + $0x498] sm:$0xff] %v2452
        %2599 = vst [vmem:[%s2522 + $0x4c0] sm:$0xff] %v2261
        %2600 = vst [vmem:[%s2522 + $0x4c8] sm:$0xff] %v2263
        %2601 = vst [vmem:[%s2522 + $0x4d0] sm:$0xff] %v2454
        %2602 = vst [vmem:[%s2522 + $0x4d8] sm:$0xff] %v2456
        %2603 = vst [vmem:[%s2522 + $0x500] sm:$0xff] %v2267
        %2604 = vst [vmem:[%s2522 + $0x508] sm:$0xff] %v2269
        %2605 = vst [vmem:[%s2522 + $0x510] sm:$0xff] %v2460
        %2606 = vst [vmem:[%s2522 + $0x518] sm:$0xff] %v2462
        %2607 = vst [vmem:[%s2522 + $0x540] sm:$0xff] %v2271
        %2608 = vst [vmem:[%s2522 + $0x548] sm:$0xff] %v2273
        %2609 = vst [vmem:[%s2522 + $0x550] sm:$0xff] %v2464
        %2610 = vst [vmem:[%s2522 + $0x558] sm:$0xff] %v2466
        %2611 = vst [vmem:[%s2522 + $0x580] sm:$0xff] %v2277
        %2612 = vst [vmem:[%s2522 + $0x588] sm:$0xff] %v2279
        %2613 = vst [vmem:[%s2522 + $0x590] sm:$0xff] %v2470
        %2614 = vst [vmem:[%s2522 + $0x598] sm:$0xff] %v2472
        %2615 = vst [vmem:[%s2522 + $0x5c0] sm:$0xff] %v2281
        %2616 = vst [vmem:[%s2522 + $0x5c8] sm:$0xff] %v2283
        %2617 = vst [vmem:[%s2522 + $0x5d0] sm:$0xff] %v2474
        %2618 = vst [vmem:[%s2522 + $0x5d8] sm:$0xff] %v2476
        %2619 = vst [vmem:[%s2522 + $0x600] sm:$0xff] %v2287
        %2620 = vst [vmem:[%s2522 + $0x608] sm:$0xff] %v2289
        %2621 = vst [vmem:[%s2522 + $0x610] sm:$0xff] %v2480
        %2622 = vst [vmem:[%s2522 + $0x618] sm:$0xff] %v2482
        %2623 = vst [vmem:[%s2522 + $0x640] sm:$0xff] %v2291
        %2624 = vst [vmem:[%s2522 + $0x648] sm:$0xff] %v2293
        %2625 = vst [vmem:[%s2522 + $0x650] sm:$0xff] %v2484
        %2626 = vst [vmem:[%s2522 + $0x658] sm:$0xff] %v2486
        %2627 = vst [vmem:[%s2522 + $0x680] sm:$0xff] %v2297
        %2628 = vst [vmem:[%s2522 + $0x688] sm:$0xff] %v2299
        %2629 = vst [vmem:[%s2522 + $0x690] sm:$0xff] %v2490
        %2630 = vst [vmem:[%s2522 + $0x698] sm:$0xff] %v2492
        %2631 = vst [vmem:[%s2522 + $0x6c0] sm:$0xff] %v2301
        %2632 = vst [vmem:[%s2522 + $0x6c8] sm:$0xff] %v2303
        %2633 = vst [vmem:[%s2522 + $0x6d0] sm:$0xff] %v2494
        %2634 = vst [vmem:[%s2522 + $0x6d8] sm:$0xff] %v2496
        %2635 = vst [vmem:[%s2522 + $0x700] sm:$0xff] %v2307
        %2636 = vst [vmem:[%s2522 + $0x708] sm:$0xff] %v2309
        %2637 = vst [vmem:[%s2522 + $0x710] sm:$0xff] %v2500
        %2638 = vst [vmem:[%s2522 + $0x718] sm:$0xff] %v2502
        %2639 = vst [vmem:[%s2522 + $0x740] sm:$0xff] %v2311
        %2640 = vst [vmem:[%s2522 + $0x748] sm:$0xff] %v2313
        %2641 = vst [vmem:[%s2522 + $0x750] sm:$0xff] %v2504
        %2642 = vst [vmem:[%s2522 + $0x758] sm:$0xff] %v2506
        %2643 = vst [vmem:[%s2522 + $0x780] sm:$0xff] %v2317
        %2644 = vst [vmem:[%s2522 + $0x788] sm:$0xff] %v2319
        %2645 = vst [vmem:[%s2522 + $0x790] sm:$0xff] %v2510
        %2646 = vst [vmem:[%s2522 + $0x798] sm:$0xff] %v2512
        %2647 = vst [vmem:[%s2522 + $0x7c0] sm:$0xff] %v2321
        %2648 = vst [vmem:[%s2522 + $0x7c8] sm:$0xff] %v2323
        %2649 = vst [vmem:[%s2522 + $0x7d0] sm:$0xff] %v2514
        %2650 = vst [vmem:[%s2522 + $0x7d8] sm:$0xff] %v2516
        %v2651 = vld [vmem:[#allocation3] sm:$0xff]
        %v2652 = vld [vmem:[#allocation3 + $0x8] sm:$0xff]
        %v2653 = vld [vmem:[#allocation3 + $0x10] sm:$0xff]
        %v2654 = vld [vmem:[#allocation3 + $0x18] sm:$0xff]
        %v2655 = vld [vmem:[#allocation3 + $0x20] sm:$0xff]
        %v2656 = vld [vmem:[#allocation3 + $0x28] sm:$0xff]
        %v2657 = vld [vmem:[#allocation3 + $0x30] sm:$0xff]
        %v2658 = vld [vmem:[#allocation3 + $0x38] sm:$0xff]
        %v2659 = vld [vmem:[#allocation3 + $0x40] sm:$0xff]
        %v2660 = vld [vmem:[#allocation3 + $0x48] sm:$0xff]
        %v2661 = vld [vmem:[#allocation3 + $0x50] sm:$0xff]
        %v2662 = vld [vmem:[#allocation3 + $0x58] sm:$0xff]
        %v2663 = vld [vmem:[#allocation3 + $0x60] sm:$0xff]
        %v2664 = vld [vmem:[#allocation3 + $0x68] sm:$0xff]
        %v2665 = vld [vmem:[#allocation3 + $0x70] sm:$0xff]
        %v2666 = vld [vmem:[#allocation3 + $0x78] sm:$0xff]
        %v2667 = vld [vmem:[#allocation3 + $0x80] sm:$0xff]
        %v2668 = vld [vmem:[#allocation3 + $0x88] sm:$0xff]
        %v2669 = vld [vmem:[#allocation3 + $0x90] sm:$0xff]
        %v2670 = vld [vmem:[#allocation3 + $0x98] sm:$0xff]
        %v2671 = vld [vmem:[#allocation3 + $0xa0] sm:$0xff]
        %v2672 = vld [vmem:[#allocation3 + $0xa8] sm:$0xff]
        %v2673 = vld [vmem:[#allocation3 + $0xb0] sm:$0xff]
        %v2674 = vld [vmem:[#allocation3 + $0xb8] sm:$0xff]
        %v2675 = vld [vmem:[#allocation3 + $0xc0] sm:$0xff]
        %v2676 = vld [vmem:[#allocation3 + $0xc8] sm:$0xff]
        %v2677 = vld [vmem:[#allocation3 + $0xd0] sm:$0xff]
        %v2678 = vld [vmem:[#allocation3 + $0xd8] sm:$0xff]
        %v2679 = vld [vmem:[#allocation3 + $0xe0] sm:$0xff]
        %v2680 = vld [vmem:[#allocation3 + $0xe8] sm:$0xff]
        %v2681 = vld [vmem:[#allocation3 + $0xf0] sm:$0xff]
        %v2682 = vld [vmem:[#allocation3 + $0xf8] sm:$0xff]
        %v2683 = vld [vmem:[#allocation4] sm:$0xff]
        %v2684 = vld [vmem:[#allocation4 + $0x8] sm:$0xff]
        %v2685 = vld [vmem:[#allocation4 + $0x10] sm:$0xff]
        %v2686 = vld [vmem:[#allocation4 + $0x18] sm:$0xff]
        %v2687 = vld [vmem:[#allocation4 + $0x20] sm:$0xff]
        %v2688 = vld [vmem:[#allocation4 + $0x28] sm:$0xff]
        %v2689 = vld [vmem:[#allocation4 + $0x30] sm:$0xff]
        %v2690 = vld [vmem:[#allocation4 + $0x38] sm:$0xff]
        %v2691 = vld [vmem:[#allocation4 + $0x40] sm:$0xff]
        %v2692 = vld [vmem:[#allocation4 + $0x48] sm:$0xff]
        %v2693 = vld [vmem:[#allocation4 + $0x50] sm:$0xff]
        %v2694 = vld [vmem:[#allocation4 + $0x58] sm:$0xff]
        %v2695 = vld [vmem:[#allocation4 + $0x60] sm:$0xff]
        %v2696 = vld [vmem:[#allocation4 + $0x68] sm:$0xff]
        %v2697 = vld [vmem:[#allocation4 + $0x70] sm:$0xff]
        %v2698 = vld [vmem:[#allocation4 + $0x78] sm:$0xff]
        %v2699 = vld [vmem:[#allocation4 + $0x80] sm:$0xff]
        %v2700 = vld [vmem:[#allocation4 + $0x88] sm:$0xff]
        %v2701 = vld [vmem:[#allocation4 + $0x90] sm:$0xff]
        %v2702 = vld [vmem:[#allocation4 + $0x98] sm:$0xff]
        %v2703 = vld [vmem:[#allocation4 + $0xa0] sm:$0xff]
        %v2704 = vld [vmem:[#allocation4 + $0xa8] sm:$0xff]
        %v2705 = vld [vmem:[#allocation4 + $0xb0] sm:$0xff]
        %v2706 = vld [vmem:[#allocation4 + $0xb8] sm:$0xff]
        %v2707 = vld [vmem:[#allocation4 + $0xc0] sm:$0xff]
        %v2708 = vld [vmem:[#allocation4 + $0xc8] sm:$0xff]
        %v2709 = vld [vmem:[#allocation4 + $0xd0] sm:$0xff]
        %v2710 = vld [vmem:[#allocation4 + $0xd8] sm:$0xff]
        %v2711 = vld [vmem:[#allocation4 + $0xe0] sm:$0xff]
        %v2712 = vld [vmem:[#allocation4 + $0xe8] sm:$0xff]
        %v2713 = vld [vmem:[#allocation4 + $0xf0] sm:$0xff]
        %v2714 = vld [vmem:[#allocation4 + $0xf8] sm:$0xff]
        %v2715 = vmax.f32 %v2167, %v2169
        %v2716 = vmax.f32 %v2715, %v2360
        %v2717 = vmax.f32 %v2716, %v2362
        %2718 = vmax.xlane.f32.xlu0 %v2717
        %v2719 = vpop.xlane.xlu0 %2718
        %v2720 = vmax.f32 %v2171, %v2173
        %v2721 = vmax.f32 %v2720, %v2364
        %v2722 = vmax.f32 %v2721, %v2366
        %2723 = vmax.xlane.f32.xlu0 %v2722
        %v2724 = vpop.xlane.xlu0 %2723
        %v2725 = vmax.f32 %v2177, %v2179
        %v2726 = vmax.f32 %v2725, %v2370
        %v2727 = vmax.f32 %v2726, %v2372
        %2728 = vmax.xlane.f32.xlu0 %v2727
        %v2729 = vpop.xlane.xlu0 %2728
        %v2730 = vmax.f32 %v2181, %v2183
        %v2731 = vmax.f32 %v2730, %v2374
        %v2732 = vmax.f32 %v2731, %v2376
        %2733 = vmax.xlane.f32.xlu0 %v2732
        %v2734 = vpop.xlane.xlu0 %2733
        %v2735 = vmax.f32 %v2187, %v2189
        %v2736 = vmax.f32 %v2735, %v2380
        %v2737 = vmax.f32 %v2736, %v2382
        %2738 = vmax.xlane.f32.xlu0 %v2737
        %v2739 = vpop.xlane.xlu0 %2738
        %v2740 = vmax.f32 %v2191, %v2193
        %v2741 = vmax.f32 %v2740, %v2384
        %v2742 = vmax.f32 %v2741, %v2386
        %2743 = vmax.xlane.f32.xlu0 %v2742
        %v2744 = vpop.xlane.xlu0 %2743
        %v2745 = vmax.f32 %v2197, %v2199
        %v2746 = vmax.f32 %v2745, %v2390
        %v2747 = vmax.f32 %v2746, %v2392
        %2748 = vmax.xlane.f32.xlu0 %v2747
        %v2749 = vpop.xlane.xlu0 %2748
        %v2750 = vmax.f32 %v2201, %v2203
        %v2751 = vmax.f32 %v2750, %v2394
        %v2752 = vmax.f32 %v2751, %v2396
        %2753 = vmax.xlane.f32.xlu0 %v2752
        %v2754 = vpop.xlane.xlu0 %2753
        %v2755 = vmax.f32 %v2207, %v2209
        %v2756 = vmax.f32 %v2755, %v2400
        %v2757 = vmax.f32 %v2756, %v2402
        %2758 = vmax.xlane.f32.xlu0 %v2757
        %v2759 = vpop.xlane.xlu0 %2758
        %v2760 = vmax.f32 %v2211, %v2213
        %v2761 = vmax.f32 %v2760, %v2404
        %v2762 = vmax.f32 %v2761, %v2406
        %2763 = vmax.xlane.f32.xlu0 %v2762
        %v2764 = vpop.xlane.xlu0 %2763
        %v2765 = vmax.f32 %v2217, %v2219
        %v2766 = vmax.f32 %v2765, %v2410
        %v2767 = vmax.f32 %v2766, %v2412
        %2768 = vmax.xlane.f32.xlu0 %v2767
        %v2769 = vpop.xlane.xlu0 %2768
        %v2770 = vmax.f32 %v2221, %v2223
        %v2771 = vmax.f32 %v2770, %v2414
        %v2772 = vmax.f32 %v2771, %v2416
        %2773 = vmax.xlane.f32.xlu0 %v2772
        %v2774 = vpop.xlane.xlu0 %2773
        %v2775 = vmax.f32 %v2227, %v2229
        %v2776 = vmax.f32 %v2775, %v2420
        %v2777 = vmax.f32 %v2776, %v2422
        %2778 = vmax.xlane.f32.xlu0 %v2777
        %v2779 = vpop.xlane.xlu0 %2778
        %v2780 = vmax.f32 %v2231, %v2233
        %v2781 = vmax.f32 %v2780, %v2424
        %v2782 = vmax.f32 %v2781, %v2426
        %2783 = vmax.xlane.f32.xlu0 %v2782
        %v2784 = vpop.xlane.xlu0 %2783
        %v2785 = vmax.f32 %v2237, %v2239
        %v2786 = vmax.f32 %v2785, %v2430
        %v2787 = vmax.f32 %v2786, %v2432
        %2788 = vmax.xlane.f32.xlu0 %v2787
        %v2789 = vpop.xlane.xlu0 %2788
        %v2790 = vmax.f32 %v2241, %v2243
        %v2791 = vmax.f32 %v2790, %v2434
        %v2792 = vmax.f32 %v2791, %v2436
        %2793 = vmax.xlane.f32.xlu0 %v2792
        %v2794 = vpop.xlane.xlu0 %2793
        %v2795 = vmax.f32 %v2247, %v2249
        %v2796 = vmax.f32 %v2795, %v2440
        %v2797 = vmax.f32 %v2796, %v2442
        %2798 = vmax.xlane.f32.xlu0 %v2797
        %v2799 = vpop.xlane.xlu0 %2798
        %v2800 = vmax.f32 %v2251, %v2253
        %v2801 = vmax.f32 %v2800, %v2444
        %v2802 = vmax.f32 %v2801, %v2446
        %2803 = vmax.xlane.f32.xlu0 %v2802
        %v2804 = vpop.xlane.xlu0 %2803
        %v2805 = vmax.f32 %v2257, %v2259
        %v2806 = vmax.f32 %v2805, %v2450
        %v2807 = vmax.f32 %v2806, %v2452
        %2808 = vmax.xlane.f32.xlu0 %v2807
        %v2809 = vpop.xlane.xlu0 %2808
        %v2810 = vmax.f32 %v2261, %v2263
        %v2811 = vmax.f32 %v2810, %v2454
        %v2812 = vmax.f32 %v2811, %v2456
        %2813 = vmax.xlane.f32.xlu0 %v2812
        %v2814 = vpop.xlane.xlu0 %2813
        %v2815 = vmax.f32 %v2267, %v2269
        %v2816 = vmax.f32 %v2815, %v2460
        %v2817 = vmax.f32 %v2816, %v2462
        %2818 = vmax.xlane.f32.xlu0 %v2817
        %v2819 = vpop.xlane.xlu0 %2818
        %v2820 = vmax.f32 %v2271, %v2273
        %v2821 = vmax.f32 %v2820, %v2464
        %v2822 = vmax.f32 %v2821, %v2466
        %2823 = vmax.xlane.f32.xlu0 %v2822
        %v2824 = vpop.xlane.xlu0 %2823
        %v2825 = vmax.f32 %v2277, %v2279
        %v2826 = vmax.f32 %v2825, %v2470
        %v2827 = vmax.f32 %v2826, %v2472
        %2828 = vmax.xlane.f32.xlu0 %v2827
        %v2829 = vpop.xlane.xlu0 %2828
        %v2830 = vmax.f32 %v2281, %v2283
        %v2831 = vmax.f32 %v2830, %v2474
        %v2832 = vmax.f32 %v2831, %v2476
        %2833 = vmax.xlane.f32.xlu0 %v2832
        %v2834 = vpop.xlane.xlu0 %2833
        %v2835 = vmax.f32 %v2287, %v2289
        %v2836 = vmax.f32 %v2835, %v2480
        %v2837 = vmax.f32 %v2836, %v2482
        %2838 = vmax.xlane.f32.xlu0 %v2837
        %v2839 = vpop.xlane.xlu0 %2838
        %v2840 = vmax.f32 %v2291, %v2293
        %v2841 = vmax.f32 %v2840, %v2484
        %v2842 = vmax.f32 %v2841, %v2486
        %2843 = vmax.xlane.f32.xlu0 %v2842
        %v2844 = vpop.xlane.xlu0 %2843
        %v2845 = vmax.f32 %v2297, %v2299
        %v2846 = vmax.f32 %v2845, %v2490
        %v2847 = vmax.f32 %v2846, %v2492
        %2848 = vmax.xlane.f32.xlu0 %v2847
        %v2849 = vpop.xlane.xlu0 %2848
        %v2850 = vmax.f32 %v2301, %v2303
        %v2851 = vmax.f32 %v2850, %v2494
        %v2852 = vmax.f32 %v2851, %v2496
        %2853 = vmax.xlane.f32.xlu0 %v2852
        %v2854 = vpop.xlane.xlu0 %2853
        %v2855 = vmax.f32 %v2307, %v2309
        %v2856 = vmax.f32 %v2855, %v2500
        %v2857 = vmax.f32 %v2856, %v2502
        %2858 = vmax.xlane.f32.xlu0 %v2857
        %v2859 = vpop.xlane.xlu0 %2858
        %v2860 = vmax.f32 %v2311, %v2313
        %v2861 = vmax.f32 %v2860, %v2504
        %v2862 = vmax.f32 %v2861, %v2506
        %2863 = vmax.xlane.f32.xlu0 %v2862
        %v2864 = vpop.xlane.xlu0 %2863
        %v2865 = vmax.f32 %v2317, %v2319
        %v2866 = vmax.f32 %v2865, %v2510
        %v2867 = vmax.f32 %v2866, %v2512
        %2868 = vmax.xlane.f32.xlu0 %v2867
        %v2869 = vpop.xlane.xlu0 %2868
        %v2870 = vmax.f32 %v2321, %v2323
        %v2871 = vmax.f32 %v2870, %v2514
        %v2872 = vmax.f32 %v2871, %v2516
        %2873 = vmax.xlane.f32.xlu0 %v2872
        %v2874 = vpop.xlane.xlu0 %2873
        %v2875 = vmax.f32 %v2651, %v2719
        %v2876 = vmax.f32 %v2652, %v2724
        %v2877 = vmax.f32 %v2653, %v2729
        %v2878 = vmax.f32 %v2654, %v2734
        %v2879 = vmax.f32 %v2655, %v2739
        %v2880 = vmax.f32 %v2656, %v2744
        %v2881 = vmax.f32 %v2657, %v2749
        %v2882 = vmax.f32 %v2658, %v2754
        %v2883 = vmax.f32 %v2659, %v2759
        %v2884 = vmax.f32 %v2660, %v2764
        %v2885 = vmax.f32 %v2661, %v2769
        %v2886 = vmax.f32 %v2662, %v2774
        %v2887 = vmax.f32 %v2663, %v2779
        %v2888 = vmax.f32 %v2664, %v2784
        %v2889 = vmax.f32 %v2665, %v2789
        %v2890 = vmax.f32 %v2666, %v2794
        %v2891 = vmax.f32 %v2667, %v2799
        %v2892 = vmax.f32 %v2668, %v2804
        %v2893 = vmax.f32 %v2669, %v2809
        %v2894 = vmax.f32 %v2670, %v2814
        %v2895 = vmax.f32 %v2671, %v2819
        %v2896 = vmax.f32 %v2672, %v2824
        %v2897 = vmax.f32 %v2673, %v2829
        %v2898 = vmax.f32 %v2674, %v2834
        %v2899 = vmax.f32 %v2675, %v2839
        %v2900 = vmax.f32 %v2676, %v2844
        %v2901 = vmax.f32 %v2677, %v2849
        %v2902 = vmax.f32 %v2678, %v2854
        %v2903 = vmax.f32 %v2679, %v2859
        %v2904 = vmax.f32 %v2680, %v2864
        %v2905 = vmax.f32 %v2681, %v2869
        %v2906 = vmax.f32 %v2682, %v2874
        %v2907 = vsub.f32 %v2651, %v2875
        %v2908 = vsub.f32 %v2652, %v2876
        %v2909 = vsub.f32 %v2653, %v2877
        %v2910 = vsub.f32 %v2654, %v2878
        %v2911 = vsub.f32 %v2655, %v2879
        %v2912 = vsub.f32 %v2656, %v2880
        %v2913 = vsub.f32 %v2657, %v2881
        %v2914 = vsub.f32 %v2658, %v2882
        %v2915 = vsub.f32 %v2659, %v2883
        %v2916 = vsub.f32 %v2660, %v2884
        %v2917 = vsub.f32 %v2661, %v2885
        %v2918 = vsub.f32 %v2662, %v2886
        %v2919 = vsub.f32 %v2663, %v2887
        %v2920 = vsub.f32 %v2664, %v2888
        %v2921 = vsub.f32 %v2665, %v2889
        %v2922 = vsub.f32 %v2666, %v2890
        %v2923 = vsub.f32 %v2667, %v2891
        %v2924 = vsub.f32 %v2668, %v2892
        %v2925 = vsub.f32 %v2669, %v2893
        %v2926 = vsub.f32 %v2670, %v2894
        %v2927 = vsub.f32 %v2671, %v2895
        %v2928 = vsub.f32 %v2672, %v2896
        %v2929 = vsub.f32 %v2673, %v2897
        %v2930 = vsub.f32 %v2674, %v2898
        %v2931 = vsub.f32 %v2675, %v2899
        %v2932 = vsub.f32 %v2676, %v2900
        %v2933 = vsub.f32 %v2677, %v2901
        %v2934 = vsub.f32 %v2678, %v2902
        %v2935 = vsub.f32 %v2679, %v2903
        %v2936 = vsub.f32 %v2680, %v2904
        %v2937 = vsub.f32 %v2681, %v2905
        %v2938 = vsub.f32 %v2682, %v2906
        %v2939 = vmul.f32 %v2907, 1.442695
        %v2940 = vpow.pop %v2939
        %v2941 = vmul.f32 %v2908, 1.442695
        %v2942 = vpow.pop %v2941
        %v2943 = vmul.f32 %v2909, 1.442695
        %v2944 = vpow.pop %v2943
        %v2945 = vmul.f32 %v2910, 1.442695
        %v2946 = vpow.pop %v2945
        %v2947 = vmul.f32 %v2911, 1.442695
        %v2948 = vpow.pop %v2947
        %v2949 = vmul.f32 %v2912, 1.442695
        %v2950 = vpow.pop %v2949
        %v2951 = vmul.f32 %v2913, 1.442695
        %v2952 = vpow.pop %v2951
        %v2953 = vmul.f32 %v2914, 1.442695
        %v2954 = vpow.pop %v2953
        %v2955 = vmul.f32 %v2915, 1.442695
        %v2956 = vpow.pop %v2955
        %v2957 = vmul.f32 %v2916, 1.442695
        %v2958 = vpow.pop %v2957
        %v2959 = vmul.f32 %v2917, 1.442695
        %v2960 = vpow.pop %v2959
        %v2961 = vmul.f32 %v2918, 1.442695
        %v2962 = vpow.pop %v2961
        %v2963 = vmul.f32 %v2919, 1.442695
        %v2964 = vpow.pop %v2963
        %v2965 = vmul.f32 %v2920, 1.442695
        %v2966 = vpow.pop %v2965
        %v2967 = vmul.f32 %v2921, 1.442695
        %v2968 = vpow.pop %v2967
        %v2969 = vmul.f32 %v2922, 1.442695
        %v2970 = vpow.pop %v2969
        %v2971 = vmul.f32 %v2923, 1.442695
        %v2972 = vpow.pop %v2971
        %v2973 = vmul.f32 %v2924, 1.442695
        %v2974 = vpow.pop %v2973
        %v2975 = vmul.f32 %v2925, 1.442695
        %v2976 = vpow.pop %v2975
        %v2977 = vmul.f32 %v2926, 1.442695
        %v2978 = vpow.pop %v2977
        %v2979 = vmul.f32 %v2927, 1.442695
        %v2980 = vpow.pop %v2979
        %v2981 = vmul.f32 %v2928, 1.442695
        %v2982 = vpow.pop %v2981
        %v2983 = vmul.f32 %v2929, 1.442695
        %v2984 = vpow.pop %v2983
        %v2985 = vmul.f32 %v2930, 1.442695
        %v2986 = vpow.pop %v2985
        %v2987 = vmul.f32 %v2931, 1.442695
        %v2988 = vpow.pop %v2987
        %v2989 = vmul.f32 %v2932, 1.442695
        %v2990 = vpow.pop %v2989
        %v2991 = vmul.f32 %v2933, 1.442695
        %v2992 = vpow.pop %v2991
        %v2993 = vmul.f32 %v2934, 1.442695
        %v2994 = vpow.pop %v2993
        %v2995 = vmul.f32 %v2935, 1.442695
        %v2996 = vpow.pop %v2995
        %v2997 = vmul.f32 %v2936, 1.442695
        %v2998 = vpow.pop %v2997
        %v2999 = vmul.f32 %v2937, 1.442695
        %v3000 = vpow.pop %v2999
        %v3001 = vmul.f32 %v2938, 1.442695
        %v3002 = vpow.pop %v3001
        %v3003 = vmul.f32 %v2683, %v2940
        %v3004 = vmul.f32 %v2684, %v2942
        %v3005 = vmul.f32 %v2685, %v2944
        %v3006 = vmul.f32 %v2686, %v2946
        %v3007 = vmul.f32 %v2687, %v2948
        %v3008 = vmul.f32 %v2688, %v2950
        %v3009 = vmul.f32 %v2689, %v2952
        %v3010 = vmul.f32 %v2690, %v2954
        %v3011 = vmul.f32 %v2691, %v2956
        %v3012 = vmul.f32 %v2692, %v2958
        %v3013 = vmul.f32 %v2693, %v2960
        %v3014 = vmul.f32 %v2694, %v2962
        %v3015 = vmul.f32 %v2695, %v2964
        %v3016 = vmul.f32 %v2696, %v2966
        %v3017 = vmul.f32 %v2697, %v2968
        %v3018 = vmul.f32 %v2698, %v2970
        %v3019 = vmul.f32 %v2699, %v2972
        %v3020 = vmul.f32 %v2700, %v2974
        %v3021 = vmul.f32 %v2701, %v2976
        %v3022 = vmul.f32 %v2702, %v2978
        %v3023 = vmul.f32 %v2703, %v2980
        %v3024 = vmul.f32 %v2704, %v2982
        %v3025 = vmul.f32 %v2705, %v2984
        %v3026 = vmul.f32 %v2706, %v2986
        %v3027 = vmul.f32 %v2707, %v2988
        %v3028 = vmul.f32 %v2708, %v2990
        %v3029 = vmul.f32 %v2709, %v2992
        %v3030 = vmul.f32 %v2710, %v2994
        %v3031 = vmul.f32 %v2711, %v2996
        %v3032 = vmul.f32 %v2712, %v2998
        %v3033 = vmul.f32 %v2713, %v3000
        %v3034 = vmul.f32 %v2714, %v3002
        %3036 = vset.pattern.permute.xlu0 0
        %3037 = vperm.xlu0 %3036, %v2875
        %v3038 = vpop.permute.xlu0 %3037
        %3041 = vset.pattern.permute.xlu0 0
        %3042 = vperm.xlu0 %3041, %v2876
        %v3043 = vpop.permute.xlu0 %3042
        %3046 = vset.pattern.permute.xlu0 0
        %3047 = vperm.xlu0 %3046, %v2877
        %v3048 = vpop.permute.xlu0 %3047
        %3051 = vset.pattern.permute.xlu0 0
        %3052 = vperm.xlu0 %3051, %v2878
        %v3053 = vpop.permute.xlu0 %3052
        %3056 = vset.pattern.permute.xlu0 0
        %3057 = vperm.xlu0 %3056, %v2879
        %v3058 = vpop.permute.xlu0 %3057
        %3061 = vset.pattern.permute.xlu0 0
        %3062 = vperm.xlu0 %3061, %v2880
        %v3063 = vpop.permute.xlu0 %3062
        %3066 = vset.pattern.permute.xlu0 0
        %3067 = vperm.xlu0 %3066, %v2881
        %v3068 = vpop.permute.xlu0 %3067
        %3071 = vset.pattern.permute.xlu0 0
        %3072 = vperm.xlu0 %3071, %v2882
        %v3073 = vpop.permute.xlu0 %3072
        %3076 = vset.pattern.permute.xlu0 0
        %3077 = vperm.xlu0 %3076, %v2883
        %v3078 = vpop.permute.xlu0 %3077
        %3081 = vset.pattern.permute.xlu0 0
        %3082 = vperm.xlu0 %3081, %v2884
        %v3083 = vpop.permute.xlu0 %3082
        %3086 = vset.pattern.permute.xlu0 0
        %3087 = vperm.xlu0 %3086, %v2885
        %v3088 = vpop.permute.xlu0 %3087
        %3091 = vset.pattern.permute.xlu0 0
        %3092 = vperm.xlu0 %3091, %v2886
        %v3093 = vpop.permute.xlu0 %3092
        %3096 = vset.pattern.permute.xlu0 0
        %3097 = vperm.xlu0 %3096, %v2887
        %v3098 = vpop.permute.xlu0 %3097
        %3101 = vset.pattern.permute.xlu0 0
        %3102 = vperm.xlu0 %3101, %v2888
        %v3103 = vpop.permute.xlu0 %3102
        %3106 = vset.pattern.permute.xlu0 0
        %3107 = vperm.xlu0 %3106, %v2889
        %v3108 = vpop.permute.xlu0 %3107
        %3111 = vset.pattern.permute.xlu0 0
        %3112 = vperm.xlu0 %3111, %v2890
        %v3113 = vpop.permute.xlu0 %3112
        %3116 = vset.pattern.permute.xlu0 0
        %3117 = vperm.xlu0 %3116, %v2891
        %v3118 = vpop.permute.xlu0 %3117
        %3121 = vset.pattern.permute.xlu0 0
        %3122 = vperm.xlu0 %3121, %v2892
        %v3123 = vpop.permute.xlu0 %3122
        %3126 = vset.pattern.permute.xlu0 0
        %3127 = vperm.xlu0 %3126, %v2893
        %v3128 = vpop.permute.xlu0 %3127
        %3131 = vset.pattern.permute.xlu0 0
        %3132 = vperm.xlu0 %3131, %v2894
        %v3133 = vpop.permute.xlu0 %3132
        %3136 = vset.pattern.permute.xlu0 0
        %3137 = vperm.xlu0 %3136, %v2895
        %v3138 = vpop.permute.xlu0 %3137
        %3141 = vset.pattern.permute.xlu0 0
        %3142 = vperm.xlu0 %3141, %v2896
        %v3143 = vpop.permute.xlu0 %3142
        %3146 = vset.pattern.permute.xlu0 0
        %3147 = vperm.xlu0 %3146, %v2897
        %v3148 = vpop.permute.xlu0 %3147
        %3151 = vset.pattern.permute.xlu0 0
        %3152 = vperm.xlu0 %3151, %v2898
        %v3153 = vpop.permute.xlu0 %3152
        %3156 = vset.pattern.permute.xlu0 0
        %3157 = vperm.xlu0 %3156, %v2899
        %v3158 = vpop.permute.xlu0 %3157
        %3161 = vset.pattern.permute.xlu0 0
        %3162 = vperm.xlu0 %3161, %v2900
        %v3163 = vpop.permute.xlu0 %3162
        %3166 = vset.pattern.permute.xlu0 0
        %3167 = vperm.xlu0 %3166, %v2901
        %v3168 = vpop.permute.xlu0 %3167
        %3171 = vset.pattern.permute.xlu0 0
        %3172 = vperm.xlu0 %3171, %v2902
        %v3173 = vpop.permute.xlu0 %3172
        %3176 = vset.pattern.permute.xlu0 0
        %3177 = vperm.xlu0 %3176, %v2903
        %v3178 = vpop.permute.xlu0 %3177
        %3181 = vset.pattern.permute.xlu0 0
        %3182 = vperm.xlu0 %3181, %v2904
        %v3183 = vpop.permute.xlu0 %3182
        %3186 = vset.pattern.permute.xlu0 0
        %3187 = vperm.xlu0 %3186, %v2905
        %v3188 = vpop.permute.xlu0 %3187
        %3191 = vset.pattern.permute.xlu0 0
        %3192 = vperm.xlu0 %3191, %v2906
        %v3193 = vpop.permute.xlu0 %3192
        %v3195 = vsub.f32 %v2167, %v3038
        %v3196 = vsub.f32 %v2169, %v3038
        %v3197 = vsub.f32 %v2360, %v3038
        %v3198 = vsub.f32 %v2362, %v3038
        %v3199 = vsub.f32 %v2171, %v3043
        %v3200 = vsub.f32 %v2173, %v3043
        %v3201 = vsub.f32 %v2364, %v3043
        %v3202 = vsub.f32 %v2366, %v3043
        %v3203 = vsub.f32 %v2177, %v3048
        %v3204 = vsub.f32 %v2179, %v3048
        %v3205 = vsub.f32 %v2370, %v3048
        %v3206 = vsub.f32 %v2372, %v3048
        %v3207 = vsub.f32 %v2181, %v3053
        %v3208 = vsub.f32 %v2183, %v3053
        %v3209 = vsub.f32 %v2374, %v3053
        %v3210 = vsub.f32 %v2376, %v3053
        %v3211 = vsub.f32 %v2187, %v3058
        %v3212 = vsub.f32 %v2189, %v3058
        %v3213 = vsub.f32 %v2380, %v3058
        %v3214 = vsub.f32 %v2382, %v3058
        %v3215 = vsub.f32 %v2191, %v3063
        %v3216 = vsub.f32 %v2193, %v3063
        %v3217 = vsub.f32 %v2384, %v3063
        %v3218 = vsub.f32 %v2386, %v3063
        %v3219 = vsub.f32 %v2197, %v3068
        %v3220 = vsub.f32 %v2199, %v3068
        %v3221 = vsub.f32 %v2390, %v3068
        %v3222 = vsub.f32 %v2392, %v3068
        %v3223 = vsub.f32 %v2201, %v3073
        %v3224 = vsub.f32 %v2203, %v3073
        %v3225 = vsub.f32 %v2394, %v3073
        %v3226 = vsub.f32 %v2396, %v3073
        %v3227 = vsub.f32 %v2207, %v3078
        %v3228 = vsub.f32 %v2209, %v3078
        %v3229 = vsub.f32 %v2400, %v3078
        %v3230 = vsub.f32 %v2402, %v3078
        %v3231 = vsub.f32 %v2211, %v3083
        %v3232 = vsub.f32 %v2213, %v3083
        %v3233 = vsub.f32 %v2404, %v3083
        %v3234 = vsub.f32 %v2406, %v3083
        %v3235 = vsub.f32 %v2217, %v3088
        %v3236 = vsub.f32 %v2219, %v3088
        %v3237 = vsub.f32 %v2410, %v3088
        %v3238 = vsub.f32 %v2412, %v3088
        %v3239 = vsub.f32 %v2221, %v3093
        %v3240 = vsub.f32 %v2223, %v3093
        %v3241 = vsub.f32 %v2414, %v3093
        %v3242 = vsub.f32 %v2416, %v3093
        %v3243 = vsub.f32 %v2227, %v3098
        %v3244 = vsub.f32 %v2229, %v3098
        %v3245 = vsub.f32 %v2420, %v3098
        %v3246 = vsub.f32 %v2422, %v3098
        %v3247 = vsub.f32 %v2231, %v3103
        %v3248 = vsub.f32 %v2233, %v3103
        %v3249 = vsub.f32 %v2424, %v3103
        %v3250 = vsub.f32 %v2426, %v3103
        %v3251 = vsub.f32 %v2237, %v3108
        %v3252 = vsub.f32 %v2239, %v3108
        %v3253 = vsub.f32 %v2430, %v3108
        %v3254 = vsub.f32 %v2432, %v3108
        %v3255 = vsub.f32 %v2241, %v3113
        %v3256 = vsub.f32 %v2243, %v3113
        %v3257 = vsub.f32 %v2434, %v3113
        %v3258 = vsub.f32 %v2436, %v3113
        %v3259 = vsub.f32 %v2247, %v3118
        %v3260 = vsub.f32 %v2249, %v3118
        %v3261 = vsub.f32 %v2440, %v3118
        %v3262 = vsub.f32 %v2442, %v3118
        %v3263 = vsub.f32 %v2251, %v3123
        %v3264 = vsub.f32 %v2253, %v3123
        %v3265 = vsub.f32 %v2444, %v3123
        %v3266 = vsub.f32 %v2446, %v3123
        %v3267 = vsub.f32 %v2257, %v3128
        %v3268 = vsub.f32 %v2259, %v3128
        %v3269 = vsub.f32 %v2450, %v3128
        %v3270 = vsub.f32 %v2452, %v3128
        %v3271 = vsub.f32 %v2261, %v3133
        %v3272 = vsub.f32 %v2263, %v3133
        %v3273 = vsub.f32 %v2454, %v3133
        %v3274 = vsub.f32 %v2456, %v3133
        %v3275 = vsub.f32 %v2267, %v3138
        %v3276 = vsub.f32 %v2269, %v3138
        %v3277 = vsub.f32 %v2460, %v3138
        %v3278 = vsub.f32 %v2462, %v3138
        %v3279 = vsub.f32 %v2271, %v3143
        %v3280 = vsub.f32 %v2273, %v3143
        %v3281 = vsub.f32 %v2464, %v3143
        %v3282 = vsub.f32 %v2466, %v3143
        %v3283 = vsub.f32 %v2277, %v3148
        %v3284 = vsub.f32 %v2279, %v3148
        %v3285 = vsub.f32 %v2470, %v3148
        %v3286 = vsub.f32 %v2472, %v3148
        %v3287 = vsub.f32 %v2281, %v3153
        %v3288 = vsub.f32 %v2283, %v3153
        %v3289 = vsub.f32 %v2474, %v3153
        %v3290 = vsub.f32 %v2476, %v3153
        %v3291 = vsub.f32 %v2287, %v3158
        %v3292 = vsub.f32 %v2289, %v3158
        %v3293 = vsub.f32 %v2480, %v3158
        %v3294 = vsub.f32 %v2482, %v3158
        %v3295 = vsub.f32 %v2291, %v3163
        %v3296 = vsub.f32 %v2293, %v3163
        %v3297 = vsub.f32 %v2484, %v3163
        %v3298 = vsub.f32 %v2486, %v3163
        %v3299 = vsub.f32 %v2297, %v3168
        %v3300 = vsub.f32 %v2299, %v3168
        %v3301 = vsub.f32 %v2490, %v3168
        %v3302 = vsub.f32 %v2492, %v3168
        %v3303 = vsub.f32 %v2301, %v3173
        %v3304 = vsub.f32 %v2303, %v3173
        %v3305 = vsub.f32 %v2494, %v3173
        %v3306 = vsub.f32 %v2496, %v3173
        %v3307 = vsub.f32 %v2307, %v3178
        %v3308 = vsub.f32 %v2309, %v3178
        %v3309 = vsub.f32 %v2500, %v3178
        %v3310 = vsub.f32 %v2502, %v3178
        %v3311 = vsub.f32 %v2311, %v3183
        %v3312 = vsub.f32 %v2313, %v3183
        %v3313 = vsub.f32 %v2504, %v3183
        %v3314 = vsub.f32 %v2506, %v3183
        %v3315 = vsub.f32 %v2317, %v3188
        %v3316 = vsub.f32 %v2319, %v3188
        %v3317 = vsub.f32 %v2510, %v3188
        %v3318 = vsub.f32 %v2512, %v3188
        %v3319 = vsub.f32 %v2321, %v3193
        %v3320 = vsub.f32 %v2323, %v3193
        %v3321 = vsub.f32 %v2514, %v3193
        %v3322 = vsub.f32 %v2516, %v3193
        %v3323 = vmul.f32 %v3195, 1.442695
        %v3324 = vpow.pop %v3323
        %v3325 = vmul.f32 %v3196, 1.442695
        %v3326 = vpow.pop %v3325
        %v3327 = vmul.f32 %v3197, 1.442695
        %v3328 = vpow.pop %v3327
        %v3329 = vmul.f32 %v3198, 1.442695
        %v3330 = vpow.pop %v3329
        %v3331 = vmul.f32 %v3199, 1.442695
        %v3332 = vpow.pop %v3331
        %v3333 = vmul.f32 %v3200, 1.442695
        %v3334 = vpow.pop %v3333
        %v3335 = vmul.f32 %v3201, 1.442695
        %v3336 = vpow.pop %v3335
        %v3337 = vmul.f32 %v3202, 1.442695
        %v3338 = vpow.pop %v3337
        %v3339 = vmul.f32 %v3203, 1.442695
        %v3340 = vpow.pop %v3339
        %v3341 = vmul.f32 %v3204, 1.442695
        %v3342 = vpow.pop %v3341
        %v3343 = vmul.f32 %v3205, 1.442695
        %v3344 = vpow.pop %v3343
        %v3345 = vmul.f32 %v3206, 1.442695
        %v3346 = vpow.pop %v3345
        %v3347 = vmul.f32 %v3207, 1.442695
        %v3348 = vpow.pop %v3347
        %v3349 = vmul.f32 %v3208, 1.442695
        %v3350 = vpow.pop %v3349
        %v3351 = vmul.f32 %v3209, 1.442695
        %v3352 = vpow.pop %v3351
        %v3353 = vmul.f32 %v3210, 1.442695
        %v3354 = vpow.pop %v3353
        %v3355 = vmul.f32 %v3211, 1.442695
        %v3356 = vpow.pop %v3355
        %v3357 = vmul.f32 %v3212, 1.442695
        %v3358 = vpow.pop %v3357
        %v3359 = vmul.f32 %v3213, 1.442695
        %v3360 = vpow.pop %v3359
        %v3361 = vmul.f32 %v3214, 1.442695
        %v3362 = vpow.pop %v3361
        %v3363 = vmul.f32 %v3215, 1.442695
        %v3364 = vpow.pop %v3363
        %v3365 = vmul.f32 %v3216, 1.442695
        %v3366 = vpow.pop %v3365
        %v3367 = vmul.f32 %v3217, 1.442695
        %v3368 = vpow.pop %v3367
        %v3369 = vmul.f32 %v3218, 1.442695
        %v3370 = vpow.pop %v3369
        %v3371 = vmul.f32 %v3219, 1.442695
        %v3372 = vpow.pop %v3371
        %v3373 = vmul.f32 %v3220, 1.442695
        %v3374 = vpow.pop %v3373
        %v3375 = vmul.f32 %v3221, 1.442695
        %v3376 = vpow.pop %v3375
        %v3377 = vmul.f32 %v3222, 1.442695
        %v3378 = vpow.pop %v3377
        %v3379 = vmul.f32 %v3223, 1.442695
        %v3380 = vpow.pop %v3379
        %v3381 = vmul.f32 %v3224, 1.442695
        %v3382 = vpow.pop %v3381
        %v3383 = vmul.f32 %v3225, 1.442695
        %v3384 = vpow.pop %v3383
        %v3385 = vmul.f32 %v3226, 1.442695
        %v3386 = vpow.pop %v3385
        %v3387 = vmul.f32 %v3227, 1.442695
        %v3388 = vpow.pop %v3387
        %v3389 = vmul.f32 %v3228, 1.442695
        %v3390 = vpow.pop %v3389
        %v3391 = vmul.f32 %v3229, 1.442695
        %v3392 = vpow.pop %v3391
        %v3393 = vmul.f32 %v3230, 1.442695
        %v3394 = vpow.pop %v3393
        %v3395 = vmul.f32 %v3231, 1.442695
        %v3396 = vpow.pop %v3395
        %v3397 = vmul.f32 %v3232, 1.442695
        %v3398 = vpow.pop %v3397
        %v3399 = vmul.f32 %v3233, 1.442695
        %v3400 = vpow.pop %v3399
        %v3401 = vmul.f32 %v3234, 1.442695
        %v3402 = vpow.pop %v3401
        %v3403 = vmul.f32 %v3235, 1.442695
        %v3404 = vpow.pop %v3403
        %v3405 = vmul.f32 %v3236, 1.442695
        %v3406 = vpow.pop %v3405
        %v3407 = vmul.f32 %v3237, 1.442695
        %v3408 = vpow.pop %v3407
        %v3409 = vmul.f32 %v3238, 1.442695
        %v3410 = vpow.pop %v3409
        %v3411 = vmul.f32 %v3239, 1.442695
        %v3412 = vpow.pop %v3411
        %v3413 = vmul.f32 %v3240, 1.442695
        %v3414 = vpow.pop %v3413
        %v3415 = vmul.f32 %v3241, 1.442695
        %v3416 = vpow.pop %v3415
        %v3417 = vmul.f32 %v3242, 1.442695
        %v3418 = vpow.pop %v3417
        %v3419 = vmul.f32 %v3243, 1.442695
        %v3420 = vpow.pop %v3419
        %v3421 = vmul.f32 %v3244, 1.442695
        %v3422 = vpow.pop %v3421
        %v3423 = vmul.f32 %v3245, 1.442695
        %v3424 = vpow.pop %v3423
        %v3425 = vmul.f32 %v3246, 1.442695
        %v3426 = vpow.pop %v3425
        %v3427 = vmul.f32 %v3247, 1.442695
        %v3428 = vpow.pop %v3427
        %v3429 = vmul.f32 %v3248, 1.442695
        %v3430 = vpow.pop %v3429
        %v3431 = vmul.f32 %v3249, 1.442695
        %v3432 = vpow.pop %v3431
        %v3433 = vmul.f32 %v3250, 1.442695
        %v3434 = vpow.pop %v3433
        %v3435 = vmul.f32 %v3251, 1.442695
        %v3436 = vpow.pop %v3435
        %v3437 = vmul.f32 %v3252, 1.442695
        %v3438 = vpow.pop %v3437
        %v3439 = vmul.f32 %v3253, 1.442695
        %v3440 = vpow.pop %v3439
        %v3441 = vmul.f32 %v3254, 1.442695
        %v3442 = vpow.pop %v3441
        %v3443 = vmul.f32 %v3255, 1.442695
        %v3444 = vpow.pop %v3443
        %v3445 = vmul.f32 %v3256, 1.442695
        %v3446 = vpow.pop %v3445
        %v3447 = vmul.f32 %v3257, 1.442695
        %v3448 = vpow.pop %v3447
        %v3449 = vmul.f32 %v3258, 1.442695
        %v3450 = vpow.pop %v3449
        %v3451 = vmul.f32 %v3259, 1.442695
        %v3452 = vpow.pop %v3451
        %v3453 = vmul.f32 %v3260, 1.442695
        %v3454 = vpow.pop %v3453
        %v3455 = vmul.f32 %v3261, 1.442695
        %v3456 = vpow.pop %v3455
        %v3457 = vmul.f32 %v3262, 1.442695
        %v3458 = vpow.pop %v3457
        %v3459 = vmul.f32 %v3263, 1.442695
        %v3460 = vpow.pop %v3459
        %v3461 = vmul.f32 %v3264, 1.442695
        %v3462 = vpow.pop %v3461
        %v3463 = vmul.f32 %v3265, 1.442695
        %v3464 = vpow.pop %v3463
        %v3465 = vmul.f32 %v3266, 1.442695
        %v3466 = vpow.pop %v3465
        %v3467 = vmul.f32 %v3267, 1.442695
        %v3468 = vpow.pop %v3467
        %v3469 = vmul.f32 %v3268, 1.442695
        %v3470 = vpow.pop %v3469
        %v3471 = vmul.f32 %v3269, 1.442695
        %v3472 = vpow.pop %v3471
        %v3473 = vmul.f32 %v3270, 1.442695
        %v3474 = vpow.pop %v3473
        %v3475 = vmul.f32 %v3271, 1.442695
        %v3476 = vpow.pop %v3475
        %v3477 = vmul.f32 %v3272, 1.442695
        %v3478 = vpow.pop %v3477
        %v3479 = vmul.f32 %v3273, 1.442695
        %v3480 = vpow.pop %v3479
        %v3481 = vmul.f32 %v3274, 1.442695
        %v3482 = vpow.pop %v3481
        %v3483 = vmul.f32 %v3275, 1.442695
        %v3484 = vpow.pop %v3483
        %v3485 = vmul.f32 %v3276, 1.442695
        %v3486 = vpow.pop %v3485
        %v3487 = vmul.f32 %v3277, 1.442695
        %v3488 = vpow.pop %v3487
        %v3489 = vmul.f32 %v3278, 1.442695
        %v3490 = vpow.pop %v3489
        %v3491 = vmul.f32 %v3279, 1.442695
        %v3492 = vpow.pop %v3491
        %v3493 = vmul.f32 %v3280, 1.442695
        %v3494 = vpow.pop %v3493
        %v3495 = vmul.f32 %v3281, 1.442695
        %v3496 = vpow.pop %v3495
        %v3497 = vmul.f32 %v3282, 1.442695
        %v3498 = vpow.pop %v3497
        %v3499 = vmul.f32 %v3283, 1.442695
        %v3500 = vpow.pop %v3499
        %v3501 = vmul.f32 %v3284, 1.442695
        %v3502 = vpow.pop %v3501
        %v3503 = vmul.f32 %v3285, 1.442695
        %v3504 = vpow.pop %v3503
        %v3505 = vmul.f32 %v3286, 1.442695
        %v3506 = vpow.pop %v3505
        %v3507 = vmul.f32 %v3287, 1.442695
        %v3508 = vpow.pop %v3507
        %v3509 = vmul.f32 %v3288, 1.442695
        %v3510 = vpow.pop %v3509
        %v3511 = vmul.f32 %v3289, 1.442695
        %v3512 = vpow.pop %v3511
        %v3513 = vmul.f32 %v3290, 1.442695
        %v3514 = vpow.pop %v3513
        %v3515 = vmul.f32 %v3291, 1.442695
        %v3516 = vpow.pop %v3515
        %v3517 = vmul.f32 %v3292, 1.442695
        %v3518 = vpow.pop %v3517
        %v3519 = vmul.f32 %v3293, 1.442695
        %v3520 = vpow.pop %v3519
        %v3521 = vmul.f32 %v3294, 1.442695
        %v3522 = vpow.pop %v3521
        %v3523 = vmul.f32 %v3295, 1.442695
        %v3524 = vpow.pop %v3523
        %v3525 = vmul.f32 %v3296, 1.442695
        %v3526 = vpow.pop %v3525
        %v3527 = vmul.f32 %v3297, 1.442695
        %v3528 = vpow.pop %v3527
        %v3529 = vmul.f32 %v3298, 1.442695
        %v3530 = vpow.pop %v3529
        %v3531 = vmul.f32 %v3299, 1.442695
        %v3532 = vpow.pop %v3531
        %v3533 = vmul.f32 %v3300, 1.442695
        %v3534 = vpow.pop %v3533
        %v3535 = vmul.f32 %v3301, 1.442695
        %v3536 = vpow.pop %v3535
        %v3537 = vmul.f32 %v3302, 1.442695
        %v3538 = vpow.pop %v3537
        %v3539 = vmul.f32 %v3303, 1.442695
        %v3540 = vpow.pop %v3539
        %v3541 = vmul.f32 %v3304, 1.442695
        %v3542 = vpow.pop %v3541
        %v3543 = vmul.f32 %v3305, 1.442695
        %v3544 = vpow.pop %v3543
        %v3545 = vmul.f32 %v3306, 1.442695
        %v3546 = vpow.pop %v3545
        %v3547 = vmul.f32 %v3307, 1.442695
        %v3548 = vpow.pop %v3547
        %v3549 = vmul.f32 %v3308, 1.442695
        %v3550 = vpow.pop %v3549
        %v3551 = vmul.f32 %v3309, 1.442695
        %v3552 = vpow.pop %v3551
        %v3553 = vmul.f32 %v3310, 1.442695
        %v3554 = vpow.pop %v3553
        %v3555 = vmul.f32 %v3311, 1.442695
        %v3556 = vpow.pop %v3555
        %v3557 = vmul.f32 %v3312, 1.442695
        %v3558 = vpow.pop %v3557
        %v3559 = vmul.f32 %v3313, 1.442695
        %v3560 = vpow.pop %v3559
        %v3561 = vmul.f32 %v3314, 1.442695
        %v3562 = vpow.pop %v3561
        %v3563 = vmul.f32 %v3315, 1.442695
        %v3564 = vpow.pop %v3563
        %v3565 = vmul.f32 %v3316, 1.442695
        %v3566 = vpow.pop %v3565
        %v3567 = vmul.f32 %v3317, 1.442695
        %v3568 = vpow.pop %v3567
        %v3569 = vmul.f32 %v3318, 1.442695
        %v3570 = vpow.pop %v3569
        %v3571 = vmul.f32 %v3319, 1.442695
        %v3572 = vpow.pop %v3571
        %v3573 = vmul.f32 %v3320, 1.442695
        %v3574 = vpow.pop %v3573
        %v3575 = vmul.f32 %v3321, 1.442695
        %v3576 = vpow.pop %v3575
        %v3577 = vmul.f32 %v3322, 1.442695
        %v3578 = vpow.pop %v3577
        %v3579 = vadd.f32 %v3324, %v3326
        %v3580 = vadd.f32 %v3579, %v3328
        %v3581 = vadd.f32 %v3580, %v3330
        %3582 = vadd.xlane.f32.xlu0 %v3581
        %v3583 = vpop.xlane.xlu0 %3582
        %v3584 = vadd.f32 %v3332, %v3334
        %v3585 = vadd.f32 %v3584, %v3336
        %v3586 = vadd.f32 %v3585, %v3338
        %3587 = vadd.xlane.f32.xlu0 %v3586
        %v3588 = vpop.xlane.xlu0 %3587
        %v3589 = vadd.f32 %v3340, %v3342
        %v3590 = vadd.f32 %v3589, %v3344
        %v3591 = vadd.f32 %v3590, %v3346
        %3592 = vadd.xlane.f32.xlu0 %v3591
        %v3593 = vpop.xlane.xlu0 %3592
        %v3594 = vadd.f32 %v3348, %v3350
        %v3595 = vadd.f32 %v3594, %v3352
        %v3596 = vadd.f32 %v3595, %v3354
        %3597 = vadd.xlane.f32.xlu0 %v3596
        %v3598 = vpop.xlane.xlu0 %3597
        %v3599 = vadd.f32 %v3356, %v3358
        %v3600 = vadd.f32 %v3599, %v3360
        %v3601 = vadd.f32 %v3600, %v3362
        %3602 = vadd.xlane.f32.xlu0 %v3601
        %v3603 = vpop.xlane.xlu0 %3602
        %v3604 = vadd.f32 %v3364, %v3366
        %v3605 = vadd.f32 %v3604, %v3368
        %v3606 = vadd.f32 %v3605, %v3370
        %3607 = vadd.xlane.f32.xlu0 %v3606
        %v3608 = vpop.xlane.xlu0 %3607
        %v3609 = vadd.f32 %v3372, %v3374
        %v3610 = vadd.f32 %v3609, %v3376
        %v3611 = vadd.f32 %v3610, %v3378
        %3612 = vadd.xlane.f32.xlu0 %v3611
        %v3613 = vpop.xlane.xlu0 %3612
        %v3614 = vadd.f32 %v3380, %v3382
        %v3615 = vadd.f32 %v3614, %v3384
        %v3616 = vadd.f32 %v3615, %v3386
        %3617 = vadd.xlane.f32.xlu0 %v3616
        %v3618 = vpop.xlane.xlu0 %3617
        %v3619 = vadd.f32 %v3388, %v3390
        %v3620 = vadd.f32 %v3619, %v3392
        %v3621 = vadd.f32 %v3620, %v3394
        %3622 = vadd.xlane.f32.xlu0 %v3621
        %v3623 = vpop.xlane.xlu0 %3622
        %v3624 = vadd.f32 %v3396, %v3398
        %v3625 = vadd.f32 %v3624, %v3400
        %v3626 = vadd.f32 %v3625, %v3402
        %3627 = vadd.xlane.f32.xlu0 %v3626
        %v3628 = vpop.xlane.xlu0 %3627
        %v3629 = vadd.f32 %v3404, %v3406
        %v3630 = vadd.f32 %v3629, %v3408
        %v3631 = vadd.f32 %v3630, %v3410
        %3632 = vadd.xlane.f32.xlu0 %v3631
        %v3633 = vpop.xlane.xlu0 %3632
        %v3634 = vadd.f32 %v3412, %v3414
        %v3635 = vadd.f32 %v3634, %v3416
        %v3636 = vadd.f32 %v3635, %v3418
        %3637 = vadd.xlane.f32.xlu0 %v3636
        %v3638 = vpop.xlane.xlu0 %3637
        %v3639 = vadd.f32 %v3420, %v3422
        %v3640 = vadd.f32 %v3639, %v3424
        %v3641 = vadd.f32 %v3640, %v3426
        %3642 = vadd.xlane.f32.xlu0 %v3641
        %v3643 = vpop.xlane.xlu0 %3642
        %v3644 = vadd.f32 %v3428, %v3430
        %v3645 = vadd.f32 %v3644, %v3432
        %v3646 = vadd.f32 %v3645, %v3434
        %3647 = vadd.xlane.f32.xlu0 %v3646
        %v3648 = vpop.xlane.xlu0 %3647
        %v3649 = vadd.f32 %v3436, %v3438
        %v3650 = vadd.f32 %v3649, %v3440
        %v3651 = vadd.f32 %v3650, %v3442
        %3652 = vadd.xlane.f32.xlu0 %v3651
        %v3653 = vpop.xlane.xlu0 %3652
        %v3654 = vadd.f32 %v3444, %v3446
        %v3655 = vadd.f32 %v3654, %v3448
        %v3656 = vadd.f32 %v3655, %v3450
        %3657 = vadd.xlane.f32.xlu0 %v3656
        %v3658 = vpop.xlane.xlu0 %3657
        %v3659 = vadd.f32 %v3452, %v3454
        %v3660 = vadd.f32 %v3659, %v3456
        %v3661 = vadd.f32 %v3660, %v3458
        %3662 = vadd.xlane.f32.xlu0 %v3661
        %v3663 = vpop.xlane.xlu0 %3662
        %v3664 = vadd.f32 %v3460, %v3462
        %v3665 = vadd.f32 %v3664, %v3464
        %v3666 = vadd.f32 %v3665, %v3466
        %3667 = vadd.xlane.f32.xlu0 %v3666
        %v3668 = vpop.xlane.xlu0 %3667
        %v3669 = vadd.f32 %v3468, %v3470
        %v3670 = vadd.f32 %v3669, %v3472
        %v3671 = vadd.f32 %v3670, %v3474
        %3672 = vadd.xlane.f32.xlu0 %v3671
        %v3673 = vpop.xlane.xlu0 %3672
        %v3674 = vadd.f32 %v3476, %v3478
        %v3675 = vadd.f32 %v3674, %v3480
        %v3676 = vadd.f32 %v3675, %v3482
        %3677 = vadd.xlane.f32.xlu0 %v3676
        %v3678 = vpop.xlane.xlu0 %3677
        %v3679 = vadd.f32 %v3484, %v3486
        %v3680 = vadd.f32 %v3679, %v3488
        %v3681 = vadd.f32 %v3680, %v3490
        %3682 = vadd.xlane.f32.xlu0 %v3681
        %v3683 = vpop.xlane.xlu0 %3682
        %v3684 = vadd.f32 %v3492, %v3494
        %v3685 = vadd.f32 %v3684, %v3496
        %v3686 = vadd.f32 %v3685, %v3498
        %3687 = vadd.xlane.f32.xlu0 %v3686
        %v3688 = vpop.xlane.xlu0 %3687
        %v3689 = vadd.f32 %v3500, %v3502
        %v3690 = vadd.f32 %v3689, %v3504
        %v3691 = vadd.f32 %v3690, %v3506
        %3692 = vadd.xlane.f32.xlu0 %v3691
        %v3693 = vpop.xlane.xlu0 %3692
        %v3694 = vadd.f32 %v3508, %v3510
        %v3695 = vadd.f32 %v3694, %v3512
        %v3696 = vadd.f32 %v3695, %v3514
        %3697 = vadd.xlane.f32.xlu0 %v3696
        %v3698 = vpop.xlane.xlu0 %3697
        %v3699 = vadd.f32 %v3516, %v3518
        %v3700 = vadd.f32 %v3699, %v3520
        %v3701 = vadd.f32 %v3700, %v3522
        %3702 = vadd.xlane.f32.xlu0 %v3701
        %v3703 = vpop.xlane.xlu0 %3702
        %v3704 = vadd.f32 %v3524, %v3526
        %v3705 = vadd.f32 %v3704, %v3528
        %v3706 = vadd.f32 %v3705, %v3530
        %3707 = vadd.xlane.f32.xlu0 %v3706
        %v3708 = vpop.xlane.xlu0 %3707
        %v3709 = vadd.f32 %v3532, %v3534
        %v3710 = vadd.f32 %v3709, %v3536
        %v3711 = vadd.f32 %v3710, %v3538
        %3712 = vadd.xlane.f32.xlu0 %v3711
        %v3713 = vpop.xlane.xlu0 %3712
        %v3714 = vadd.f32 %v3540, %v3542
        %v3715 = vadd.f32 %v3714, %v3544
        %v3716 = vadd.f32 %v3715, %v3546
        %3717 = vadd.xlane.f32.xlu0 %v3716
        %v3718 = vpop.xlane.xlu0 %3717
        %v3719 = vadd.f32 %v3548, %v3550
        %v3720 = vadd.f32 %v3719, %v3552
        %v3721 = vadd.f32 %v3720, %v3554
        %3722 = vadd.xlane.f32.xlu0 %v3721
        %v3723 = vpop.xlane.xlu0 %3722
        %v3724 = vadd.f32 %v3556, %v3558
        %v3725 = vadd.f32 %v3724, %v3560
        %v3726 = vadd.f32 %v3725, %v3562
        %3727 = vadd.xlane.f32.xlu0 %v3726
        %v3728 = vpop.xlane.xlu0 %3727
        %v3729 = vadd.f32 %v3564, %v3566
        %v3730 = vadd.f32 %v3729, %v3568
        %v3731 = vadd.f32 %v3730, %v3570
        %3732 = vadd.xlane.f32.xlu0 %v3731
        %v3733 = vpop.xlane.xlu0 %3732
        %v3734 = vadd.f32 %v3572, %v3574
        %v3735 = vadd.f32 %v3734, %v3576
        %v3736 = vadd.f32 %v3735, %v3578
        %3737 = vadd.xlane.f32.xlu0 %v3736
        %v3738 = vpop.xlane.xlu0 %3737
        %v3739 = vadd.f32 %v3003, %v3583
        %v3740 = vadd.f32 %v3004, %v3588
        %v3741 = vadd.f32 %v3005, %v3593
        %v3742 = vadd.f32 %v3006, %v3598
        %v3743 = vadd.f32 %v3007, %v3603
        %v3744 = vadd.f32 %v3008, %v3608
        %v3745 = vadd.f32 %v3009, %v3613
        %v3746 = vadd.f32 %v3010, %v3618
        %v3747 = vadd.f32 %v3011, %v3623
        %v3748 = vadd.f32 %v3012, %v3628
        %v3749 = vadd.f32 %v3013, %v3633
        %v3750 = vadd.f32 %v3014, %v3638
        %v3751 = vadd.f32 %v3015, %v3643
        %v3752 = vadd.f32 %v3016, %v3648
        %v3753 = vadd.f32 %v3017, %v3653
        %v3754 = vadd.f32 %v3018, %v3658
        %v3755 = vadd.f32 %v3019, %v3663
        %v3756 = vadd.f32 %v3020, %v3668
        %v3757 = vadd.f32 %v3021, %v3673
        %v3758 = vadd.f32 %v3022, %v3678
        %v3759 = vadd.f32 %v3023, %v3683
        %v3760 = vadd.f32 %v3024, %v3688
        %v3761 = vadd.f32 %v3025, %v3693
        %v3762 = vadd.f32 %v3026, %v3698
        %v3763 = vadd.f32 %v3027, %v3703
        %v3764 = vadd.f32 %v3028, %v3708
        %v3765 = vadd.f32 %v3029, %v3713
        %v3766 = vadd.f32 %v3030, %v3718
        %v3767 = vadd.f32 %v3031, %v3723
        %v3768 = vadd.f32 %v3032, %v3728
        %v3769 = vadd.f32 %v3033, %v3733
        %v3770 = vadd.f32 %v3034, %v3738
        %vm3771 = vcmask 7168
        %3772 = vst.msk [vmem:[#allocation3] sm:$0xff] %vm3771, %v2875
        %3773 = vst.msk [vmem:[#allocation3 + $0x8] sm:$0xff] %vm3771, %v2876
        %3774 = vst.msk [vmem:[#allocation3 + $0x10] sm:$0xff] %vm3771, %v2877
        %3775 = vst.msk [vmem:[#allocation3 + $0x18] sm:$0xff] %vm3771, %v2878
        %3776 = vst.msk [vmem:[#allocation3 + $0x20] sm:$0xff] %vm3771, %v2879
        %3777 = vst.msk [vmem:[#allocation3 + $0x28] sm:$0xff] %vm3771, %v2880
        %3778 = vst.msk [vmem:[#allocation3 + $0x30] sm:$0xff] %vm3771, %v2881
        %3779 = vst.msk [vmem:[#allocation3 + $0x38] sm:$0xff] %vm3771, %v2882
        %3780 = vst.msk [vmem:[#allocation3 + $0x40] sm:$0xff] %vm3771, %v2883
        %3781 = vst.msk [vmem:[#allocation3 + $0x48] sm:$0xff] %vm3771, %v2884
        %3782 = vst.msk [vmem:[#allocation3 + $0x50] sm:$0xff] %vm3771, %v2885
        %3783 = vst.msk [vmem:[#allocation3 + $0x58] sm:$0xff] %vm3771, %v2886
        %3784 = vst.msk [vmem:[#allocation3 + $0x60] sm:$0xff] %vm3771, %v2887
        %3785 = vst.msk [vmem:[#allocation3 + $0x68] sm:$0xff] %vm3771, %v2888
        %3786 = vst.msk [vmem:[#allocation3 + $0x70] sm:$0xff] %vm3771, %v2889
        %3787 = vst.msk [vmem:[#allocation3 + $0x78] sm:$0xff] %vm3771, %v2890
        %3788 = vst.msk [vmem:[#allocation3 + $0x80] sm:$0xff] %vm3771, %v2891
        %3789 = vst.msk [vmem:[#allocation3 + $0x88] sm:$0xff] %vm3771, %v2892
        %3790 = vst.msk [vmem:[#allocation3 + $0x90] sm:$0xff] %vm3771, %v2893
        %3791 = vst.msk [vmem:[#allocation3 + $0x98] sm:$0xff] %vm3771, %v2894
        %3792 = vst.msk [vmem:[#allocation3 + $0xa0] sm:$0xff] %vm3771, %v2895
        %3793 = vst.msk [vmem:[#allocation3 + $0xa8] sm:$0xff] %vm3771, %v2896
        %3794 = vst.msk [vmem:[#allocation3 + $0xb0] sm:$0xff] %vm3771, %v2897
        %3795 = vst.msk [vmem:[#allocation3 + $0xb8] sm:$0xff] %vm3771, %v2898
        %3796 = vst.msk [vmem:[#allocation3 + $0xc0] sm:$0xff] %vm3771, %v2899
        %3797 = vst.msk [vmem:[#allocation3 + $0xc8] sm:$0xff] %vm3771, %v2900
        %3798 = vst.msk [vmem:[#allocation3 + $0xd0] sm:$0xff] %vm3771, %v2901
        %3799 = vst.msk [vmem:[#allocation3 + $0xd8] sm:$0xff] %vm3771, %v2902
        %3800 = vst.msk [vmem:[#allocation3 + $0xe0] sm:$0xff] %vm3771, %v2903
        %3801 = vst.msk [vmem:[#allocation3 + $0xe8] sm:$0xff] %vm3771, %v2904
        %3802 = vst.msk [vmem:[#allocation3 + $0xf0] sm:$0xff] %vm3771, %v2905
        %3803 = vst.msk [vmem:[#allocation3 + $0xf8] sm:$0xff] %vm3771, %v2906
        %3804 = vst.msk [vmem:[#allocation4] sm:$0xff] %vm3771, %v3739
        %3805 = vst.msk [vmem:[#allocation4 + $0x8] sm:$0xff] %vm3771, %v3740
        %3806 = vst.msk [vmem:[#allocation4 + $0x10] sm:$0xff] %vm3771, %v3741
        %3807 = vst.msk [vmem:[#allocation4 + $0x18] sm:$0xff] %vm3771, %v3742
        %3808 = vst.msk [vmem:[#allocation4 + $0x20] sm:$0xff] %vm3771, %v3743
        %3809 = vst.msk [vmem:[#allocation4 + $0x28] sm:$0xff] %vm3771, %v3744
        %3810 = vst.msk [vmem:[#allocation4 + $0x30] sm:$0xff] %vm3771, %v3745
        %3811 = vst.msk [vmem:[#allocation4 + $0x38] sm:$0xff] %vm3771, %v3746
        %3812 = vst.msk [vmem:[#allocation4 + $0x40] sm:$0xff] %vm3771, %v3747
        %3813 = vst.msk [vmem:[#allocation4 + $0x48] sm:$0xff] %vm3771, %v3748
        %3814 = vst.msk [vmem:[#allocation4 + $0x50] sm:$0xff] %vm3771, %v3749
        %3815 = vst.msk [vmem:[#allocation4 + $0x58] sm:$0xff] %vm3771, %v3750
        %3816 = vst.msk [vmem:[#allocation4 + $0x60] sm:$0xff] %vm3771, %v3751
        %3817 = vst.msk [vmem:[#allocation4 + $0x68] sm:$0xff] %vm3771, %v3752
        %3818 = vst.msk [vmem:[#allocation4 + $0x70] sm:$0xff] %vm3771, %v3753
        %3819 = vst.msk [vmem:[#allocation4 + $0x78] sm:$0xff] %vm3771, %v3754
        %3820 = vst.msk [vmem:[#allocation4 + $0x80] sm:$0xff] %vm3771, %v3755
        %3821 = vst.msk [vmem:[#allocation4 + $0x88] sm:$0xff] %vm3771, %v3756
        %3822 = vst.msk [vmem:[#allocation4 + $0x90] sm:$0xff] %vm3771, %v3757
        %3823 = vst.msk [vmem:[#allocation4 + $0x98] sm:$0xff] %vm3771, %v3758
        %3824 = vst.msk [vmem:[#allocation4 + $0xa0] sm:$0xff] %vm3771, %v3759
        %3825 = vst.msk [vmem:[#allocation4 + $0xa8] sm:$0xff] %vm3771, %v3760
        %3826 = vst.msk [vmem:[#allocation4 + $0xb0] sm:$0xff] %vm3771, %v3761
        %3827 = vst.msk [vmem:[#allocation4 + $0xb8] sm:$0xff] %vm3771, %v3762
        %3828 = vst.msk [vmem:[#allocation4 + $0xc0] sm:$0xff] %vm3771, %v3763
        %3829 = vst.msk [vmem:[#allocation4 + $0xc8] sm:$0xff] %vm3771, %v3764
        %3830 = vst.msk [vmem:[#allocation4 + $0xd0] sm:$0xff] %vm3771, %v3765
        %3831 = vst.msk [vmem:[#allocation4 + $0xd8] sm:$0xff] %vm3771, %v3766
        %3832 = vst.msk [vmem:[#allocation4 + $0xe0] sm:$0xff] %vm3771, %v3767
        %3833 = vst.msk [vmem:[#allocation4 + $0xe8] sm:$0xff] %vm3771, %v3768
        %3834 = vst.msk [vmem:[#allocation4 + $0xf0] sm:$0xff] %vm3771, %v3769
        %3835 = vst.msk [vmem:[#allocation4 + $0xf8] sm:$0xff] %vm3771, %v3770
        %p3836 = scmp.eq.s32.totalorder %s32, 1
        // Predicated region
        $region73: #{tpu_custom_call.1} parent=43 // pred_check
          %p3837 = pneg %p3836
        $region74: #{tpu_custom_call.1} parent=43 // pred_check_branch
          %3839 = sbr.rel (%p3837) target = $region76
        $region75: #{tpu_custom_call.1} parent=43 // pred_region
          %v3840 = vlog2.pop %v3739
          %v3841 = vmul.f32 %v3840, 0.6931472
          %v3842 = vlog2.pop %v3740
          %v3843 = vmul.f32 %v3842, 0.6931472
          %v3844 = vlog2.pop %v3741
          %v3845 = vmul.f32 %v3844, 0.6931472
          %v3846 = vlog2.pop %v3742
          %v3847 = vmul.f32 %v3846, 0.6931472
          %v3848 = vlog2.pop %v3743
          %v3849 = vmul.f32 %v3848, 0.6931472
          %v3850 = vlog2.pop %v3744
          %v3851 = vmul.f32 %v3850, 0.6931472
          %v3852 = vlog2.pop %v3745
          %v3853 = vmul.f32 %v3852, 0.6931472
          %v3854 = vlog2.pop %v3746
          %v3855 = vmul.f32 %v3854, 0.6931472
          %v3856 = vlog2.pop %v3747
          %v3857 = vmul.f32 %v3856, 0.6931472
          %v3858 = vlog2.pop %v3748
          %v3859 = vmul.f32 %v3858, 0.6931472
          %v3860 = vlog2.pop %v3749
          %v3861 = vmul.f32 %v3860, 0.6931472
          %v3862 = vlog2.pop %v3750
          %v3863 = vmul.f32 %v3862, 0.6931472
          %v3864 = vlog2.pop %v3751
          %v3865 = vmul.f32 %v3864, 0.6931472
          %v3866 = vlog2.pop %v3752
          %v3867 = vmul.f32 %v3866, 0.6931472
          %v3868 = vlog2.pop %v3753
          %v3869 = vmul.f32 %v3868, 0.6931472
          %v3870 = vlog2.pop %v3754
          %v3871 = vmul.f32 %v3870, 0.6931472
          %v3872 = vlog2.pop %v3755
          %v3873 = vmul.f32 %v3872, 0.6931472
          %v3874 = vlog2.pop %v3756
          %v3875 = vmul.f32 %v3874, 0.6931472
          %v3876 = vlog2.pop %v3757
          %v3877 = vmul.f32 %v3876, 0.6931472
          %v3878 = vlog2.pop %v3758
          %v3879 = vmul.f32 %v3878, 0.6931472
          %v3880 = vlog2.pop %v3759
          %v3881 = vmul.f32 %v3880, 0.6931472
          %v3882 = vlog2.pop %v3760
          %v3883 = vmul.f32 %v3882, 0.6931472
          %v3884 = vlog2.pop %v3761
          %v3885 = vmul.f32 %v3884, 0.6931472
          %v3886 = vlog2.pop %v3762
          %v3887 = vmul.f32 %v3886, 0.6931472
          %v3888 = vlog2.pop %v3763
          %v3889 = vmul.f32 %v3888, 0.6931472
          %v3890 = vlog2.pop %v3764
          %v3891 = vmul.f32 %v3890, 0.6931472
          %v3892 = vlog2.pop %v3765
          %v3893 = vmul.f32 %v3892, 0.6931472
          %v3894 = vlog2.pop %v3766
          %v3895 = vmul.f32 %v3894, 0.6931472
          %v3896 = vlog2.pop %v3767
          %v3897 = vmul.f32 %v3896, 0.6931472
          %v3898 = vlog2.pop %v3768
          %v3899 = vmul.f32 %v3898, 0.6931472
          %v3900 = vlog2.pop %v3769
          %v3901 = vmul.f32 %v3900, 0.6931472
          %v3902 = vlog2.pop %v3770
          %v3903 = vmul.f32 %v3902, 0.6931472
          %v3904 = vadd.f32 %v2875, %v3841
          %v3905 = vadd.f32 %v2876, %v3843
          %v3906 = vadd.f32 %v2877, %v3845
          %v3907 = vadd.f32 %v2878, %v3847
          %v3908 = vadd.f32 %v2879, %v3849
          %v3909 = vadd.f32 %v2880, %v3851
          %v3910 = vadd.f32 %v2881, %v3853
          %v3911 = vadd.f32 %v2882, %v3855
          %v3912 = vadd.f32 %v2883, %v3857
          %v3913 = vadd.f32 %v2884, %v3859
          %v3914 = vadd.f32 %v2885, %v3861
          %v3915 = vadd.f32 %v2886, %v3863
          %v3916 = vadd.f32 %v2887, %v3865
          %v3917 = vadd.f32 %v2888, %v3867
          %v3918 = vadd.f32 %v2889, %v3869
          %v3919 = vadd.f32 %v2890, %v3871
          %v3920 = vadd.f32 %v2891, %v3873
          %v3921 = vadd.f32 %v2892, %v3875
          %v3922 = vadd.f32 %v2893, %v3877
          %v3923 = vadd.f32 %v2894, %v3879
          %v3924 = vadd.f32 %v2895, %v3881
          %v3925 = vadd.f32 %v2896, %v3883
          %v3926 = vadd.f32 %v2897, %v3885
          %v3927 = vadd.f32 %v2898, %v3887
          %v3928 = vadd.f32 %v2899, %v3889
          %v3929 = vadd.f32 %v2900, %v3891
          %v3930 = vadd.f32 %v2901, %v3893
          %v3931 = vadd.f32 %v2902, %v3895
          %v3932 = vadd.f32 %v2903, %v3897
          %v3933 = vadd.f32 %v2904, %v3899
          %v3934 = vadd.f32 %v2905, %v3901
          %v3935 = vadd.f32 %v2906, %v3903
          %v3936 = vld [vmem:[%s422] sm:$0xff]
          %v3937 = vld [vmem:[%s422 + $0x8] sm:$0xff]
          %v3938 = vld [vmem:[%s422 + $0x10] sm:$0xff]
          %v3939 = vld [vmem:[%s422 + $0x18] sm:$0xff]
          %v3940 = vld [vmem:[%s422 + $0x20] sm:$0xff]
          %v3941 = vld [vmem:[%s422 + $0x28] sm:$0xff]
          %v3942 = vld [vmem:[%s422 + $0x30] sm:$0xff]
          %v3943 = vld [vmem:[%s422 + $0x38] sm:$0xff]
          %v3944 = vld [vmem:[%s422 + $0x40] sm:$0xff]
          %v3945 = vld [vmem:[%s422 + $0x48] sm:$0xff]
          %v3946 = vld [vmem:[%s422 + $0x50] sm:$0xff]
          %v3947 = vld [vmem:[%s422 + $0x58] sm:$0xff]
          %v3948 = vld [vmem:[%s422 + $0x60] sm:$0xff]
          %v3949 = vld [vmem:[%s422 + $0x68] sm:$0xff]
          %v3950 = vld [vmem:[%s422 + $0x70] sm:$0xff]
          %v3951 = vld [vmem:[%s422 + $0x78] sm:$0xff]
          %v3952 = vld [vmem:[%s422 + $0x80] sm:$0xff]
          %v3953 = vld [vmem:[%s422 + $0x88] sm:$0xff]
          %v3954 = vld [vmem:[%s422 + $0x90] sm:$0xff]
          %v3955 = vld [vmem:[%s422 + $0x98] sm:$0xff]
          %v3956 = vld [vmem:[%s422 + $0xa0] sm:$0xff]
          %v3957 = vld [vmem:[%s422 + $0xa8] sm:$0xff]
          %v3958 = vld [vmem:[%s422 + $0xb0] sm:$0xff]
          %v3959 = vld [vmem:[%s422 + $0xb8] sm:$0xff]
          %v3960 = vld [vmem:[%s422 + $0xc0] sm:$0xff]
          %v3961 = vld [vmem:[%s422 + $0xc8] sm:$0xff]
          %v3962 = vld [vmem:[%s422 + $0xd0] sm:$0xff]
          %v3963 = vld [vmem:[%s422 + $0xd8] sm:$0xff]
          %v3964 = vld [vmem:[%s422 + $0xe0] sm:$0xff]
          %v3965 = vld [vmem:[%s422 + $0xe8] sm:$0xff]
          %v3966 = vld [vmem:[%s422 + $0xf0] sm:$0xff]
          %v3967 = vld [vmem:[%s422 + $0xf8] sm:$0xff]
          %v3968 = vld [vmem:[%s422 + $0x100] sm:$0xff]
          %v3969 = vld [vmem:[%s422 + $0x108] sm:$0xff]
          %v3970 = vld [vmem:[%s422 + $0x110] sm:$0xff]
          %v3971 = vld [vmem:[%s422 + $0x118] sm:$0xff]
          %v3972 = vld [vmem:[%s422 + $0x120] sm:$0xff]
          %v3973 = vld [vmem:[%s422 + $0x128] sm:$0xff]
          %v3974 = vld [vmem:[%s422 + $0x130] sm:$0xff]
          %v3975 = vld [vmem:[%s422 + $0x138] sm:$0xff]
          %v3976 = vld [vmem:[%s422 + $0x140] sm:$0xff]
          %v3977 = vld [vmem:[%s422 + $0x148] sm:$0xff]
          %v3978 = vld [vmem:[%s422 + $0x150] sm:$0xff]
          %v3979 = vld [vmem:[%s422 + $0x158] sm:$0xff]
          %v3980 = vld [vmem:[%s422 + $0x160] sm:$0xff]
          %v3981 = vld [vmem:[%s422 + $0x168] sm:$0xff]
          %v3982 = vld [vmem:[%s422 + $0x170] sm:$0xff]
          %v3983 = vld [vmem:[%s422 + $0x178] sm:$0xff]
          %v3984 = vld [vmem:[%s422 + $0x180] sm:$0xff]
          %v3985 = vld [vmem:[%s422 + $0x188] sm:$0xff]
          %v3986 = vld [vmem:[%s422 + $0x190] sm:$0xff]
          %v3987 = vld [vmem:[%s422 + $0x198] sm:$0xff]
          %v3988 = vld [vmem:[%s422 + $0x1a0] sm:$0xff]
          %v3989 = vld [vmem:[%s422 + $0x1a8] sm:$0xff]
          %v3990 = vld [vmem:[%s422 + $0x1b0] sm:$0xff]
          %v3991 = vld [vmem:[%s422 + $0x1b8] sm:$0xff]
          %v3992 = vld [vmem:[%s422 + $0x1c0] sm:$0xff]
          %v3993 = vld [vmem:[%s422 + $0x1c8] sm:$0xff]
          %v3994 = vld [vmem:[%s422 + $0x1d0] sm:$0xff]
          %v3995 = vld [vmem:[%s422 + $0x1d8] sm:$0xff]
          %v3996 = vld [vmem:[%s422 + $0x1e0] sm:$0xff]
          %v3997 = vld [vmem:[%s422 + $0x1e8] sm:$0xff]
          %v3998 = vld [vmem:[%s422 + $0x1f0] sm:$0xff]
          %v3999 = vld [vmem:[%s422 + $0x1f8] sm:$0xff]
          %v4000 = vld [vmem:[%s422 + $0x200] sm:$0xff]
          %v4001 = vld [vmem:[%s422 + $0x208] sm:$0xff]
          %v4002 = vld [vmem:[%s422 + $0x210] sm:$0xff]
          %v4003 = vld [vmem:[%s422 + $0x218] sm:$0xff]
          %v4004 = vld [vmem:[%s422 + $0x220] sm:$0xff]
          %v4005 = vld [vmem:[%s422 + $0x228] sm:$0xff]
          %v4006 = vld [vmem:[%s422 + $0x230] sm:$0xff]
          %v4007 = vld [vmem:[%s422 + $0x238] sm:$0xff]
          %v4008 = vld [vmem:[%s422 + $0x240] sm:$0xff]
          %v4009 = vld [vmem:[%s422 + $0x248] sm:$0xff]
          %v4010 = vld [vmem:[%s422 + $0x250] sm:$0xff]
          %v4011 = vld [vmem:[%s422 + $0x258] sm:$0xff]
          %v4012 = vld [vmem:[%s422 + $0x260] sm:$0xff]
          %v4013 = vld [vmem:[%s422 + $0x268] sm:$0xff]
          %v4014 = vld [vmem:[%s422 + $0x270] sm:$0xff]
          %v4015 = vld [vmem:[%s422 + $0x278] sm:$0xff]
          %v4016 = vld [vmem:[%s422 + $0x280] sm:$0xff]
          %v4017 = vld [vmem:[%s422 + $0x288] sm:$0xff]
          %v4018 = vld [vmem:[%s422 + $0x290] sm:$0xff]
          %v4019 = vld [vmem:[%s422 + $0x298] sm:$0xff]
          %v4020 = vld [vmem:[%s422 + $0x2a0] sm:$0xff]
          %v4021 = vld [vmem:[%s422 + $0x2a8] sm:$0xff]
          %v4022 = vld [vmem:[%s422 + $0x2b0] sm:$0xff]
          %v4023 = vld [vmem:[%s422 + $0x2b8] sm:$0xff]
          %v4024 = vld [vmem:[%s422 + $0x2c0] sm:$0xff]
          %v4025 = vld [vmem:[%s422 + $0x2c8] sm:$0xff]
          %v4026 = vld [vmem:[%s422 + $0x2d0] sm:$0xff]
          %v4027 = vld [vmem:[%s422 + $0x2d8] sm:$0xff]
          %v4028 = vld [vmem:[%s422 + $0x2e0] sm:$0xff]
          %v4029 = vld [vmem:[%s422 + $0x2e8] sm:$0xff]
          %v4030 = vld [vmem:[%s422 + $0x2f0] sm:$0xff]
          %v4031 = vld [vmem:[%s422 + $0x2f8] sm:$0xff]
          %v4032 = vld [vmem:[%s422 + $0x300] sm:$0xff]
          %v4033 = vld [vmem:[%s422 + $0x308] sm:$0xff]
          %v4034 = vld [vmem:[%s422 + $0x310] sm:$0xff]
          %v4035 = vld [vmem:[%s422 + $0x318] sm:$0xff]
          %v4036 = vld [vmem:[%s422 + $0x320] sm:$0xff]
          %v4037 = vld [vmem:[%s422 + $0x328] sm:$0xff]
          %v4038 = vld [vmem:[%s422 + $0x330] sm:$0xff]
          %v4039 = vld [vmem:[%s422 + $0x338] sm:$0xff]
          %v4040 = vld [vmem:[%s422 + $0x340] sm:$0xff]
          %v4041 = vld [vmem:[%s422 + $0x348] sm:$0xff]
          %v4042 = vld [vmem:[%s422 + $0x350] sm:$0xff]
          %v4043 = vld [vmem:[%s422 + $0x358] sm:$0xff]
          %v4044 = vld [vmem:[%s422 + $0x360] sm:$0xff]
          %v4045 = vld [vmem:[%s422 + $0x368] sm:$0xff]
          %v4046 = vld [vmem:[%s422 + $0x370] sm:$0xff]
          %v4047 = vld [vmem:[%s422 + $0x378] sm:$0xff]
          %v4048 = vld [vmem:[%s422 + $0x380] sm:$0xff]
          %v4049 = vld [vmem:[%s422 + $0x388] sm:$0xff]
          %v4050 = vld [vmem:[%s422 + $0x390] sm:$0xff]
          %v4051 = vld [vmem:[%s422 + $0x398] sm:$0xff]
          %v4052 = vld [vmem:[%s422 + $0x3a0] sm:$0xff]
          %v4053 = vld [vmem:[%s422 + $0x3a8] sm:$0xff]
          %v4054 = vld [vmem:[%s422 + $0x3b0] sm:$0xff]
          %v4055 = vld [vmem:[%s422 + $0x3b8] sm:$0xff]
          %v4056 = vld [vmem:[%s422 + $0x3c0] sm:$0xff]
          %v4057 = vld [vmem:[%s422 + $0x3c8] sm:$0xff]
          %v4058 = vld [vmem:[%s422 + $0x3d0] sm:$0xff]
          %v4059 = vld [vmem:[%s422 + $0x3d8] sm:$0xff]
          %v4060 = vld [vmem:[%s422 + $0x3e0] sm:$0xff]
          %v4061 = vld [vmem:[%s422 + $0x3e8] sm:$0xff]
          %v4062 = vld [vmem:[%s422 + $0x3f0] sm:$0xff]
          %v4063 = vld [vmem:[%s422 + $0x3f8] sm:$0xff]
          %v4064 = vld [vmem:[%s422 + $0x400] sm:$0xff]
          %v4065 = vld [vmem:[%s422 + $0x408] sm:$0xff]
          %v4066 = vld [vmem:[%s422 + $0x410] sm:$0xff]
          %v4067 = vld [vmem:[%s422 + $0x418] sm:$0xff]
          %v4068 = vld [vmem:[%s422 + $0x420] sm:$0xff]
          %v4069 = vld [vmem:[%s422 + $0x428] sm:$0xff]
          %v4070 = vld [vmem:[%s422 + $0x430] sm:$0xff]
          %v4071 = vld [vmem:[%s422 + $0x438] sm:$0xff]
          %v4072 = vld [vmem:[%s422 + $0x440] sm:$0xff]
          %v4073 = vld [vmem:[%s422 + $0x448] sm:$0xff]
          %v4074 = vld [vmem:[%s422 + $0x450] sm:$0xff]
          %v4075 = vld [vmem:[%s422 + $0x458] sm:$0xff]
          %v4076 = vld [vmem:[%s422 + $0x460] sm:$0xff]
          %v4077 = vld [vmem:[%s422 + $0x468] sm:$0xff]
          %v4078 = vld [vmem:[%s422 + $0x470] sm:$0xff]
          %v4079 = vld [vmem:[%s422 + $0x478] sm:$0xff]
          %v4080 = vld [vmem:[%s422 + $0x480] sm:$0xff]
          %v4081 = vld [vmem:[%s422 + $0x488] sm:$0xff]
          %v4082 = vld [vmem:[%s422 + $0x490] sm:$0xff]
          %v4083 = vld [vmem:[%s422 + $0x498] sm:$0xff]
          %v4084 = vld [vmem:[%s422 + $0x4a0] sm:$0xff]
          %v4085 = vld [vmem:[%s422 + $0x4a8] sm:$0xff]
          %v4086 = vld [vmem:[%s422 + $0x4b0] sm:$0xff]
          %v4087 = vld [vmem:[%s422 + $0x4b8] sm:$0xff]
          %v4088 = vld [vmem:[%s422 + $0x4c0] sm:$0xff]
          %v4089 = vld [vmem:[%s422 + $0x4c8] sm:$0xff]
          %v4090 = vld [vmem:[%s422 + $0x4d0] sm:$0xff]
          %v4091 = vld [vmem:[%s422 + $0x4d8] sm:$0xff]
          %v4092 = vld [vmem:[%s422 + $0x4e0] sm:$0xff]
          %v4093 = vld [vmem:[%s422 + $0x4e8] sm:$0xff]
          %v4094 = vld [vmem:[%s422 + $0x4f0] sm:$0xff]
          %v4095 = vld [vmem:[%s422 + $0x4f8] sm:$0xff]
          %v4096 = vld [vmem:[%s422 + $0x500] sm:$0xff]
          %v4097 = vld [vmem:[%s422 + $0x508] sm:$0xff]
          %v4098 = vld [vmem:[%s422 + $0x510] sm:$0xff]
          %v4099 = vld [vmem:[%s422 + $0x518] sm:$0xff]
          %v4100 = vld [vmem:[%s422 + $0x520] sm:$0xff]
          %v4101 = vld [vmem:[%s422 + $0x528] sm:$0xff]
          %v4102 = vld [vmem:[%s422 + $0x530] sm:$0xff]
          %v4103 = vld [vmem:[%s422 + $0x538] sm:$0xff]
          %v4104 = vld [vmem:[%s422 + $0x540] sm:$0xff]
          %v4105 = vld [vmem:[%s422 + $0x548] sm:$0xff]
          %v4106 = vld [vmem:[%s422 + $0x550] sm:$0xff]
          %v4107 = vld [vmem:[%s422 + $0x558] sm:$0xff]
          %v4108 = vld [vmem:[%s422 + $0x560] sm:$0xff]
          %v4109 = vld [vmem:[%s422 + $0x568] sm:$0xff]
          %v4110 = vld [vmem:[%s422 + $0x570] sm:$0xff]
          %v4111 = vld [vmem:[%s422 + $0x578] sm:$0xff]
          %v4112 = vld [vmem:[%s422 + $0x580] sm:$0xff]
          %v4113 = vld [vmem:[%s422 + $0x588] sm:$0xff]
          %v4114 = vld [vmem:[%s422 + $0x590] sm:$0xff]
          %v4115 = vld [vmem:[%s422 + $0x598] sm:$0xff]
          %v4116 = vld [vmem:[%s422 + $0x5a0] sm:$0xff]
          %v4117 = vld [vmem:[%s422 + $0x5a8] sm:$0xff]
          %v4118 = vld [vmem:[%s422 + $0x5b0] sm:$0xff]
          %v4119 = vld [vmem:[%s422 + $0x5b8] sm:$0xff]
          %v4120 = vld [vmem:[%s422 + $0x5c0] sm:$0xff]
          %v4121 = vld [vmem:[%s422 + $0x5c8] sm:$0xff]
          %v4122 = vld [vmem:[%s422 + $0x5d0] sm:$0xff]
          %v4123 = vld [vmem:[%s422 + $0x5d8] sm:$0xff]
          %v4124 = vld [vmem:[%s422 + $0x5e0] sm:$0xff]
          %v4125 = vld [vmem:[%s422 + $0x5e8] sm:$0xff]
          %v4126 = vld [vmem:[%s422 + $0x5f0] sm:$0xff]
          %v4127 = vld [vmem:[%s422 + $0x5f8] sm:$0xff]
          %v4128 = vld [vmem:[%s422 + $0x600] sm:$0xff]
          %v4129 = vld [vmem:[%s422 + $0x608] sm:$0xff]
          %v4130 = vld [vmem:[%s422 + $0x610] sm:$0xff]
          %v4131 = vld [vmem:[%s422 + $0x618] sm:$0xff]
          %v4132 = vld [vmem:[%s422 + $0x620] sm:$0xff]
          %v4133 = vld [vmem:[%s422 + $0x628] sm:$0xff]
          %v4134 = vld [vmem:[%s422 + $0x630] sm:$0xff]
          %v4135 = vld [vmem:[%s422 + $0x638] sm:$0xff]
          %v4136 = vld [vmem:[%s422 + $0x640] sm:$0xff]
          %v4137 = vld [vmem:[%s422 + $0x648] sm:$0xff]
          %v4138 = vld [vmem:[%s422 + $0x650] sm:$0xff]
          %v4139 = vld [vmem:[%s422 + $0x658] sm:$0xff]
          %v4140 = vld [vmem:[%s422 + $0x660] sm:$0xff]
          %v4141 = vld [vmem:[%s422 + $0x668] sm:$0xff]
          %v4142 = vld [vmem:[%s422 + $0x670] sm:$0xff]
          %v4143 = vld [vmem:[%s422 + $0x678] sm:$0xff]
          %v4144 = vld [vmem:[%s422 + $0x680] sm:$0xff]
          %v4145 = vld [vmem:[%s422 + $0x688] sm:$0xff]
          %v4146 = vld [vmem:[%s422 + $0x690] sm:$0xff]
          %v4147 = vld [vmem:[%s422 + $0x698] sm:$0xff]
          %v4148 = vld [vmem:[%s422 + $0x6a0] sm:$0xff]
          %v4149 = vld [vmem:[%s422 + $0x6a8] sm:$0xff]
          %v4150 = vld [vmem:[%s422 + $0x6b0] sm:$0xff]
          %v4151 = vld [vmem:[%s422 + $0x6b8] sm:$0xff]
          %v4152 = vld [vmem:[%s422 + $0x6c0] sm:$0xff]
          %v4153 = vld [vmem:[%s422 + $0x6c8] sm:$0xff]
          %v4154 = vld [vmem:[%s422 + $0x6d0] sm:$0xff]
          %v4155 = vld [vmem:[%s422 + $0x6d8] sm:$0xff]
          %v4156 = vld [vmem:[%s422 + $0x6e0] sm:$0xff]
          %v4157 = vld [vmem:[%s422 + $0x6e8] sm:$0xff]
          %v4158 = vld [vmem:[%s422 + $0x6f0] sm:$0xff]
          %v4159 = vld [vmem:[%s422 + $0x6f8] sm:$0xff]
          %v4160 = vld [vmem:[%s422 + $0x700] sm:$0xff]
          %v4161 = vld [vmem:[%s422 + $0x708] sm:$0xff]
          %v4162 = vld [vmem:[%s422 + $0x710] sm:$0xff]
          %v4163 = vld [vmem:[%s422 + $0x718] sm:$0xff]
          %v4164 = vld [vmem:[%s422 + $0x720] sm:$0xff]
          %v4165 = vld [vmem:[%s422 + $0x728] sm:$0xff]
          %v4166 = vld [vmem:[%s422 + $0x730] sm:$0xff]
          %v4167 = vld [vmem:[%s422 + $0x738] sm:$0xff]
          %v4168 = vld [vmem:[%s422 + $0x740] sm:$0xff]
          %v4169 = vld [vmem:[%s422 + $0x748] sm:$0xff]
          %v4170 = vld [vmem:[%s422 + $0x750] sm:$0xff]
          %v4171 = vld [vmem:[%s422 + $0x758] sm:$0xff]
          %v4172 = vld [vmem:[%s422 + $0x760] sm:$0xff]
          %v4173 = vld [vmem:[%s422 + $0x768] sm:$0xff]
          %v4174 = vld [vmem:[%s422 + $0x770] sm:$0xff]
          %v4175 = vld [vmem:[%s422 + $0x778] sm:$0xff]
          %v4176 = vld [vmem:[%s422 + $0x780] sm:$0xff]
          %v4177 = vld [vmem:[%s422 + $0x788] sm:$0xff]
          %v4178 = vld [vmem:[%s422 + $0x790] sm:$0xff]
          %v4179 = vld [vmem:[%s422 + $0x798] sm:$0xff]
          %v4180 = vld [vmem:[%s422 + $0x7a0] sm:$0xff]
          %v4181 = vld [vmem:[%s422 + $0x7a8] sm:$0xff]
          %v4182 = vld [vmem:[%s422 + $0x7b0] sm:$0xff]
          %v4183 = vld [vmem:[%s422 + $0x7b8] sm:$0xff]
          %v4184 = vld [vmem:[%s422 + $0x7c0] sm:$0xff]
          %v4185 = vld [vmem:[%s422 + $0x7c8] sm:$0xff]
          %v4186 = vld [vmem:[%s422 + $0x7d0] sm:$0xff]
          %v4187 = vld [vmem:[%s422 + $0x7d8] sm:$0xff]
          %v4188 = vld [vmem:[%s422 + $0x7e0] sm:$0xff]
          %v4189 = vld [vmem:[%s422 + $0x7e8] sm:$0xff]
          %v4190 = vld [vmem:[%s422 + $0x7f0] sm:$0xff]
          %v4191 = vld [vmem:[%s422 + $0x7f8] sm:$0xff]
          %4193 = vset.pattern.permute.xlu0 0
          %4194 = vperm.xlu0 %4193, %v3904
          %v4195 = vpop.permute.xlu0 %4194
          %4198 = vset.pattern.permute.xlu0 0
          %4199 = vperm.xlu0 %4198, %v3905
          %v4200 = vpop.permute.xlu0 %4199
          %4203 = vset.pattern.permute.xlu0 0
          %4204 = vperm.xlu0 %4203, %v3906
          %v4205 = vpop.permute.xlu0 %4204
          %4208 = vset.pattern.permute.xlu0 0
          %4209 = vperm.xlu0 %4208, %v3907
          %v4210 = vpop.permute.xlu0 %4209
          %4213 = vset.pattern.permute.xlu0 0
          %4214 = vperm.xlu0 %4213, %v3908
          %v4215 = vpop.permute.xlu0 %4214
          %4218 = vset.pattern.permute.xlu0 0
          %4219 = vperm.xlu0 %4218, %v3909
          %v4220 = vpop.permute.xlu0 %4219
          %4223 = vset.pattern.permute.xlu0 0
          %4224 = vperm.xlu0 %4223, %v3910
          %v4225 = vpop.permute.xlu0 %4224
          %4228 = vset.pattern.permute.xlu0 0
          %4229 = vperm.xlu0 %4228, %v3911
          %v4230 = vpop.permute.xlu0 %4229
          %4233 = vset.pattern.permute.xlu0 0
          %4234 = vperm.xlu0 %4233, %v3912
          %v4235 = vpop.permute.xlu0 %4234
          %4238 = vset.pattern.permute.xlu0 0
          %4239 = vperm.xlu0 %4238, %v3913
          %v4240 = vpop.permute.xlu0 %4239
          %4243 = vset.pattern.permute.xlu0 0
          %4244 = vperm.xlu0 %4243, %v3914
          %v4245 = vpop.permute.xlu0 %4244
          %4248 = vset.pattern.permute.xlu0 0
          %4249 = vperm.xlu0 %4248, %v3915
          %v4250 = vpop.permute.xlu0 %4249
          %4253 = vset.pattern.permute.xlu0 0
          %4254 = vperm.xlu0 %4253, %v3916
          %v4255 = vpop.permute.xlu0 %4254
          %4258 = vset.pattern.permute.xlu0 0
          %4259 = vperm.xlu0 %4258, %v3917
          %v4260 = vpop.permute.xlu0 %4259
          %4263 = vset.pattern.permute.xlu0 0
          %4264 = vperm.xlu0 %4263, %v3918
          %v4265 = vpop.permute.xlu0 %4264
          %4268 = vset.pattern.permute.xlu0 0
          %4269 = vperm.xlu0 %4268, %v3919
          %v4270 = vpop.permute.xlu0 %4269
          %4273 = vset.pattern.permute.xlu0 0
          %4274 = vperm.xlu0 %4273, %v3920
          %v4275 = vpop.permute.xlu0 %4274
          %4278 = vset.pattern.permute.xlu0 0
          %4279 = vperm.xlu0 %4278, %v3921
          %v4280 = vpop.permute.xlu0 %4279
          %4283 = vset.pattern.permute.xlu0 0
          %4284 = vperm.xlu0 %4283, %v3922
          %v4285 = vpop.permute.xlu0 %4284
          %4288 = vset.pattern.permute.xlu0 0
          %4289 = vperm.xlu0 %4288, %v3923
          %v4290 = vpop.permute.xlu0 %4289
          %4293 = vset.pattern.permute.xlu0 0
          %4294 = vperm.xlu0 %4293, %v3924
          %v4295 = vpop.permute.xlu0 %4294
          %4298 = vset.pattern.permute.xlu0 0
          %4299 = vperm.xlu0 %4298, %v3925
          %v4300 = vpop.permute.xlu0 %4299
          %4303 = vset.pattern.permute.xlu0 0
          %4304 = vperm.xlu0 %4303, %v3926
          %v4305 = vpop.permute.xlu0 %4304
          %4308 = vset.pattern.permute.xlu0 0
          %4309 = vperm.xlu0 %4308, %v3927
          %v4310 = vpop.permute.xlu0 %4309
          %4313 = vset.pattern.permute.xlu0 0
          %4314 = vperm.xlu0 %4313, %v3928
          %v4315 = vpop.permute.xlu0 %4314
          %4318 = vset.pattern.permute.xlu0 0
          %4319 = vperm.xlu0 %4318, %v3929
          %v4320 = vpop.permute.xlu0 %4319
          %4323 = vset.pattern.permute.xlu0 0
          %4324 = vperm.xlu0 %4323, %v3930
          %v4325 = vpop.permute.xlu0 %4324
          %4328 = vset.pattern.permute.xlu0 0
          %4329 = vperm.xlu0 %4328, %v3931
          %v4330 = vpop.permute.xlu0 %4329
          %4333 = vset.pattern.permute.xlu0 0
          %4334 = vperm.xlu0 %4333, %v3932
          %v4335 = vpop.permute.xlu0 %4334
          %4338 = vset.pattern.permute.xlu0 0
          %4339 = vperm.xlu0 %4338, %v3933
          %v4340 = vpop.permute.xlu0 %4339
          %4343 = vset.pattern.permute.xlu0 0
          %4344 = vperm.xlu0 %4343, %v3934
          %v4345 = vpop.permute.xlu0 %4344
          %4348 = vset.pattern.permute.xlu0 0
          %4349 = vperm.xlu0 %4348, %v3935
          %v4350 = vpop.permute.xlu0 %4349
          %v4352 = vsub.f32 %v3936, %v4195
          %v4353 = vsub.f32 %v3937, %v4195
          %v4354 = vsub.f32 %v3938, %v4195
          %v4355 = vsub.f32 %v3939, %v4195
          %v4356 = vsub.f32 %v3940, %v4195
          %v4357 = vsub.f32 %v3941, %v4195
          %v4358 = vsub.f32 %v3942, %v4195
          %v4359 = vsub.f32 %v3943, %v4195
          %v4360 = vsub.f32 %v3944, %v4200
          %v4361 = vsub.f32 %v3945, %v4200
          %v4362 = vsub.f32 %v3946, %v4200
          %v4363 = vsub.f32 %v3947, %v4200
          %v4364 = vsub.f32 %v3948, %v4200
          %v4365 = vsub.f32 %v3949, %v4200
          %v4366 = vsub.f32 %v3950, %v4200
          %v4367 = vsub.f32 %v3951, %v4200
          %v4368 = vsub.f32 %v3952, %v4205
          %v4369 = vsub.f32 %v3953, %v4205
          %v4370 = vsub.f32 %v3954, %v4205
          %v4371 = vsub.f32 %v3955, %v4205
          %v4372 = vsub.f32 %v3956, %v4205
          %v4373 = vsub.f32 %v3957, %v4205
          %v4374 = vsub.f32 %v3958, %v4205
          %v4375 = vsub.f32 %v3959, %v4205
          %v4376 = vsub.f32 %v3960, %v4210
          %v4377 = vsub.f32 %v3961, %v4210
          %v4378 = vsub.f32 %v3962, %v4210
          %v4379 = vsub.f32 %v3963, %v4210
          %v4380 = vsub.f32 %v3964, %v4210
          %v4381 = vsub.f32 %v3965, %v4210
          %v4382 = vsub.f32 %v3966, %v4210
          %v4383 = vsub.f32 %v3967, %v4210
          %v4384 = vsub.f32 %v3968, %v4215
          %v4385 = vsub.f32 %v3969, %v4215
          %v4386 = vsub.f32 %v3970, %v4215
          %v4387 = vsub.f32 %v3971, %v4215
          %v4388 = vsub.f32 %v3972, %v4215
          %v4389 = vsub.f32 %v3973, %v4215
          %v4390 = vsub.f32 %v3974, %v4215
          %v4391 = vsub.f32 %v3975, %v4215
          %v4392 = vsub.f32 %v3976, %v4220
          %v4393 = vsub.f32 %v3977, %v4220
          %v4394 = vsub.f32 %v3978, %v4220
          %v4395 = vsub.f32 %v3979, %v4220
          %v4396 = vsub.f32 %v3980, %v4220
          %v4397 = vsub.f32 %v3981, %v4220
          %v4398 = vsub.f32 %v3982, %v4220
          %v4399 = vsub.f32 %v3983, %v4220
          %v4400 = vsub.f32 %v3984, %v4225
          %v4401 = vsub.f32 %v3985, %v4225
          %v4402 = vsub.f32 %v3986, %v4225
          %v4403 = vsub.f32 %v3987, %v4225
          %v4404 = vsub.f32 %v3988, %v4225
          %v4405 = vsub.f32 %v3989, %v4225
          %v4406 = vsub.f32 %v3990, %v4225
          %v4407 = vsub.f32 %v3991, %v4225
          %v4408 = vsub.f32 %v3992, %v4230
          %v4409 = vsub.f32 %v3993, %v4230
          %v4410 = vsub.f32 %v3994, %v4230
          %v4411 = vsub.f32 %v3995, %v4230
          %v4412 = vsub.f32 %v3996, %v4230
          %v4413 = vsub.f32 %v3997, %v4230
          %v4414 = vsub.f32 %v3998, %v4230
          %v4415 = vsub.f32 %v3999, %v4230
          %v4416 = vsub.f32 %v4000, %v4235
          %v4417 = vsub.f32 %v4001, %v4235
          %v4418 = vsub.f32 %v4002, %v4235
          %v4419 = vsub.f32 %v4003, %v4235
          %v4420 = vsub.f32 %v4004, %v4235
          %v4421 = vsub.f32 %v4005, %v4235
          %v4422 = vsub.f32 %v4006, %v4235
          %v4423 = vsub.f32 %v4007, %v4235
          %v4424 = vsub.f32 %v4008, %v4240
          %v4425 = vsub.f32 %v4009, %v4240
          %v4426 = vsub.f32 %v4010, %v4240
          %v4427 = vsub.f32 %v4011, %v4240
          %v4428 = vsub.f32 %v4012, %v4240
          %v4429 = vsub.f32 %v4013, %v4240
          %v4430 = vsub.f32 %v4014, %v4240
          %v4431 = vsub.f32 %v4015, %v4240
          %v4432 = vsub.f32 %v4016, %v4245
          %v4433 = vsub.f32 %v4017, %v4245
          %v4434 = vsub.f32 %v4018, %v4245
          %v4435 = vsub.f32 %v4019, %v4245
          %v4436 = vsub.f32 %v4020, %v4245
          %v4437 = vsub.f32 %v4021, %v4245
          %v4438 = vsub.f32 %v4022, %v4245
          %v4439 = vsub.f32 %v4023, %v4245
          %v4440 = vsub.f32 %v4024, %v4250
          %v4441 = vsub.f32 %v4025, %v4250
          %v4442 = vsub.f32 %v4026, %v4250
          %v4443 = vsub.f32 %v4027, %v4250
          %v4444 = vsub.f32 %v4028, %v4250
          %v4445 = vsub.f32 %v4029, %v4250
          %v4446 = vsub.f32 %v4030, %v4250
          %v4447 = vsub.f32 %v4031, %v4250
          %v4448 = vsub.f32 %v4032, %v4255
          %v4449 = vsub.f32 %v4033, %v4255
          %v4450 = vsub.f32 %v4034, %v4255
          %v4451 = vsub.f32 %v4035, %v4255
          %v4452 = vsub.f32 %v4036, %v4255
          %v4453 = vsub.f32 %v4037, %v4255
          %v4454 = vsub.f32 %v4038, %v4255
          %v4455 = vsub.f32 %v4039, %v4255
          %v4456 = vsub.f32 %v4040, %v4260
          %v4457 = vsub.f32 %v4041, %v4260
          %v4458 = vsub.f32 %v4042, %v4260
          %v4459 = vsub.f32 %v4043, %v4260
          %v4460 = vsub.f32 %v4044, %v4260
          %v4461 = vsub.f32 %v4045, %v4260
          %v4462 = vsub.f32 %v4046, %v4260
          %v4463 = vsub.f32 %v4047, %v4260
          %v4464 = vsub.f32 %v4048, %v4265
          %v4465 = vsub.f32 %v4049, %v4265
          %v4466 = vsub.f32 %v4050, %v4265
          %v4467 = vsub.f32 %v4051, %v4265
          %v4468 = vsub.f32 %v4052, %v4265
          %v4469 = vsub.f32 %v4053, %v4265
          %v4470 = vsub.f32 %v4054, %v4265
          %v4471 = vsub.f32 %v4055, %v4265
          %v4472 = vsub.f32 %v4056, %v4270
          %v4473 = vsub.f32 %v4057, %v4270
          %v4474 = vsub.f32 %v4058, %v4270
          %v4475 = vsub.f32 %v4059, %v4270
          %v4476 = vsub.f32 %v4060, %v4270
          %v4477 = vsub.f32 %v4061, %v4270
          %v4478 = vsub.f32 %v4062, %v4270
          %v4479 = vsub.f32 %v4063, %v4270
          %v4480 = vsub.f32 %v4064, %v4275
          %v4481 = vsub.f32 %v4065, %v4275
          %v4482 = vsub.f32 %v4066, %v4275
          %v4483 = vsub.f32 %v4067, %v4275
          %v4484 = vsub.f32 %v4068, %v4275
          %v4485 = vsub.f32 %v4069, %v4275
          %v4486 = vsub.f32 %v4070, %v4275
          %v4487 = vsub.f32 %v4071, %v4275
          %v4488 = vsub.f32 %v4072, %v4280
          %v4489 = vsub.f32 %v4073, %v4280
          %v4490 = vsub.f32 %v4074, %v4280
          %v4491 = vsub.f32 %v4075, %v4280
          %v4492 = vsub.f32 %v4076, %v4280
          %v4493 = vsub.f32 %v4077, %v4280
          %v4494 = vsub.f32 %v4078, %v4280
          %v4495 = vsub.f32 %v4079, %v4280
          %v4496 = vsub.f32 %v4080, %v4285
          %v4497 = vsub.f32 %v4081, %v4285
          %v4498 = vsub.f32 %v4082, %v4285
          %v4499 = vsub.f32 %v4083, %v4285
          %v4500 = vsub.f32 %v4084, %v4285
          %v4501 = vsub.f32 %v4085, %v4285
          %v4502 = vsub.f32 %v4086, %v4285
          %v4503 = vsub.f32 %v4087, %v4285
          %v4504 = vsub.f32 %v4088, %v4290
          %v4505 = vsub.f32 %v4089, %v4290
          %v4506 = vsub.f32 %v4090, %v4290
          %v4507 = vsub.f32 %v4091, %v4290
          %v4508 = vsub.f32 %v4092, %v4290
          %v4509 = vsub.f32 %v4093, %v4290
          %v4510 = vsub.f32 %v4094, %v4290
          %v4511 = vsub.f32 %v4095, %v4290
          %v4512 = vsub.f32 %v4096, %v4295
          %v4513 = vsub.f32 %v4097, %v4295
          %v4514 = vsub.f32 %v4098, %v4295
          %v4515 = vsub.f32 %v4099, %v4295
          %v4516 = vsub.f32 %v4100, %v4295
          %v4517 = vsub.f32 %v4101, %v4295
          %v4518 = vsub.f32 %v4102, %v4295
          %v4519 = vsub.f32 %v4103, %v4295
          %v4520 = vsub.f32 %v4104, %v4300
          %v4521 = vsub.f32 %v4105, %v4300
          %v4522 = vsub.f32 %v4106, %v4300
          %v4523 = vsub.f32 %v4107, %v4300
          %v4524 = vsub.f32 %v4108, %v4300
          %v4525 = vsub.f32 %v4109, %v4300
          %v4526 = vsub.f32 %v4110, %v4300
          %v4527 = vsub.f32 %v4111, %v4300
          %v4528 = vsub.f32 %v4112, %v4305
          %v4529 = vsub.f32 %v4113, %v4305
          %v4530 = vsub.f32 %v4114, %v4305
          %v4531 = vsub.f32 %v4115, %v4305
          %v4532 = vsub.f32 %v4116, %v4305
          %v4533 = vsub.f32 %v4117, %v4305
          %v4534 = vsub.f32 %v4118, %v4305
          %v4535 = vsub.f32 %v4119, %v4305
          %v4536 = vsub.f32 %v4120, %v4310
          %v4537 = vsub.f32 %v4121, %v4310
          %v4538 = vsub.f32 %v4122, %v4310
          %v4539 = vsub.f32 %v4123, %v4310
          %v4540 = vsub.f32 %v4124, %v4310
          %v4541 = vsub.f32 %v4125, %v4310
          %v4542 = vsub.f32 %v4126, %v4310
          %v4543 = vsub.f32 %v4127, %v4310
          %v4544 = vsub.f32 %v4128, %v4315
          %v4545 = vsub.f32 %v4129, %v4315
          %v4546 = vsub.f32 %v4130, %v4315
          %v4547 = vsub.f32 %v4131, %v4315
          %v4548 = vsub.f32 %v4132, %v4315
          %v4549 = vsub.f32 %v4133, %v4315
          %v4550 = vsub.f32 %v4134, %v4315
          %v4551 = vsub.f32 %v4135, %v4315
          %v4552 = vsub.f32 %v4136, %v4320
          %v4553 = vsub.f32 %v4137, %v4320
          %v4554 = vsub.f32 %v4138, %v4320
          %v4555 = vsub.f32 %v4139, %v4320
          %v4556 = vsub.f32 %v4140, %v4320
          %v4557 = vsub.f32 %v4141, %v4320
          %v4558 = vsub.f32 %v4142, %v4320
          %v4559 = vsub.f32 %v4143, %v4320
          %v4560 = vsub.f32 %v4144, %v4325
          %v4561 = vsub.f32 %v4145, %v4325
          %v4562 = vsub.f32 %v4146, %v4325
          %v4563 = vsub.f32 %v4147, %v4325
          %v4564 = vsub.f32 %v4148, %v4325
          %v4565 = vsub.f32 %v4149, %v4325
          %v4566 = vsub.f32 %v4150, %v4325
          %v4567 = vsub.f32 %v4151, %v4325
          %v4568 = vsub.f32 %v4152, %v4330
          %v4569 = vsub.f32 %v4153, %v4330
          %v4570 = vsub.f32 %v4154, %v4330
          %v4571 = vsub.f32 %v4155, %v4330
          %v4572 = vsub.f32 %v4156, %v4330
          %v4573 = vsub.f32 %v4157, %v4330
          %v4574 = vsub.f32 %v4158, %v4330
          %v4575 = vsub.f32 %v4159, %v4330
          %v4576 = vsub.f32 %v4160, %v4335
          %v4577 = vsub.f32 %v4161, %v4335
          %v4578 = vsub.f32 %v4162, %v4335
          %v4579 = vsub.f32 %v4163, %v4335
          %v4580 = vsub.f32 %v4164, %v4335
          %v4581 = vsub.f32 %v4165, %v4335
          %v4582 = vsub.f32 %v4166, %v4335
          %v4583 = vsub.f32 %v4167, %v4335
          %v4584 = vsub.f32 %v4168, %v4340
          %v4585 = vsub.f32 %v4169, %v4340
          %v4586 = vsub.f32 %v4170, %v4340
          %v4587 = vsub.f32 %v4171, %v4340
          %v4588 = vsub.f32 %v4172, %v4340
          %v4589 = vsub.f32 %v4173, %v4340
          %v4590 = vsub.f32 %v4174, %v4340
          %v4591 = vsub.f32 %v4175, %v4340
          %v4592 = vsub.f32 %v4176, %v4345
          %v4593 = vsub.f32 %v4177, %v4345
          %v4594 = vsub.f32 %v4178, %v4345
          %v4595 = vsub.f32 %v4179, %v4345
          %v4596 = vsub.f32 %v4180, %v4345
          %v4597 = vsub.f32 %v4181, %v4345
          %v4598 = vsub.f32 %v4182, %v4345
          %v4599 = vsub.f32 %v4183, %v4345
          %v4600 = vsub.f32 %v4184, %v4350
          %v4601 = vsub.f32 %v4185, %v4350
          %v4602 = vsub.f32 %v4186, %v4350
          %v4603 = vsub.f32 %v4187, %v4350
          %v4604 = vsub.f32 %v4188, %v4350
          %v4605 = vsub.f32 %v4189, %v4350
          %v4606 = vsub.f32 %v4190, %v4350
          %v4607 = vsub.f32 %v4191, %v4350
          %4608 = vst [vmem:[%s422] sm:$0xff] %v4352
          %4609 = vst [vmem:[%s422 + $0x8] sm:$0xff] %v4353
          %4610 = vst [vmem:[%s422 + $0x10] sm:$0xff] %v4354
          %4611 = vst [vmem:[%s422 + $0x18] sm:$0xff] %v4355
          %4612 = vst [vmem:[%s422 + $0x20] sm:$0xff] %v4356
          %4613 = vst [vmem:[%s422 + $0x28] sm:$0xff] %v4357
          %4614 = vst [vmem:[%s422 + $0x30] sm:$0xff] %v4358
          %4615 = vst [vmem:[%s422 + $0x38] sm:$0xff] %v4359
          %4616 = vst [vmem:[%s422 + $0x40] sm:$0xff] %v4360
          %4617 = vst [vmem:[%s422 + $0x48] sm:$0xff] %v4361
          %4618 = vst [vmem:[%s422 + $0x50] sm:$0xff] %v4362
          %4619 = vst [vmem:[%s422 + $0x58] sm:$0xff] %v4363
          %4620 = vst [vmem:[%s422 + $0x60] sm:$0xff] %v4364
          %4621 = vst [vmem:[%s422 + $0x68] sm:$0xff] %v4365
          %4622 = vst [vmem:[%s422 + $0x70] sm:$0xff] %v4366
          %4623 = vst [vmem:[%s422 + $0x78] sm:$0xff] %v4367
          %4624 = vst [vmem:[%s422 + $0x80] sm:$0xff] %v4368
          %4625 = vst [vmem:[%s422 + $0x88] sm:$0xff] %v4369
          %4626 = vst [vmem:[%s422 + $0x90] sm:$0xff] %v4370
          %4627 = vst [vmem:[%s422 + $0x98] sm:$0xff] %v4371
          %4628 = vst [vmem:[%s422 + $0xa0] sm:$0xff] %v4372
          %4629 = vst [vmem:[%s422 + $0xa8] sm:$0xff] %v4373
          %4630 = vst [vmem:[%s422 + $0xb0] sm:$0xff] %v4374
          %4631 = vst [vmem:[%s422 + $0xb8] sm:$0xff] %v4375
          %4632 = vst [vmem:[%s422 + $0xc0] sm:$0xff] %v4376
          %4633 = vst [vmem:[%s422 + $0xc8] sm:$0xff] %v4377
          %4634 = vst [vmem:[%s422 + $0xd0] sm:$0xff] %v4378
          %4635 = vst [vmem:[%s422 + $0xd8] sm:$0xff] %v4379
          %4636 = vst [vmem:[%s422 + $0xe0] sm:$0xff] %v4380
          %4637 = vst [vmem:[%s422 + $0xe8] sm:$0xff] %v4381
          %4638 = vst [vmem:[%s422 + $0xf0] sm:$0xff] %v4382
          %4639 = vst [vmem:[%s422 + $0xf8] sm:$0xff] %v4383
          %4640 = vst [vmem:[%s422 + $0x100] sm:$0xff] %v4384
          %4641 = vst [vmem:[%s422 + $0x108] sm:$0xff] %v4385
          %4642 = vst [vmem:[%s422 + $0x110] sm:$0xff] %v4386
          %4643 = vst [vmem:[%s422 + $0x118] sm:$0xff] %v4387
          %4644 = vst [vmem:[%s422 + $0x120] sm:$0xff] %v4388
          %4645 = vst [vmem:[%s422 + $0x128] sm:$0xff] %v4389
          %4646 = vst [vmem:[%s422 + $0x130] sm:$0xff] %v4390
          %4647 = vst [vmem:[%s422 + $0x138] sm:$0xff] %v4391
          %4648 = vst [vmem:[%s422 + $0x140] sm:$0xff] %v4392
          %4649 = vst [vmem:[%s422 + $0x148] sm:$0xff] %v4393
          %4650 = vst [vmem:[%s422 + $0x150] sm:$0xff] %v4394
          %4651 = vst [vmem:[%s422 + $0x158] sm:$0xff] %v4395
          %4652 = vst [vmem:[%s422 + $0x160] sm:$0xff] %v4396
          %4653 = vst [vmem:[%s422 + $0x168] sm:$0xff] %v4397
          %4654 = vst [vmem:[%s422 + $0x170] sm:$0xff] %v4398
          %4655 = vst [vmem:[%s422 + $0x178] sm:$0xff] %v4399
          %4656 = vst [vmem:[%s422 + $0x180] sm:$0xff] %v4400
          %4657 = vst [vmem:[%s422 + $0x188] sm:$0xff] %v4401
          %4658 = vst [vmem:[%s422 + $0x190] sm:$0xff] %v4402
          %4659 = vst [vmem:[%s422 + $0x198] sm:$0xff] %v4403
          %4660 = vst [vmem:[%s422 + $0x1a0] sm:$0xff] %v4404
          %4661 = vst [vmem:[%s422 + $0x1a8] sm:$0xff] %v4405
          %4662 = vst [vmem:[%s422 + $0x1b0] sm:$0xff] %v4406
          %4663 = vst [vmem:[%s422 + $0x1b8] sm:$0xff] %v4407
          %4664 = vst [vmem:[%s422 + $0x1c0] sm:$0xff] %v4408
          %4665 = vst [vmem:[%s422 + $0x1c8] sm:$0xff] %v4409
          %4666 = vst [vmem:[%s422 + $0x1d0] sm:$0xff] %v4410
          %4667 = vst [vmem:[%s422 + $0x1d8] sm:$0xff] %v4411
          %4668 = vst [vmem:[%s422 + $0x1e0] sm:$0xff] %v4412
          %4669 = vst [vmem:[%s422 + $0x1e8] sm:$0xff] %v4413
          %4670 = vst [vmem:[%s422 + $0x1f0] sm:$0xff] %v4414
          %4671 = vst [vmem:[%s422 + $0x1f8] sm:$0xff] %v4415
          %4672 = vst [vmem:[%s422 + $0x200] sm:$0xff] %v4416
          %4673 = vst [vmem:[%s422 + $0x208] sm:$0xff] %v4417
          %4674 = vst [vmem:[%s422 + $0x210] sm:$0xff] %v4418
          %4675 = vst [vmem:[%s422 + $0x218] sm:$0xff] %v4419
          %4676 = vst [vmem:[%s422 + $0x220] sm:$0xff] %v4420
          %4677 = vst [vmem:[%s422 + $0x228] sm:$0xff] %v4421
          %4678 = vst [vmem:[%s422 + $0x230] sm:$0xff] %v4422
          %4679 = vst [vmem:[%s422 + $0x238] sm:$0xff] %v4423
          %4680 = vst [vmem:[%s422 + $0x240] sm:$0xff] %v4424
          %4681 = vst [vmem:[%s422 + $0x248] sm:$0xff] %v4425
          %4682 = vst [vmem:[%s422 + $0x250] sm:$0xff] %v4426
          %4683 = vst [vmem:[%s422 + $0x258] sm:$0xff] %v4427
          %4684 = vst [vmem:[%s422 + $0x260] sm:$0xff] %v4428
          %4685 = vst [vmem:[%s422 + $0x268] sm:$0xff] %v4429
          %4686 = vst [vmem:[%s422 + $0x270] sm:$0xff] %v4430
          %4687 = vst [vmem:[%s422 + $0x278] sm:$0xff] %v4431
          %4688 = vst [vmem:[%s422 + $0x280] sm:$0xff] %v4432
          %4689 = vst [vmem:[%s422 + $0x288] sm:$0xff] %v4433
          %4690 = vst [vmem:[%s422 + $0x290] sm:$0xff] %v4434
          %4691 = vst [vmem:[%s422 + $0x298] sm:$0xff] %v4435
          %4692 = vst [vmem:[%s422 + $0x2a0] sm:$0xff] %v4436
          %4693 = vst [vmem:[%s422 + $0x2a8] sm:$0xff] %v4437
          %4694 = vst [vmem:[%s422 + $0x2b0] sm:$0xff] %v4438
          %4695 = vst [vmem:[%s422 + $0x2b8] sm:$0xff] %v4439
          %4696 = vst [vmem:[%s422 + $0x2c0] sm:$0xff] %v4440
          %4697 = vst [vmem:[%s422 + $0x2c8] sm:$0xff] %v4441
          %4698 = vst [vmem:[%s422 + $0x2d0] sm:$0xff] %v4442
          %4699 = vst [vmem:[%s422 + $0x2d8] sm:$0xff] %v4443
          %4700 = vst [vmem:[%s422 + $0x2e0] sm:$0xff] %v4444
          %4701 = vst [vmem:[%s422 + $0x2e8] sm:$0xff] %v4445
          %4702 = vst [vmem:[%s422 + $0x2f0] sm:$0xff] %v4446
          %4703 = vst [vmem:[%s422 + $0x2f8] sm:$0xff] %v4447
          %4704 = vst [vmem:[%s422 + $0x300] sm:$0xff] %v4448
          %4705 = vst [vmem:[%s422 + $0x308] sm:$0xff] %v4449
          %4706 = vst [vmem:[%s422 + $0x310] sm:$0xff] %v4450
          %4707 = vst [vmem:[%s422 + $0x318] sm:$0xff] %v4451
          %4708 = vst [vmem:[%s422 + $0x320] sm:$0xff] %v4452
          %4709 = vst [vmem:[%s422 + $0x328] sm:$0xff] %v4453
          %4710 = vst [vmem:[%s422 + $0x330] sm:$0xff] %v4454
          %4711 = vst [vmem:[%s422 + $0x338] sm:$0xff] %v4455
          %4712 = vst [vmem:[%s422 + $0x340] sm:$0xff] %v4456
          %4713 = vst [vmem:[%s422 + $0x348] sm:$0xff] %v4457
          %4714 = vst [vmem:[%s422 + $0x350] sm:$0xff] %v4458
          %4715 = vst [vmem:[%s422 + $0x358] sm:$0xff] %v4459
          %4716 = vst [vmem:[%s422 + $0x360] sm:$0xff] %v4460
          %4717 = vst [vmem:[%s422 + $0x368] sm:$0xff] %v4461
          %4718 = vst [vmem:[%s422 + $0x370] sm:$0xff] %v4462
          %4719 = vst [vmem:[%s422 + $0x378] sm:$0xff] %v4463
          %4720 = vst [vmem:[%s422 + $0x380] sm:$0xff] %v4464
          %4721 = vst [vmem:[%s422 + $0x388] sm:$0xff] %v4465
          %4722 = vst [vmem:[%s422 + $0x390] sm:$0xff] %v4466
          %4723 = vst [vmem:[%s422 + $0x398] sm:$0xff] %v4467
          %4724 = vst [vmem:[%s422 + $0x3a0] sm:$0xff] %v4468
          %4725 = vst [vmem:[%s422 + $0x3a8] sm:$0xff] %v4469
          %4726 = vst [vmem:[%s422 + $0x3b0] sm:$0xff] %v4470
          %4727 = vst [vmem:[%s422 + $0x3b8] sm:$0xff] %v4471
          %4728 = vst [vmem:[%s422 + $0x3c0] sm:$0xff] %v4472
          %4729 = vst [vmem:[%s422 + $0x3c8] sm:$0xff] %v4473
          %4730 = vst [vmem:[%s422 + $0x3d0] sm:$0xff] %v4474
          %4731 = vst [vmem:[%s422 + $0x3d8] sm:$0xff] %v4475
          %4732 = vst [vmem:[%s422 + $0x3e0] sm:$0xff] %v4476
          %4733 = vst [vmem:[%s422 + $0x3e8] sm:$0xff] %v4477
          %4734 = vst [vmem:[%s422 + $0x3f0] sm:$0xff] %v4478
          %4735 = vst [vmem:[%s422 + $0x3f8] sm:$0xff] %v4479
          %4736 = vst [vmem:[%s422 + $0x400] sm:$0xff] %v4480
          %4737 = vst [vmem:[%s422 + $0x408] sm:$0xff] %v4481
          %4738 = vst [vmem:[%s422 + $0x410] sm:$0xff] %v4482
          %4739 = vst [vmem:[%s422 + $0x418] sm:$0xff] %v4483
          %4740 = vst [vmem:[%s422 + $0x420] sm:$0xff] %v4484
          %4741 = vst [vmem:[%s422 + $0x428] sm:$0xff] %v4485
          %4742 = vst [vmem:[%s422 + $0x430] sm:$0xff] %v4486
          %4743 = vst [vmem:[%s422 + $0x438] sm:$0xff] %v4487
          %4744 = vst [vmem:[%s422 + $0x440] sm:$0xff] %v4488
          %4745 = vst [vmem:[%s422 + $0x448] sm:$0xff] %v4489
          %4746 = vst [vmem:[%s422 + $0x450] sm:$0xff] %v4490
          %4747 = vst [vmem:[%s422 + $0x458] sm:$0xff] %v4491
          %4748 = vst [vmem:[%s422 + $0x460] sm:$0xff] %v4492
          %4749 = vst [vmem:[%s422 + $0x468] sm:$0xff] %v4493
          %4750 = vst [vmem:[%s422 + $0x470] sm:$0xff] %v4494
          %4751 = vst [vmem:[%s422 + $0x478] sm:$0xff] %v4495
          %4752 = vst [vmem:[%s422 + $0x480] sm:$0xff] %v4496
          %4753 = vst [vmem:[%s422 + $0x488] sm:$0xff] %v4497
          %4754 = vst [vmem:[%s422 + $0x490] sm:$0xff] %v4498
          %4755 = vst [vmem:[%s422 + $0x498] sm:$0xff] %v4499
          %4756 = vst [vmem:[%s422 + $0x4a0] sm:$0xff] %v4500
          %4757 = vst [vmem:[%s422 + $0x4a8] sm:$0xff] %v4501
          %4758 = vst [vmem:[%s422 + $0x4b0] sm:$0xff] %v4502
          %4759 = vst [vmem:[%s422 + $0x4b8] sm:$0xff] %v4503
          %4760 = vst [vmem:[%s422 + $0x4c0] sm:$0xff] %v4504
          %4761 = vst [vmem:[%s422 + $0x4c8] sm:$0xff] %v4505
          %4762 = vst [vmem:[%s422 + $0x4d0] sm:$0xff] %v4506
          %4763 = vst [vmem:[%s422 + $0x4d8] sm:$0xff] %v4507
          %4764 = vst [vmem:[%s422 + $0x4e0] sm:$0xff] %v4508
          %4765 = vst [vmem:[%s422 + $0x4e8] sm:$0xff] %v4509
          %4766 = vst [vmem:[%s422 + $0x4f0] sm:$0xff] %v4510
          %4767 = vst [vmem:[%s422 + $0x4f8] sm:$0xff] %v4511
          %4768 = vst [vmem:[%s422 + $0x500] sm:$0xff] %v4512
          %4769 = vst [vmem:[%s422 + $0x508] sm:$0xff] %v4513
          %4770 = vst [vmem:[%s422 + $0x510] sm:$0xff] %v4514
          %4771 = vst [vmem:[%s422 + $0x518] sm:$0xff] %v4515
          %4772 = vst [vmem:[%s422 + $0x520] sm:$0xff] %v4516
          %4773 = vst [vmem:[%s422 + $0x528] sm:$0xff] %v4517
          %4774 = vst [vmem:[%s422 + $0x530] sm:$0xff] %v4518
          %4775 = vst [vmem:[%s422 + $0x538] sm:$0xff] %v4519
          %4776 = vst [vmem:[%s422 + $0x540] sm:$0xff] %v4520
          %4777 = vst [vmem:[%s422 + $0x548] sm:$0xff] %v4521
          %4778 = vst [vmem:[%s422 + $0x550] sm:$0xff] %v4522
          %4779 = vst [vmem:[%s422 + $0x558] sm:$0xff] %v4523
          %4780 = vst [vmem:[%s422 + $0x560] sm:$0xff] %v4524
          %4781 = vst [vmem:[%s422 + $0x568] sm:$0xff] %v4525
          %4782 = vst [vmem:[%s422 + $0x570] sm:$0xff] %v4526
          %4783 = vst [vmem:[%s422 + $0x578] sm:$0xff] %v4527
          %4784 = vst [vmem:[%s422 + $0x580] sm:$0xff] %v4528
          %4785 = vst [vmem:[%s422 + $0x588] sm:$0xff] %v4529
          %4786 = vst [vmem:[%s422 + $0x590] sm:$0xff] %v4530
          %4787 = vst [vmem:[%s422 + $0x598] sm:$0xff] %v4531
          %4788 = vst [vmem:[%s422 + $0x5a0] sm:$0xff] %v4532
          %4789 = vst [vmem:[%s422 + $0x5a8] sm:$0xff] %v4533
          %4790 = vst [vmem:[%s422 + $0x5b0] sm:$0xff] %v4534
          %4791 = vst [vmem:[%s422 + $0x5b8] sm:$0xff] %v4535
          %4792 = vst [vmem:[%s422 + $0x5c0] sm:$0xff] %v4536
          %4793 = vst [vmem:[%s422 + $0x5c8] sm:$0xff] %v4537
          %4794 = vst [vmem:[%s422 + $0x5d0] sm:$0xff] %v4538
          %4795 = vst [vmem:[%s422 + $0x5d8] sm:$0xff] %v4539
          %4796 = vst [vmem:[%s422 + $0x5e0] sm:$0xff] %v4540
          %4797 = vst [vmem:[%s422 + $0x5e8] sm:$0xff] %v4541
          %4798 = vst [vmem:[%s422 + $0x5f0] sm:$0xff] %v4542
          %4799 = vst [vmem:[%s422 + $0x5f8] sm:$0xff] %v4543
          %4800 = vst [vmem:[%s422 + $0x600] sm:$0xff] %v4544
          %4801 = vst [vmem:[%s422 + $0x608] sm:$0xff] %v4545
          %4802 = vst [vmem:[%s422 + $0x610] sm:$0xff] %v4546
          %4803 = vst [vmem:[%s422 + $0x618] sm:$0xff] %v4547
          %4804 = vst [vmem:[%s422 + $0x620] sm:$0xff] %v4548
          %4805 = vst [vmem:[%s422 + $0x628] sm:$0xff] %v4549
          %4806 = vst [vmem:[%s422 + $0x630] sm:$0xff] %v4550
          %4807 = vst [vmem:[%s422 + $0x638] sm:$0xff] %v4551
          %4808 = vst [vmem:[%s422 + $0x640] sm:$0xff] %v4552
          %4809 = vst [vmem:[%s422 + $0x648] sm:$0xff] %v4553
          %4810 = vst [vmem:[%s422 + $0x650] sm:$0xff] %v4554
          %4811 = vst [vmem:[%s422 + $0x658] sm:$0xff] %v4555
          %4812 = vst [vmem:[%s422 + $0x660] sm:$0xff] %v4556
          %4813 = vst [vmem:[%s422 + $0x668] sm:$0xff] %v4557
          %4814 = vst [vmem:[%s422 + $0x670] sm:$0xff] %v4558
          %4815 = vst [vmem:[%s422 + $0x678] sm:$0xff] %v4559
          %4816 = vst [vmem:[%s422 + $0x680] sm:$0xff] %v4560
          %4817 = vst [vmem:[%s422 + $0x688] sm:$0xff] %v4561
          %4818 = vst [vmem:[%s422 + $0x690] sm:$0xff] %v4562
          %4819 = vst [vmem:[%s422 + $0x698] sm:$0xff] %v4563
          %4820 = vst [vmem:[%s422 + $0x6a0] sm:$0xff] %v4564
          %4821 = vst [vmem:[%s422 + $0x6a8] sm:$0xff] %v4565
          %4822 = vst [vmem:[%s422 + $0x6b0] sm:$0xff] %v4566
          %4823 = vst [vmem:[%s422 + $0x6b8] sm:$0xff] %v4567
          %4824 = vst [vmem:[%s422 + $0x6c0] sm:$0xff] %v4568
          %4825 = vst [vmem:[%s422 + $0x6c8] sm:$0xff] %v4569
          %4826 = vst [vmem:[%s422 + $0x6d0] sm:$0xff] %v4570
          %4827 = vst [vmem:[%s422 + $0x6d8] sm:$0xff] %v4571
          %4828 = vst [vmem:[%s422 + $0x6e0] sm:$0xff] %v4572
          %4829 = vst [vmem:[%s422 + $0x6e8] sm:$0xff] %v4573
          %4830 = vst [vmem:[%s422 + $0x6f0] sm:$0xff] %v4574
          %4831 = vst [vmem:[%s422 + $0x6f8] sm:$0xff] %v4575
          %4832 = vst [vmem:[%s422 + $0x700] sm:$0xff] %v4576
          %4833 = vst [vmem:[%s422 + $0x708] sm:$0xff] %v4577
          %4834 = vst [vmem:[%s422 + $0x710] sm:$0xff] %v4578
          %4835 = vst [vmem:[%s422 + $0x718] sm:$0xff] %v4579
          %4836 = vst [vmem:[%s422 + $0x720] sm:$0xff] %v4580
          %4837 = vst [vmem:[%s422 + $0x728] sm:$0xff] %v4581
          %4838 = vst [vmem:[%s422 + $0x730] sm:$0xff] %v4582
          %4839 = vst [vmem:[%s422 + $0x738] sm:$0xff] %v4583
          %4840 = vst [vmem:[%s422 + $0x740] sm:$0xff] %v4584
          %4841 = vst [vmem:[%s422 + $0x748] sm:$0xff] %v4585
          %4842 = vst [vmem:[%s422 + $0x750] sm:$0xff] %v4586
          %4843 = vst [vmem:[%s422 + $0x758] sm:$0xff] %v4587
          %4844 = vst [vmem:[%s422 + $0x760] sm:$0xff] %v4588
          %4845 = vst [vmem:[%s422 + $0x768] sm:$0xff] %v4589
          %4846 = vst [vmem:[%s422 + $0x770] sm:$0xff] %v4590
          %4847 = vst [vmem:[%s422 + $0x778] sm:$0xff] %v4591
          %4848 = vst [vmem:[%s422 + $0x780] sm:$0xff] %v4592
          %4849 = vst [vmem:[%s422 + $0x788] sm:$0xff] %v4593
          %4850 = vst [vmem:[%s422 + $0x790] sm:$0xff] %v4594
          %4851 = vst [vmem:[%s422 + $0x798] sm:$0xff] %v4595
          %4852 = vst [vmem:[%s422 + $0x7a0] sm:$0xff] %v4596
          %4853 = vst [vmem:[%s422 + $0x7a8] sm:$0xff] %v4597
          %4854 = vst [vmem:[%s422 + $0x7b0] sm:$0xff] %v4598
          %4855 = vst [vmem:[%s422 + $0x7b8] sm:$0xff] %v4599
          %4856 = vst [vmem:[%s422 + $0x7c0] sm:$0xff] %v4600
          %4857 = vst [vmem:[%s422 + $0x7c8] sm:$0xff] %v4601
          %4858 = vst [vmem:[%s422 + $0x7d0] sm:$0xff] %v4602
          %4859 = vst [vmem:[%s422 + $0x7d8] sm:$0xff] %v4603
          %4860 = vst [vmem:[%s422 + $0x7e0] sm:$0xff] %v4604
          %4861 = vst [vmem:[%s422 + $0x7e8] sm:$0xff] %v4605
          %4862 = vst [vmem:[%s422 + $0x7f0] sm:$0xff] %v4606
          %4863 = vst [vmem:[%s422 + $0x7f8] sm:$0xff] %v4607
        $region76: #{tpu_custom_call.1} parent=43 // pred_fallthru
          _
        %s4864 = sand.u32 %s193, 1
        %s4865 = scalar_lea.sflag [#allocation7], %s4864
        %s4866 = sand.u32 %s193, 1
        %s4867 = smul.addr %s4866, 2048
        %s4868 = scalar_lea.vmem [#allocation15], %s4867
        // Predicated region
        $region77: #{tpu_custom_call.1} parent=43 // pred_check
          %p4869 = pneg %p203
        $region78: #{tpu_custom_call.1} parent=43 // pred_check_branch
          %4871 = sbr.rel (%p4869) target = $region80
        $region79: #{tpu_custom_call.1} parent=43 // pred_region
          %s4872 = smul.u32 32, %s31
          %s4874 = ssub.s32 32768, 32768
          %4875 = vsyncadd %s4865, %s4874
          %s4876 = smul.addr %s4872, 8
          %s4877 = smul.addr %s4876, 128
          %s4878 = scalar_lea.hbm %s6, %s4877
          %s4879 = sshll.u32 %s4868, 4
          %s4880 = int_to_ptr.vmem [resolvable:$true] %s4879
          %4885 = dma.vmem_to_hbm [thread:$0]  %s4880, 32768, %s4878, %s4865, 1024, 1024, 64
        $region80: #{tpu_custom_call.1} parent=43 // pred_fallthru
          _
      $region44: #{tpu_custom_call.1} parent=5 // pred_fallthru
        _
      %p4886 = scmp.le.s32.totalorder 2, %s22
      // Predicated region
      $region81: #{tpu_custom_call.1} parent=5 // pred_check
        %p4887 = pneg %p4886
      $region82: #{tpu_custom_call.1} parent=5 // pred_check_branch
        %4889 = sbr.rel (%p4887) target = $region84
      $region83: #{tpu_custom_call.1} parent=5 // pred_region
        %s4890 = ssub.s32 %s22, 2
        // Predicated region
        $region85: #{tpu_custom_call.1} parent=83 // pred_check
          %p4891 = pneg %p209
        $region86: #{tpu_custom_call.1} parent=83 // pred_check_branch
          %4893 = sbr.rel (%p4891) target = $region88
        $region87: #{tpu_custom_call.1} parent=83 // pred_region
          %s4894 = sand.u32 %s194, 1
          %s4895 = scalar_lea.sflag [#allocation7], %s4894
          %s4896 = sand.u32 %s194, 1
          %s4897 = smul.addr %s4896, 2048
          %s4898 = scalar_lea.vmem [#allocation15], %s4897
          %4899 = dma.done %s4895, 32768
        $region88: #{tpu_custom_call.1} parent=83 // pred_fallthru
          _
      $region84: #{tpu_custom_call.1} parent=5 // pred_fallthru
        _
    $region6: #{tpu_custom_call.1} parent=1 // loop_footer
      %s26 = sadd.s32 1, %s22
    $region7: #{tpu_custom_call.1} parent=1 // loop_footer_branch
      %21 = sbr.rel target = $region3
    $region8: #{tpu_custom_call.1} parent=1 // loop_exit
      _
    %4900 = vsyncpa [#allocation6], 1
    %s4901 = scalar_lea.sflag [#allocation6], 1
    %4902 = vsyncpa %s4901, 1
    %4903 = vsyncpa [#allocation9], 1
    %s4904 = scalar_lea.sflag [#allocation9], 1
    %4905 = vsyncpa %s4904, 1
    %4906 = vsyncpa [#allocation12], 1
    %4907 = vsyncpa [#allocation7], 1
    %s4908 = scalar_lea.sflag [#allocation7], 1
    %4909 = vsyncpa %s4908, 1

</llo_original>
